<compile_context>
chip_gen: v5e
topology: v5e:2x2
jax: 0.10.0
libtpu: 0.0.40
codegen_flags: <defaults>
</compile_context>

<pallas_src>
import numpy as np

import jax
import jax.numpy as jnp
from jax.experimental import pallas as pl
from jax.experimental.pallas import tpu as pltpu


# ------------------------------ static config ------------------------------ #

IN_C, IN_H, IN_W = 4, 16, 16          # input NCHW = (N, 4, 16, 16)
C1, C2, C3, HEAD_C = 16, 32, 32, 27   # per-layer output channels
CPAD = 128                            # lane-dense channel padding
K, STRIDE, PAD = 3, 2, 1              # backbone conv geometry

H1 = (IN_H + 2 * PAD - K) // STRIDE + 1       # 8
W1 = (IN_W + 2 * PAD - K) // STRIDE + 1       # 8
H2 = (H1 + 2 * PAD - K) // STRIDE + 1         # 4
W2 = (W1 + 2 * PAD - K) // STRIDE + 1         # 4

M0 = IN_H * IN_W                              # 256 input pixels / image
M1 = H1 * W1                                  # 64  backbone-1 pixels
M2 = H2 * W2                                  # 16  backbone-2 / neck / head pixels
NTAP = K * K                                  # 9


# ------------------------------ Pallas kernel ------------------------------- #

def _silu(x):
    # Numerically stable SiLU: x * sigmoid(x) = x * 0.5 * (1 + tanh(x/2)).
    # tanh goes to the EUP slot; no divide on the VALU, no inf intermediate.
    return x * (0.5 * (jnp.tanh(0.5 * x) + 1.0))


def _conv_taps(g_ref, x_b, w_ref, n_taps):
    """sum_t (G_t @ x) @ W_t  -- 3x3 strided conv as 2*n_taps MXU matmuls.

    G_t is a 0/1 gather matrix (pad + stride + tap selection), so G_t @ x is an
    exact row-selection of x and the bf16 recast below is lossless.
    """
    acc = None
    for t in range(n_taps):
        p = jnp.dot(g_ref[t], x_b, preferred_element_type=jnp.float32)
        term = jnp.dot(p.astype(jnp.bfloat16), w_ref[t],
                       preferred_element_type=jnp.float32)
        acc = term if acc is None else acc + term
    return acc


def _yolo_fused_kernel(x_ref, g1_ref, w1_ref, b1_ref,
                       g2_ref, w2_ref, b2_ref,
                       w3_ref, b3_ref, w4_ref, b4_ref, o_ref):
    # One grid step == one image.  Everything below lives in vregs / VMEM.
    x = x_ref[0]                                              # (M0, 128) bf16

    # backbone conv1: 3x3 s2 p1 + SiLU
    h = _silu(_conv_taps(g1_ref, x, w1_ref, NTAP) + b1_ref[...])
    h = h.astype(jnp.bfloat16)                                # (M1, 128)

    # backbone conv2: 3x3 s2 p1 + SiLU
    h = _silu(_conv_taps(g2_ref, h, w2_ref, NTAP) + b2_ref[...])
    h = h.astype(jnp.bfloat16)                                # (M2, 128)

    # neck: 1x1 + SiLU
    h = _silu(jnp.dot(h, w3_ref[...], preferred_element_type=jnp.float32)
              + b3_ref[...])
    h = h.astype(jnp.bfloat16)                                # (M2, 128)

    # head: 1x1, raw predictions (no activation)
    o = jnp.dot(h, w4_ref[...], preferred_element_type=jnp.float32) + b4_ref[...]
    o_ref[0] = o                                              # (M2, 128) f32, lane-dense store


# --------------------------- parameter preparation -------------------------- #

def _conv_gather(h_in, w_in, k, stride, pad):
    """0/1 gather matrices: G[t, m, p] selects unpadded-input pixel p for output
    pixel m under tap t (rows are all-zero where the tap lands in zero-padding)."""
    h_out = (h_in + 2 * pad - k) // stride + 1
    w_out = (w_in + 2 * pad - k) // stride + 1
    g = np.zeros((k * k, h_out * w_out, h_in * w_in), np.float32)
    for kh in range(k):
        for kw in range(k):
            t = kh * k + kw
            for i in range(h_out):
                for j in range(w_out):
                    r = i * stride + kh - pad
                    c = j * stride + kw - pad
                    if 0 <= r < h_in and 0 <= c < w_in:
                        g[t, i * w_out + j, r * w_in + c] = 1.0
    return g


def _pack_w_kxk(w, cpad):
    # PyTorch (Cout, Cin, kH, kW) -> per-tap (Cin, Cout), zero-padded to (cpad, cpad).
    cout, cin, kh, kw = w.shape
    taps = np.transpose(np.asarray(w), (2, 3, 1, 0)).reshape(kh * kw, cin, cout)
    m = np.zeros((kh * kw, cpad, cpad), np.float32)
    m[:, :cin, :cout] = taps
    return jnp.asarray(m, jnp.bfloat16)


def _pack_w_1x1(w, cpad):
    cout, cin = w.shape[0], w.shape[1]
    m = np.zeros((cpad, cpad), np.float32)
    m[:cin, :cout] = np.asarray(w).reshape(cout, cin).T
    return jnp.asarray(m, jnp.bfloat16)


def _pack_b(b, cpad):
    v = np.zeros((1, cpad), np.float32)
    v[0, : b.shape[0]] = np.asarray(b)
    return jnp.asarray(v, jnp.float32)


def pack_params(params):
    """One-time offline prep: gather matrices + lane-padded bf16 weights."""
    return {
        "g1": jnp.asarray(_conv_gather(IN_H, IN_W, K, STRIDE, PAD), jnp.bfloat16),
        "g2": jnp.asarray(_conv_gather(H1, W1, K, STRIDE, PAD), jnp.bfloat16),
        "w1": _pack_w_kxk(params["bb1_w"], CPAD),
        "b1": _pack_b(params["bb1_b"], CPAD),
        "w2": _pack_w_kxk(params["bb2_w"], CPAD),
        "b2": _pack_b(params["bb2_b"], CPAD),
        "w3": _pack_w_1x1(params["neck_w"], CPAD),
        "b3": _pack_b(params["neck_b"], CPAD),
        "w4": _pack_w_1x1(params["head_w"], CPAD),
        "b4": _pack_b(params["head_b"], CPAD),
    }


# --------------------------- YOLO forward (jitted) -------------------------- #

def _cost_estimate(n):
    flops_per = (
        NTAP * (2 * M1 * M0 * CPAD + 2 * M1 * CPAD * CPAD)     # backbone conv1
        + NTAP * (2 * M2 * M1 * CPAD + 2 * M2 * CPAD * CPAD)   # backbone conv2
        + 2 * (2 * M2 * CPAD * CPAD)                           # neck + head
    )
    trans_per = (M1 + M2 + M2) * CPAD                          # tanh in SiLU
    bytes_acc = (
        n * M0 * CPAD * 2 + n * M2 * CPAD * 4                  # input + output
        + NTAP * (M1 * M0 + M2 * M1) * 2                       # gather matrices
        + (2 * NTAP + 2) * CPAD * CPAD * 2 + 4 * CPAD * 4      # weights + biases
    )
    return pl.CostEstimate(flops=n * flops_per,
                           transcendentals=n * trans_per,
                           bytes_accessed=bytes_acc)


def yolo_forward(x_nchw, packed):
    n = x_nchw.shape[0]
    assert x_nchw.shape[1:] == (IN_C, IN_H, IN_W), x_nchw.shape

    # NCHW -> flat NHWC with channels lane-padded to 128, bf16 for the MXU.
    x = jnp.transpose(x_nchw, (0, 2, 3, 1))
    x = jnp.pad(x, ((0, 0), (0, 0), (0, 0), (0, CPAD - IN_C)))
    x = x.reshape(n, M0, CPAD).astype(jnp.bfloat16)

    def full(shape):
        return pl.BlockSpec(shape, lambda b, _s=shape: (0,) * len(_s))

    out = pl.pallas_call(
        _yolo_fused_kernel,
        out_shape=jax.ShapeDtypeStruct((n, M2, CPAD), jnp.float32),
        grid_spec=pltpu.PrefetchScalarGridSpec(
            num_scalar_prefetch=0,
            grid=(n,),
            in_specs=[
                pl.BlockSpec((1, M0, CPAD), lambda b: (b, 0, 0)),   # x (per image)
                full((NTAP, M1, M0)),                               # g1
                full((NTAP, CPAD, CPAD)),                           # w1
                full((1, CPAD)),                                    # b1
                full((NTAP, M2, M1)),                               # g2
                full((NTAP, CPAD, CPAD)),                           # w2
                full((1, CPAD)),                                    # b2
                full((CPAD, CPAD)),                                 # w3 (neck)
                full((1, CPAD)),                                    # b3
                full((CPAD, CPAD)),                                 # w4 (head)
                full((1, CPAD)),                                    # b4
            ],
            out_specs=pl.BlockSpec((1, M2, CPAD), lambda b: (b, 0, 0)),
        ),
        compiler_params=pltpu.CompilerParams(
            dimension_semantics=("parallel",),   # batch across v7x's 2 TCs; no-op on v5e/v6e
        ),
        cost_estimate=_cost_estimate(n),
    )(x, packed["g1"], packed["w1"], packed["b1"],
      packed["g2"], packed["w2"], packed["b2"],
      packed["w3"], packed["b3"], packed["w4"], packed["b4"])

    # slice the lane padding away and restore NCHW
    y = out[:, :, :HEAD_C].reshape(n, H2, W2, HEAD_C)
    return jnp.transpose(y, (0, 3, 1, 2))


# ------------------------------ reference (f32) ------------------------------ #

def yolo_reference(x_nchw, params):
    def conv(x, w, b, stride, pad, act):
        y = jax.lax.conv_general_dilated(
            x, w, window_strides=(stride, stride),
            padding=[(pad, pad), (pad, pad)],
            dimension_numbers=("NCHW", "OIHW", "NCHW"))
        y = y + b.reshape(1, -1, 1, 1)
        return y * jax.nn.sigmoid(y) if act else y

    x = conv(x_nchw, params["bb1_w"], params["bb1_b"], 2, 1, True)
    x = conv(x, params["bb2_w"], params["bb2_b"], 2, 1, True)
    x = conv(x, params["neck_w"], params["neck_b"], 1, 0, True)
    x = conv(x, params["head_w"], params["head_b"], 1, 0, False)
    return x


# ---------------------------------- params ---------------------------------- #

def init_params(seed=42):
    ks = jax.random.split(jax.random.PRNGKey(seed), 8)

    def w(key, shape, fan_in):
        return jax.random.normal(key, shape, jnp.float32) * (fan_in ** -0.5)

    return {
        "bb1_w": w(ks[0], (C1, IN_C, K, K), IN_C * K * K),
        "bb1_b": jax.random.normal(ks[1], (C1,), jnp.float32) * 0.01,
        "bb2_w": w(ks[2], (C2, C1, K, K), C1 * K * K),
        "bb2_b": jax.random.normal(ks[3], (C2,), jnp.float32) * 0.01,
        "neck_w": w(ks[4], (C3, C2, 1, 1), C2),
        "neck_b": jax.random.normal(ks[5], (C3,), jnp.float32) * 0.01,
        "head_w": w(ks[6], (HEAD_C, C3, 1, 1), C3),
        "head_b": jax.random.normal(ks[7], (HEAD_C,), jnp.float32) * 0.01,
    }


if __name__ == "__main__":
    params = init_params(seed=42)
    packed = pack_params(params)
    x = jax.random.normal(jax.random.PRNGKey(0), (2, IN_C, IN_H, IN_W), jnp.float32)

    fwd = jax.jit(yolo_forward)
    out = fwd(x, packed)
    jax.block_until_ready(out)

    assert out.shape == (2, HEAD_C, H2, W2), out.shape
    assert bool(jnp.all(jnp.isfinite(out)))

    ref = yolo_reference(x, params)
    max_err = float(jnp.max(jnp.abs(out - ref)))
    assert max_err < 0.15, f"max abs error vs f32 reference: {max_err}"

    print("KERNEL_OK")
</pallas_src>

<mosaic_0001>
module attributes {stable_mosaic.version = 11 : i64} {
  func.func @_yolo_fused_kernel(%arg0: i32, %arg1: memref<1x256x128xbf16, #tpu.memory_space<vmem>>, %arg2: memref<9x64x256xbf16, #tpu.memory_space<vmem>>, %arg3: memref<9x128x128xbf16, #tpu.memory_space<vmem>>, %arg4: memref<1x128xf32, #tpu.memory_space<vmem>>, %arg5: memref<9x16x64xbf16, #tpu.memory_space<vmem>>, %arg6: memref<9x128x128xbf16, #tpu.memory_space<vmem>>, %arg7: memref<1x128xf32, #tpu.memory_space<vmem>>, %arg8: memref<128x128xbf16, #tpu.memory_space<vmem>>, %arg9: memref<1x128xf32, #tpu.memory_space<vmem>>, %arg10: memref<128x128xbf16, #tpu.memory_space<vmem>>, %arg11: memref<1x128xf32, #tpu.memory_space<vmem>>, %arg12: memref<1x16x128xf32, #tpu.memory_space<vmem>>) attributes {dimension_semantics = [#tpu.dimension_semantics<parallel>], iteration_bounds = array<i64: 2>, scalar_prefetch = 0 : i64, scratch_operands = 0 : i64, tpu.core_type = #tpu.core_type<tc>, window_params = [{transform_indices = @transform_0, window_bounds = array<i64: 1, 256, 128>}, {pipeline_mode = #tpu.pipeline_mode<synchronous>, transform_indices = @transform_1, window_bounds = array<i64: 9, 64, 256>}, {pipeline_mode = #tpu.pipeline_mode<synchronous>, transform_indices = @transform_2, window_bounds = array<i64: 9, 128, 128>}, {pipeline_mode = #tpu.pipeline_mode<synchronous>, transform_indices = @transform_3, window_bounds = array<i64: 1, 128>}, {pipeline_mode = #tpu.pipeline_mode<synchronous>, transform_indices = @transform_4, window_bounds = array<i64: 9, 16, 64>}, {pipeline_mode = #tpu.pipeline_mode<synchronous>, transform_indices = @transform_5, window_bounds = array<i64: 9, 128, 128>}, {pipeline_mode = #tpu.pipeline_mode<synchronous>, transform_indices = @transform_6, window_bounds = array<i64: 1, 128>}, {pipeline_mode = #tpu.pipeline_mode<synchronous>, transform_indices = @transform_7, window_bounds = array<i64: 128, 128>}, {pipeline_mode = #tpu.pipeline_mode<synchronous>, transform_indices = @transform_8, window_bounds = array<i64: 1, 128>}, {pipeline_mode = #tpu.pipeline_mode<synchronous>, transform_indices = @transform_9, window_bounds = array<i64: 128, 128>}, {pipeline_mode = #tpu.pipeline_mode<synchronous>, transform_indices = @transform_10, window_bounds = array<i64: 1, 128>}, {transform_indices = @transform_11, window_bounds = array<i64: 1, 16, 128>}]} {
    %c0 = arith.constant 0 : index
    %c0_0 = arith.constant 0 : index
    %c0_1 = arith.constant 0 : index
    %0 = vector.load %arg1[%c0, %c0_0, %c0_1] : memref<1x256x128xbf16, #tpu.memory_space<vmem>>, vector<1x256x128xbf16>
    %1 = vector.shape_cast %0 : vector<1x256x128xbf16> to vector<256x128xbf16>
    %c0_2 = arith.constant 0 : index
    %c0_3 = arith.constant 0 : index
    %c0_4 = arith.constant 0 : index
    %2 = vector.load %arg2[%c0_2, %c0_3, %c0_4] : memref<9x64x256xbf16, #tpu.memory_space<vmem>>, vector<1x64x256xbf16>
    %3 = vector.shape_cast %2 : vector<1x64x256xbf16> to vector<64x256xbf16>
    %cst = arith.constant dense<0.000000e+00> : vector<64x128xf32>
    %4 = tpu.matmul %3, %1, %cst {dimension_numbers = #tpu.dot_dimension_numbers<[1], [0], [0], [1], [0, 0, 1, 1], [], []>} : vector<64x256xbf16>, vector<256x128xbf16>, vector<64x128xf32> -> vector<64x128xf32>
    %5 = arith.truncf %4 : vector<64x128xf32> to vector<64x128xbf16>
    %c0_5 = arith.constant 0 : index
    %c0_6 = arith.constant 0 : index
    %c0_7 = arith.constant 0 : index
    %6 = vector.load %arg3[%c0_5, %c0_6, %c0_7] : memref<9x128x128xbf16, #tpu.memory_space<vmem>>, vector<1x128x128xbf16>
    %7 = vector.shape_cast %6 : vector<1x128x128xbf16> to vector<128x128xbf16>
    %cst_8 = arith.constant dense<0.000000e+00> : vector<64x128xf32>
    %8 = tpu.matmul %5, %7, %cst_8 {dimension_numbers = #tpu.dot_dimension_numbers<[1], [0], [0], [1], [0, 0, 1, 1], [], []>} : vector<64x128xbf16>, vector<128x128xbf16>, vector<64x128xf32> -> vector<64x128xf32>
    %c1 = arith.constant 1 : index
    %c0_9 = arith.constant 0 : index
    %c0_10 = arith.constant 0 : index
    %9 = vector.load %arg2[%c1, %c0_9, %c0_10] : memref<9x64x256xbf16, #tpu.memory_space<vmem>>, vector<1x64x256xbf16>
    %10 = vector.shape_cast %9 : vector<1x64x256xbf16> to vector<64x256xbf16>
    %cst_11 = arith.constant dense<0.000000e+00> : vector<64x128xf32>
    %11 = tpu.matmul %10, %1, %cst_11 {dimension_numbers = #tpu.dot_dimension_numbers<[1], [0], [0], [1], [0, 0, 1, 1], [], []>} : vector<64x256xbf16>, vector<256x128xbf16>, vector<64x128xf32> -> vector<64x128xf32>
    %12 = arith.truncf %11 : vector<64x128xf32> to vector<64x128xbf16>
    %c1_12 = arith.constant 1 : index
    %c0_13 = arith.constant 0 : index
    %c0_14 = arith.constant 0 : index
    %13 = vector.load %arg3[%c1_12, %c0_13, %c0_14] : memref<9x128x128xbf16, #tpu.memory_space<vmem>>, vector<1x128x128xbf16>
    %14 = vector.shape_cast %13 : vector<1x128x128xbf16> to vector<128x128xbf16>
    %cst_15 = arith.constant dense<0.000000e+00> : vector<64x128xf32>
    %15 = tpu.matmul %12, %14, %cst_15 {dimension_numbers = #tpu.dot_dimension_numbers<[1], [0], [0], [1], [0, 0, 1, 1], [], []>} : vector<64x128xbf16>, vector<128x128xbf16>, vector<64x128xf32> -> vector<64x128xf32>
    %16 = arith.addf %8, %15 : vector<64x128xf32>
    %c2 = arith.constant 2 : index
    %c0_16 = arith.constant 0 : index
    %c0_17 = arith.constant 0 : index
    %17 = vector.load %arg2[%c2, %c0_16, %c0_17] : memref<9x64x256xbf16, #tpu.memory_space<vmem>>, vector<1x64x256xbf16>
    %18 = vector.shape_cast %17 : vector<1x64x256xbf16> to vector<64x256xbf16>
    %cst_18 = arith.constant dense<0.000000e+00> : vector<64x128xf32>
    %19 = tpu.matmul %18, %1, %cst_18 {dimension_numbers = #tpu.dot_dimension_numbers<[1], [0], [0], [1], [0, 0, 1, 1], [], []>} : vector<64x256xbf16>, vector<256x128xbf16>, vector<64x128xf32> -> vector<64x128xf32>
    %20 = arith.truncf %19 : vector<64x128xf32> to vector<64x128xbf16>
    %c2_19 = arith.constant 2 : index
    %c0_20 = arith.constant 0 : index
    %c0_21 = arith.constant 0 : index
    %21 = vector.load %arg3[%c2_19, %c0_20, %c0_21] : memref<9x128x128xbf16, #tpu.memory_space<vmem>>, vector<1x128x128xbf16>
    %22 = vector.shape_cast %21 : vector<1x128x128xbf16> to vector<128x128xbf16>
    %cst_22 = arith.constant dense<0.000000e+00> : vector<64x128xf32>
    %23 = tpu.matmul %20, %22, %cst_22 {dimension_numbers = #tpu.dot_dimension_numbers<[1], [0], [0], [1], [0, 0, 1, 1], [], []>} : vector<64x128xbf16>, vector<128x128xbf16>, vector<64x128xf32> -> vector<64x128xf32>
    %24 = arith.addf %16, %23 : vector<64x128xf32>
    %c3 = arith.constant 3 : index
    %c0_23 = arith.constant 0 : index
    %c0_24 = arith.constant 0 : index
    %25 = vector.load %arg2[%c3, %c0_23, %c0_24] : memref<9x64x256xbf16, #tpu.memory_space<vmem>>, vector<1x64x256xbf16>
    %26 = vector.shape_cast %25 : vector<1x64x256xbf16> to vector<64x256xbf16>
    %cst_25 = arith.constant dense<0.000000e+00> : vector<64x128xf32>
    %27 = tpu.matmul %26, %1, %cst_25 {dimension_numbers = #tpu.dot_dimension_numbers<[1], [0], [0], [1], [0, 0, 1, 1], [], []>} : vector<64x256xbf16>, vector<256x128xbf16>, vector<64x128xf32> -> vector<64x128xf32>
    %28 = arith.truncf %27 : vector<64x128xf32> to vector<64x128xbf16>
    %c3_26 = arith.constant 3 : index
    %c0_27 = arith.constant 0 : index
    %c0_28 = arith.constant 0 : index
    %29 = vector.load %arg3[%c3_26, %c0_27, %c0_28] : memref<9x128x128xbf16, #tpu.memory_space<vmem>>, vector<1x128x128xbf16>
    %30 = vector.shape_cast %29 : vector<1x128x128xbf16> to vector<128x128xbf16>
    %cst_29 = arith.constant dense<0.000000e+00> : vector<64x128xf32>
    %31 = tpu.matmul %28, %30, %cst_29 {dimension_numbers = #tpu.dot_dimension_numbers<[1], [0], [0], [1], [0, 0, 1, 1], [], []>} : vector<64x128xbf16>, vector<128x128xbf16>, vector<64x128xf32> -> vector<64x128xf32>
    %32 = arith.addf %24, %31 : vector<64x128xf32>
    %c4 = arith.constant 4 : index
    %c0_30 = arith.constant 0 : index
    %c0_31 = arith.constant 0 : index
    %33 = vector.load %arg2[%c4, %c0_30, %c0_31] : memref<9x64x256xbf16, #tpu.memory_space<vmem>>, vector<1x64x256xbf16>
    %34 = vector.shape_cast %33 : vector<1x64x256xbf16> to vector<64x256xbf16>
    %cst_32 = arith.constant dense<0.000000e+00> : vector<64x128xf32>
    %35 = tpu.matmul %34, %1, %cst_32 {dimension_numbers = #tpu.dot_dimension_numbers<[1], [0], [0], [1], [0, 0, 1, 1], [], []>} : vector<64x256xbf16>, vector<256x128xbf16>, vector<64x128xf32> -> vector<64x128xf32>
    %36 = arith.truncf %35 : vector<64x128xf32> to vector<64x128xbf16>
    %c4_33 = arith.constant 4 : index
    %c0_34 = arith.constant 0 : index
    %c0_35 = arith.constant 0 : index
    %37 = vector.load %arg3[%c4_33, %c0_34, %c0_35] : memref<9x128x128xbf16, #tpu.memory_space<vmem>>, vector<1x128x128xbf16>
    %38 = vector.shape_cast %37 : vector<1x128x128xbf16> to vector<128x128xbf16>
    %cst_36 = arith.constant dense<0.000000e+00> : vector<64x128xf32>
    %39 = tpu.matmul %36, %38, %cst_36 {dimension_numbers = #tpu.dot_dimension_numbers<[1], [0], [0], [1], [0, 0, 1, 1], [], []>} : vector<64x128xbf16>, vector<128x128xbf16>, vector<64x128xf32> -> vector<64x128xf32>
    %40 = arith.addf %32, %39 : vector<64x128xf32>
    %c5 = arith.constant 5 : index
    %c0_37 = arith.constant 0 : index
    %c0_38 = arith.constant 0 : index
    %41 = vector.load %arg2[%c5, %c0_37, %c0_38] : memref<9x64x256xbf16, #tpu.memory_space<vmem>>, vector<1x64x256xbf16>
    %42 = vector.shape_cast %41 : vector<1x64x256xbf16> to vector<64x256xbf16>
    %cst_39 = arith.constant dense<0.000000e+00> : vector<64x128xf32>
    %43 = tpu.matmul %42, %1, %cst_39 {dimension_numbers = #tpu.dot_dimension_numbers<[1], [0], [0], [1], [0, 0, 1, 1], [], []>} : vector<64x256xbf16>, vector<256x128xbf16>, vector<64x128xf32> -> vector<64x128xf32>
    %44 = arith.truncf %43 : vector<64x128xf32> to vector<64x128xbf16>
    %c5_40 = arith.constant 5 : index
    %c0_41 = arith.constant 0 : index
    %c0_42 = arith.constant 0 : index
    %45 = vector.load %arg3[%c5_40, %c0_41, %c0_42] : memref<9x128x128xbf16, #tpu.memory_space<vmem>>, vector<1x128x128xbf16>
    %46 = vector.shape_cast %45 : vector<1x128x128xbf16> to vector<128x128xbf16>
    %cst_43 = arith.constant dense<0.000000e+00> : vector<64x128xf32>
    %47 = tpu.matmul %44, %46, %cst_43 {dimension_numbers = #tpu.dot_dimension_numbers<[1], [0], [0], [1], [0, 0, 1, 1], [], []>} : vector<64x128xbf16>, vector<128x128xbf16>, vector<64x128xf32> -> vector<64x128xf32>
    %48 = arith.addf %40, %47 : vector<64x128xf32>
    %c6 = arith.constant 6 : index
    %c0_44 = arith.constant 0 : index
    %c0_45 = arith.constant 0 : index
    %49 = vector.load %arg2[%c6, %c0_44, %c0_45] : memref<9x64x256xbf16, #tpu.memory_space<vmem>>, vector<1x64x256xbf16>
    %50 = vector.shape_cast %49 : vector<1x64x256xbf16> to vector<64x256xbf16>
    %cst_46 = arith.constant dense<0.000000e+00> : vector<64x128xf32>
    %51 = tpu.matmul %50, %1, %cst_46 {dimension_numbers = #tpu.dot_dimension_numbers<[1], [0], [0], [1], [0, 0, 1, 1], [], []>} : vector<64x256xbf16>, vector<256x128xbf16>, vector<64x128xf32> -> vector<64x128xf32>
    %52 = arith.truncf %51 : vector<64x128xf32> to vector<64x128xbf16>
    %c6_47 = arith.constant 6 : index
    %c0_48 = arith.constant 0 : index
    %c0_49 = arith.constant 0 : index
    %53 = vector.load %arg3[%c6_47, %c0_48, %c0_49] : memref<9x128x128xbf16, #tpu.memory_space<vmem>>, vector<1x128x128xbf16>
    %54 = vector.shape_cast %53 : vector<1x128x128xbf16> to vector<128x128xbf16>
    %cst_50 = arith.constant dense<0.000000e+00> : vector<64x128xf32>
    %55 = tpu.matmul %52, %54, %cst_50 {dimension_numbers = #tpu.dot_dimension_numbers<[1], [0], [0], [1], [0, 0, 1, 1], [], []>} : vector<64x128xbf16>, vector<128x128xbf16>, vector<64x128xf32> -> vector<64x128xf32>
    %56 = arith.addf %48, %55 : vector<64x128xf32>
    %c7 = arith.constant 7 : index
    %c0_51 = arith.constant 0 : index
    %c0_52 = arith.constant 0 : index
    %57 = vector.load %arg2[%c7, %c0_51, %c0_52] : memref<9x64x256xbf16, #tpu.memory_space<vmem>>, vector<1x64x256xbf16>
    %58 = vector.shape_cast %57 : vector<1x64x256xbf16> to vector<64x256xbf16>
    %cst_53 = arith.constant dense<0.000000e+00> : vector<64x128xf32>
    %59 = tpu.matmul %58, %1, %cst_53 {dimension_numbers = #tpu.dot_dimension_numbers<[1], [0], [0], [1], [0, 0, 1, 1], [], []>} : vector<64x256xbf16>, vector<256x128xbf16>, vector<64x128xf32> -> vector<64x128xf32>
    %60 = arith.truncf %59 : vector<64x128xf32> to vector<64x128xbf16>
    %c7_54 = arith.constant 7 : index
    %c0_55 = arith.constant 0 : index
    %c0_56 = arith.constant 0 : index
    %61 = vector.load %arg3[%c7_54, %c0_55, %c0_56] : memref<9x128x128xbf16, #tpu.memory_space<vmem>>, vector<1x128x128xbf16>
    %62 = vector.shape_cast %61 : vector<1x128x128xbf16> to vector<128x128xbf16>
    %cst_57 = arith.constant dense<0.000000e+00> : vector<64x128xf32>
    %63 = tpu.matmul %60, %62, %cst_57 {dimension_numbers = #tpu.dot_dimension_numbers<[1], [0], [0], [1], [0, 0, 1, 1], [], []>} : vector<64x128xbf16>, vector<128x128xbf16>, vector<64x128xf32> -> vector<64x128xf32>
    %64 = arith.addf %56, %63 : vector<64x128xf32>
    %c8 = arith.constant 8 : index
    %c0_58 = arith.constant 0 : index
    %c0_59 = arith.constant 0 : index
    %65 = vector.load %arg2[%c8, %c0_58, %c0_59] : memref<9x64x256xbf16, #tpu.memory_space<vmem>>, vector<1x64x256xbf16>
    %66 = vector.shape_cast %65 : vector<1x64x256xbf16> to vector<64x256xbf16>
    %cst_60 = arith.constant dense<0.000000e+00> : vector<64x128xf32>
    %67 = tpu.matmul %66, %1, %cst_60 {dimension_numbers = #tpu.dot_dimension_numbers<[1], [0], [0], [1], [0, 0, 1, 1], [], []>} : vector<64x256xbf16>, vector<256x128xbf16>, vector<64x128xf32> -> vector<64x128xf32>
    %68 = arith.truncf %67 : vector<64x128xf32> to vector<64x128xbf16>
    %c8_61 = arith.constant 8 : index
    %c0_62 = arith.constant 0 : index
    %c0_63 = arith.constant 0 : index
    %69 = vector.load %arg3[%c8_61, %c0_62, %c0_63] : memref<9x128x128xbf16, #tpu.memory_space<vmem>>, vector<1x128x128xbf16>
    %70 = vector.shape_cast %69 : vector<1x128x128xbf16> to vector<128x128xbf16>
    %cst_64 = arith.constant dense<0.000000e+00> : vector<64x128xf32>
    %71 = tpu.matmul %68, %70, %cst_64 {dimension_numbers = #tpu.dot_dimension_numbers<[1], [0], [0], [1], [0, 0, 1, 1], [], []>} : vector<64x128xbf16>, vector<128x128xbf16>, vector<64x128xf32> -> vector<64x128xf32>
    %72 = arith.addf %64, %71 : vector<64x128xf32>
    %c0_65 = arith.constant 0 : index
    %c0_66 = arith.constant 0 : index
    %73 = vector.load %arg4[%c0_65, %c0_66] : memref<1x128xf32, #tpu.memory_space<vmem>>, vector<1x128xf32>
    %74 = vector.broadcast %73 : vector<1x128xf32> to vector<64x128xf32>
    %75 = arith.addf %72, %74 : vector<64x128xf32>
    %cst_67 = arith.constant 5.000000e-01 : f32
    %76 = vector.broadcast %cst_67 : f32 to vector<64x128xf32>
    %77 = arith.mulf %76, %75 : vector<64x128xf32>
    %78 = math.tanh %77 : vector<64x128xf32>
    %cst_68 = arith.constant 1.000000e+00 : f32
    %79 = vector.broadcast %cst_68 : f32 to vector<64x128xf32>
    %80 = arith.addf %78, %79 : vector<64x128xf32>
    %cst_69 = arith.constant 5.000000e-01 : f32
    %81 = vector.broadcast %cst_69 : f32 to vector<64x128xf32>
    %82 = arith.mulf %81, %80 : vector<64x128xf32>
    %83 = arith.mulf %75, %82 : vector<64x128xf32>
    %84 = arith.truncf %83 : vector<64x128xf32> to vector<64x128xbf16>
    %c0_70 = arith.constant 0 : index
    %c0_71 = arith.constant 0 : index
    %c0_72 = arith.constant 0 : index
    %85 = vector.load %arg5[%c0_70, %c0_71, %c0_72] : memref<9x16x64xbf16, #tpu.memory_space<vmem>>, vector<1x16x64xbf16>
    %86 = vector.shape_cast %85 : vector<1x16x64xbf16> to vector<16x64xbf16>
    %cst_73 = arith.constant dense<0.000000e+00> : vector<16x128xf32>
    %87 = tpu.matmul %86, %84, %cst_73 {dimension_numbers = #tpu.dot_dimension_numbers<[1], [0], [0], [1], [0, 0, 1, 1], [], []>} : vector<16x64xbf16>, vector<64x128xbf16>, vector<16x128xf32> -> vector<16x128xf32>
    %88 = arith.truncf %87 : vector<16x128xf32> to vector<16x128xbf16>
    %c0_74 = arith.constant 0 : index
    %c0_75 = arith.constant 0 : index
    %c0_76 = arith.constant 0 : index
    %89 = vector.load %arg6[%c0_74, %c0_75, %c0_76] : memref<9x128x128xbf16, #tpu.memory_space<vmem>>, vector<1x128x128xbf16>
    %90 = vector.shape_cast %89 : vector<1x128x128xbf16> to vector<128x128xbf16>
    %cst_77 = arith.constant dense<0.000000e+00> : vector<16x128xf32>
    %91 = tpu.matmul %88, %90, %cst_77 {dimension_numbers = #tpu.dot_dimension_numbers<[1], [0], [0], [1], [0, 0, 1, 1], [], []>} : vector<16x128xbf16>, vector<128x128xbf16>, vector<16x128xf32> -> vector<16x128xf32>
    %c1_78 = arith.constant 1 : index
    %c0_79 = arith.constant 0 : index
    %c0_80 = arith.constant 0 : index
    %92 = vector.load %arg5[%c1_78, %c0_79, %c0_80] : memref<9x16x64xbf16, #tpu.memory_space<vmem>>, vector<1x16x64xbf16>
    %93 = vector.shape_cast %92 : vector<1x16x64xbf16> to vector<16x64xbf16>
    %cst_81 = arith.constant dense<0.000000e+00> : vector<16x128xf32>
    %94 = tpu.matmul %93, %84, %cst_81 {dimension_numbers = #tpu.dot_dimension_numbers<[1], [0], [0], [1], [0, 0, 1, 1], [], []>} : vector<16x64xbf16>, vector<64x128xbf16>, vector<16x128xf32> -> vector<16x128xf32>
    %95 = arith.truncf %94 : vector<16x128xf32> to vector<16x128xbf16>
    %c1_82 = arith.constant 1 : index
    %c0_83 = arith.constant 0 : index
    %c0_84 = arith.constant 0 : index
    %96 = vector.load %arg6[%c1_82, %c0_83, %c0_84] : memref<9x128x128xbf16, #tpu.memory_space<vmem>>, vector<1x128x128xbf16>
    %97 = vector.shape_cast %96 : vector<1x128x128xbf16> to vector<128x128xbf16>
    %cst_85 = arith.constant dense<0.000000e+00> : vector<16x128xf32>
    %98 = tpu.matmul %95, %97, %cst_85 {dimension_numbers = #tpu.dot_dimension_numbers<[1], [0], [0], [1], [0, 0, 1, 1], [], []>} : vector<16x128xbf16>, vector<128x128xbf16>, vector<16x128xf32> -> vector<16x128xf32>
    %99 = arith.addf %91, %98 : vector<16x128xf32>
    %c2_86 = arith.constant 2 : index
    %c0_87 = arith.constant 0 : index
    %c0_88 = arith.constant 0 : index
    %100 = vector.load %arg5[%c2_86, %c0_87, %c0_88] : memref<9x16x64xbf16, #tpu.memory_space<vmem>>, vector<1x16x64xbf16>
    %101 = vector.shape_cast %100 : vector<1x16x64xbf16> to vector<16x64xbf16>
    %cst_89 = arith.constant dense<0.000000e+00> : vector<16x128xf32>
    %102 = tpu.matmul %101, %84, %cst_89 {dimension_numbers = #tpu.dot_dimension_numbers<[1], [0], [0], [1], [0, 0, 1, 1], [], []>} : vector<16x64xbf16>, vector<64x128xbf16>, vector<16x128xf32> -> vector<16x128xf32>
    %103 = arith.truncf %102 : vector<16x128xf32> to vector<16x128xbf16>
    %c2_90 = arith.constant 2 : index
    %c0_91 = arith.constant 0 : index
    %c0_92 = arith.constant 0 : index
    %104 = vector.load %arg6[%c2_90, %c0_91, %c0_92] : memref<9x128x128xbf16, #tpu.memory_space<vmem>>, vector<1x128x128xbf16>
    %105 = vector.shape_cast %104 : vector<1x128x128xbf16> to vector<128x128xbf16>
    %cst_93 = arith.constant dense<0.000000e+00> : vector<16x128xf32>
    %106 = tpu.matmul %103, %105, %cst_93 {dimension_numbers = #tpu.dot_dimension_numbers<[1], [0], [0], [1], [0, 0, 1, 1], [], []>} : vector<16x128xbf16>, vector<128x128xbf16>, vector<16x128xf32> -> vector<16x128xf32>
    %107 = arith.addf %99, %106 : vector<16x128xf32>
    %c3_94 = arith.constant 3 : index
    %c0_95 = arith.constant 0 : index
    %c0_96 = arith.constant 0 : index
    %108 = vector.load %arg5[%c3_94, %c0_95, %c0_96] : memref<9x16x64xbf16, #tpu.memory_space<vmem>>, vector<1x16x64xbf16>
    %109 = vector.shape_cast %108 : vector<1x16x64xbf16> to vector<16x64xbf16>
    %cst_97 = arith.constant dense<0.000000e+00> : vector<16x128xf32>
    %110 = tpu.matmul %109, %84, %cst_97 {dimension_numbers = #tpu.dot_dimension_numbers<[1], [0], [0], [1], [0, 0, 1, 1], [], []>} : vector<16x64xbf16>, vector<64x128xbf16>, vector<16x128xf32> -> vector<16x128xf32>
    %111 = arith.truncf %110 : vector<16x128xf32> to vector<16x128xbf16>
    %c3_98 = arith.constant 3 : index
    %c0_99 = arith.constant 0 : index
    %c0_100 = arith.constant 0 : index
    %112 = vector.load %arg6[%c3_98, %c0_99, %c0_100] : memref<9x128x128xbf16, #tpu.memory_space<vmem>>, vector<1x128x128xbf16>
    %113 = vector.shape_cast %112 : vector<1x128x128xbf16> to vector<128x128xbf16>
    %cst_101 = arith.constant dense<0.000000e+00> : vector<16x128xf32>
    %114 = tpu.matmul %111, %113, %cst_101 {dimension_numbers = #tpu.dot_dimension_numbers<[1], [0], [0], [1], [0, 0, 1, 1], [], []>} : vector<16x128xbf16>, vector<128x128xbf16>, vector<16x128xf32> -> vector<16x128xf32>
    %115 = arith.addf %107, %114 : vector<16x128xf32>
    %c4_102 = arith.constant 4 : index
    %c0_103 = arith.constant 0 : index
    %c0_104 = arith.constant 0 : index
    %116 = vector.load %arg5[%c4_102, %c0_103, %c0_104] : memref<9x16x64xbf16, #tpu.memory_space<vmem>>, vector<1x16x64xbf16>
    %117 = vector.shape_cast %116 : vector<1x16x64xbf16> to vector<16x64xbf16>
    %cst_105 = arith.constant dense<0.000000e+00> : vector<16x128xf32>
    %118 = tpu.matmul %117, %84, %cst_105 {dimension_numbers = #tpu.dot_dimension_numbers<[1], [0], [0], [1], [0, 0, 1, 1], [], []>} : vector<16x64xbf16>, vector<64x128xbf16>, vector<16x128xf32> -> vector<16x128xf32>
    %119 = arith.truncf %118 : vector<16x128xf32> to vector<16x128xbf16>
    %c4_106 = arith.constant 4 : index
    %c0_107 = arith.constant 0 : index
    %c0_108 = arith.constant 0 : index
    %120 = vector.load %arg6[%c4_106, %c0_107, %c0_108] : memref<9x128x128xbf16, #tpu.memory_space<vmem>>, vector<1x128x128xbf16>
    %121 = vector.shape_cast %120 : vector<1x128x128xbf16> to vector<128x128xbf16>
    %cst_109 = arith.constant dense<0.000000e+00> : vector<16x128xf32>
    %122 = tpu.matmul %119, %121, %cst_109 {dimension_numbers = #tpu.dot_dimension_numbers<[1], [0], [0], [1], [0, 0, 1, 1], [], []>} : vector<16x128xbf16>, vector<128x128xbf16>, vector<16x128xf32> -> vector<16x128xf32>
    %123 = arith.addf %115, %122 : vector<16x128xf32>
    %c5_110 = arith.constant 5 : index
    %c0_111 = arith.constant 0 : index
    %c0_112 = arith.constant 0 : index
    %124 = vector.load %arg5[%c5_110, %c0_111, %c0_112] : memref<9x16x64xbf16, #tpu.memory_space<vmem>>, vector<1x16x64xbf16>
    %125 = vector.shape_cast %124 : vector<1x16x64xbf16> to vector<16x64xbf16>
    %cst_113 = arith.constant dense<0.000000e+00> : vector<16x128xf32>
    %126 = tpu.matmul %125, %84, %cst_113 {dimension_numbers = #tpu.dot_dimension_numbers<[1], [0], [0], [1], [0, 0, 1, 1], [], []>} : vector<16x64xbf16>, vector<64x128xbf16>, vector<16x128xf32> -> vector<16x128xf32>
    %127 = arith.truncf %126 : vector<16x128xf32> to vector<16x128xbf16>
    %c5_114 = arith.constant 5 : index
    %c0_115 = arith.constant 0 : index
    %c0_116 = arith.constant 0 : index
    %128 = vector.load %arg6[%c5_114, %c0_115, %c0_116] : memref<9x128x128xbf16, #tpu.memory_space<vmem>>, vector<1x128x128xbf16>
    %129 = vector.shape_cast %128 : vector<1x128x128xbf16> to vector<128x128xbf16>
    %cst_117 = arith.constant dense<0.000000e+00> : vector<16x128xf32>
    %130 = tpu.matmul %127, %129, %cst_117 {dimension_numbers = #tpu.dot_dimension_numbers<[1], [0], [0], [1], [0, 0, 1, 1], [], []>} : vector<16x128xbf16>, vector<128x128xbf16>, vector<16x128xf32> -> vector<16x128xf32>
    %131 = arith.addf %123, %130 : vector<16x128xf32>
    %c6_118 = arith.constant 6 : index
    %c0_119 = arith.constant 0 : index
    %c0_120 = arith.constant 0 : index
    %132 = vector.load %arg5[%c6_118, %c0_119, %c0_120] : memref<9x16x64xbf16, #tpu.memory_space<vmem>>, vector<1x16x64xbf16>
    %133 = vector.shape_cast %132 : vector<1x16x64xbf16> to vector<16x64xbf16>
    %cst_121 = arith.constant dense<0.000000e+00> : vector<16x128xf32>
    %134 = tpu.matmul %133, %84, %cst_121 {dimension_numbers = #tpu.dot_dimension_numbers<[1], [0], [0], [1], [0, 0, 1, 1], [], []>} : vector<16x64xbf16>, vector<64x128xbf16>, vector<16x128xf32> -> vector<16x128xf32>
    %135 = arith.truncf %134 : vector<16x128xf32> to vector<16x128xbf16>
    %c6_122 = arith.constant 6 : index
    %c0_123 = arith.constant 0 : index
    %c0_124 = arith.constant 0 : index
    %136 = vector.load %arg6[%c6_122, %c0_123, %c0_124] : memref<9x128x128xbf16, #tpu.memory_space<vmem>>, vector<1x128x128xbf16>
    %137 = vector.shape_cast %136 : vector<1x128x128xbf16> to vector<128x128xbf16>
    %cst_125 = arith.constant dense<0.000000e+00> : vector<16x128xf32>
    %138 = tpu.matmul %135, %137, %cst_125 {dimension_numbers = #tpu.dot_dimension_numbers<[1], [0], [0], [1], [0, 0, 1, 1], [], []>} : vector<16x128xbf16>, vector<128x128xbf16>, vector<16x128xf32> -> vector<16x128xf32>
    %139 = arith.addf %131, %138 : vector<16x128xf32>
    %c7_126 = arith.constant 7 : index
    %c0_127 = arith.constant 0 : index
    %c0_128 = arith.constant 0 : index
    %140 = vector.load %arg5[%c7_126, %c0_127, %c0_128] : memref<9x16x64xbf16, #tpu.memory_space<vmem>>, vector<1x16x64xbf16>
    %141 = vector.shape_cast %140 : vector<1x16x64xbf16> to vector<16x64xbf16>
    %cst_129 = arith.constant dense<0.000000e+00> : vector<16x128xf32>
    %142 = tpu.matmul %141, %84, %cst_129 {dimension_numbers = #tpu.dot_dimension_numbers<[1], [0], [0], [1], [0, 0, 1, 1], [], []>} : vector<16x64xbf16>, vector<64x128xbf16>, vector<16x128xf32> -> vector<16x128xf32>
    %143 = arith.truncf %142 : vector<16x128xf32> to vector<16x128xbf16>
    %c7_130 = arith.constant 7 : index
    %c0_131 = arith.constant 0 : index
    %c0_132 = arith.constant 0 : index
    %144 = vector.load %arg6[%c7_130, %c0_131, %c0_132] : memref<9x128x128xbf16, #tpu.memory_space<vmem>>, vector<1x128x128xbf16>
    %145 = vector.shape_cast %144 : vector<1x128x128xbf16> to vector<128x128xbf16>
    %cst_133 = arith.constant dense<0.000000e+00> : vector<16x128xf32>
    %146 = tpu.matmul %143, %145, %cst_133 {dimension_numbers = #tpu.dot_dimension_numbers<[1], [0], [0], [1], [0, 0, 1, 1], [], []>} : vector<16x128xbf16>, vector<128x128xbf16>, vector<16x128xf32> -> vector<16x128xf32>
    %147 = arith.addf %139, %146 : vector<16x128xf32>
    %c8_134 = arith.constant 8 : index
    %c0_135 = arith.constant 0 : index
    %c0_136 = arith.constant 0 : index
    %148 = vector.load %arg5[%c8_134, %c0_135, %c0_136] : memref<9x16x64xbf16, #tpu.memory_space<vmem>>, vector<1x16x64xbf16>
    %149 = vector.shape_cast %148 : vector<1x16x64xbf16> to vector<16x64xbf16>
    %cst_137 = arith.constant dense<0.000000e+00> : vector<16x128xf32>
    %150 = tpu.matmul %149, %84, %cst_137 {dimension_numbers = #tpu.dot_dimension_numbers<[1], [0], [0], [1], [0, 0, 1, 1], [], []>} : vector<16x64xbf16>, vector<64x128xbf16>, vector<16x128xf32> -> vector<16x128xf32>
    %151 = arith.truncf %150 : vector<16x128xf32> to vector<16x128xbf16>
    %c8_138 = arith.constant 8 : index
    %c0_139 = arith.constant 0 : index
    %c0_140 = arith.constant 0 : index
    %152 = vector.load %arg6[%c8_138, %c0_139, %c0_140] : memref<9x128x128xbf16, #tpu.memory_space<vmem>>, vector<1x128x128xbf16>
    %153 = vector.shape_cast %152 : vector<1x128x128xbf16> to vector<128x128xbf16>
    %cst_141 = arith.constant dense<0.000000e+00> : vector<16x128xf32>
    %154 = tpu.matmul %151, %153, %cst_141 {dimension_numbers = #tpu.dot_dimension_numbers<[1], [0], [0], [1], [0, 0, 1, 1], [], []>} : vector<16x128xbf16>, vector<128x128xbf16>, vector<16x128xf32> -> vector<16x128xf32>
    %155 = arith.addf %147, %154 : vector<16x128xf32>
    %c0_142 = arith.constant 0 : index
    %c0_143 = arith.constant 0 : index
    %156 = vector.load %arg7[%c0_142, %c0_143] : memref<1x128xf32, #tpu.memory_space<vmem>>, vector<1x128xf32>
    %157 = vector.broadcast %156 : vector<1x128xf32> to vector<16x128xf32>
    %158 = arith.addf %155, %157 : vector<16x128xf32>
    %cst_144 = arith.constant 5.000000e-01 : f32
    %159 = vector.broadcast %cst_144 : f32 to vector<16x128xf32>
    %160 = arith.mulf %159, %158 : vector<16x128xf32>
    %161 = math.tanh %160 : vector<16x128xf32>
    %cst_145 = arith.constant 1.000000e+00 : f32
    %162 = vector.broadcast %cst_145 : f32 to vector<16x128xf32>
    %163 = arith.addf %161, %162 : vector<16x128xf32>
    %cst_146 = arith.constant 5.000000e-01 : f32
    %164 = vector.broadcast %cst_146 : f32 to vector<16x128xf32>
    %165 = arith.mulf %164, %163 : vector<16x128xf32>
    %166 = arith.mulf %158, %165 : vector<16x128xf32>
    %167 = arith.truncf %166 : vector<16x128xf32> to vector<16x128xbf16>
    %c0_147 = arith.constant 0 : index
    %c0_148 = arith.constant 0 : index
    %168 = vector.load %arg8[%c0_147, %c0_148] : memref<128x128xbf16, #tpu.memory_space<vmem>>, vector<128x128xbf16>
    %cst_149 = arith.constant dense<0.000000e+00> : vector<16x128xf32>
    %169 = tpu.matmul %167, %168, %cst_149 {dimension_numbers = #tpu.dot_dimension_numbers<[1], [0], [0], [1], [0, 0, 1, 1], [], []>} : vector<16x128xbf16>, vector<128x128xbf16>, vector<16x128xf32> -> vector<16x128xf32>
    %c0_150 = arith.constant 0 : index
    %c0_151 = arith.constant 0 : index
    %170 = vector.load %arg9[%c0_150, %c0_151] : memref<1x128xf32, #tpu.memory_space<vmem>>, vector<1x128xf32>
    %171 = vector.broadcast %170 : vector<1x128xf32> to vector<16x128xf32>
    %172 = arith.addf %169, %171 : vector<16x128xf32>
    %cst_152 = arith.constant 5.000000e-01 : f32
    %173 = vector.broadcast %cst_152 : f32 to vector<16x128xf32>
    %174 = arith.mulf %173, %172 : vector<16x128xf32>
    %175 = math.tanh %174 : vector<16x128xf32>
    %cst_153 = arith.constant 1.000000e+00 : f32
    %176 = vector.broadcast %cst_153 : f32 to vector<16x128xf32>
    %177 = arith.addf %175, %176 : vector<16x128xf32>
    %cst_154 = arith.constant 5.000000e-01 : f32
    %178 = vector.broadcast %cst_154 : f32 to vector<16x128xf32>
    %179 = arith.mulf %178, %177 : vector<16x128xf32>
    %180 = arith.mulf %172, %179 : vector<16x128xf32>
    %181 = arith.truncf %180 : vector<16x128xf32> to vector<16x128xbf16>
    %c0_155 = arith.constant 0 : index
    %c0_156 = arith.constant 0 : index
    %182 = vector.load %arg10[%c0_155, %c0_156] : memref<128x128xbf16, #tpu.memory_space<vmem>>, vector<128x128xbf16>
    %cst_157 = arith.constant dense<0.000000e+00> : vector<16x128xf32>
    %183 = tpu.matmul %181, %182, %cst_157 {dimension_numbers = #tpu.dot_dimension_numbers<[1], [0], [0], [1], [0, 0, 1, 1], [], []>} : vector<16x128xbf16>, vector<128x128xbf16>, vector<16x128xf32> -> vector<16x128xf32>
    %c0_158 = arith.constant 0 : index
    %c0_159 = arith.constant 0 : index
    %184 = vector.load %arg11[%c0_158, %c0_159] : memref<1x128xf32, #tpu.memory_space<vmem>>, vector<1x128xf32>
    %185 = vector.broadcast %184 : vector<1x128xf32> to vector<16x128xf32>
    %186 = arith.addf %183, %185 : vector<16x128xf32>
    %c0_160 = arith.constant 0 : index
    %c0_161 = arith.constant 0 : index
    %c0_162 = arith.constant 0 : index
    %187 = vector.load %arg12[%c0_160, %c0_161, %c0_162] : memref<1x16x128xf32, #tpu.memory_space<vmem>>, vector<1x16x128xf32>
    %188 = vector.shape_cast %187 : vector<1x16x128xf32> to vector<16x128xf32>
    %189 = vector.shape_cast %186 : vector<16x128xf32> to vector<1x16x128xf32>
    tpu.vector_store %arg12[%c0_160, %c0_161, %c0_162], %189 {strides = array<i32>} : memref<1x16x128xf32, #tpu.memory_space<vmem>>, vector<1x16x128xf32>,
    return
  }
  func.func @transform_0(%arg0: i32) -> (i32, i32, i32) {
    %c0_i32 = arith.constant 0 : i32
    %c0_i32_0 = arith.constant 0 : i32
    %c0_i32_1 = arith.constant 0 : i32
    return %arg0, %c0_i32, %c0_i32_0 : i32, i32, i32
  }
  func.func @transform_1(%arg0: i32) -> (i32, i32, i32) {
    %c0_i32 = arith.constant 0 : i32
    %c0_i32_0 = arith.constant 0 : i32
    %c0_i32_1 = arith.constant 0 : i32
    %c0_i32_2 = arith.constant 0 : i32
    return %c0_i32, %c0_i32_0, %c0_i32_1 : i32, i32, i32
  }
  func.func @transform_2(%arg0: i32) -> (i32, i32, i32) {
    %c0_i32 = arith.constant 0 : i32
    %c0_i32_0 = arith.constant 0 : i32
    %c0_i32_1 = arith.constant 0 : i32
    %c0_i32_2 = arith.constant 0 : i32
    return %c0_i32, %c0_i32_0, %c0_i32_1 : i32, i32, i32
  }
  func.func @transform_3(%arg0: i32) -> (i32, i32) {
    %c0_i32 = arith.constant 0 : i32
    %c0_i32_0 = arith.constant 0 : i32
    %c0_i32_1 = arith.constant 0 : i32
    return %c0_i32, %c0_i32_0 : i32, i32
  }
  func.func @transform_4(%arg0: i32) -> (i32, i32, i32) {
    %c0_i32 = arith.constant 0 : i32
    %c0_i32_0 = arith.constant 0 : i32
    %c0_i32_1 = arith.constant 0 : i32
    %c0_i32_2 = arith.constant 0 : i32
    return %c0_i32, %c0_i32_0, %c0_i32_1 : i32, i32, i32
  }
  func.func @transform_5(%arg0: i32) -> (i32, i32, i32) {
    %c0_i32 = arith.constant 0 : i32
    %c0_i32_0 = arith.constant 0 : i32
    %c0_i32_1 = arith.constant 0 : i32
    %c0_i32_2 = arith.constant 0 : i32
    return %c0_i32, %c0_i32_0, %c0_i32_1 : i32, i32, i32
  }
  func.func @transform_6(%arg0: i32) -> (i32, i32) {
    %c0_i32 = arith.constant 0 : i32
    %c0_i32_0 = arith.constant 0 : i32
    %c0_i32_1 = arith.constant 0 : i32
    return %c0_i32, %c0_i32_0 : i32, i32
  }
  func.func @transform_7(%arg0: i32) -> (i32, i32) {
    %c0_i32 = arith.constant 0 : i32
    %c0_i32_0 = arith.constant 0 : i32
    %c0_i32_1 = arith.constant 0 : i32
    return %c0_i32, %c0_i32_0 : i32, i32
  }
  func.func @transform_8(%arg0: i32) -> (i32, i32) {
    %c0_i32 = arith.constant 0 : i32
    %c0_i32_0 = arith.constant 0 : i32
    %c0_i32_1 = arith.constant 0 : i32
    return %c0_i32, %c0_i32_0 : i32, i32
  }
  func.func @transform_9(%arg0: i32) -> (i32, i32) {
    %c0_i32 = arith.constant 0 : i32
    %c0_i32_0 = arith.constant 0 : i32
    %c0_i32_1 = arith.constant 0 : i32
    return %c0_i32, %c0_i32_0 : i32, i32
  }
  func.func @transform_10(%arg0: i32) -> (i32, i32) {
    %c0_i32 = arith.constant 0 : i32
    %c0_i32_0 = arith.constant 0 : i32
    %c0_i32_1 = arith.constant 0 : i32
    return %c0_i32, %c0_i32_0 : i32, i32
  }
  func.func @transform_11(%arg0: i32) -> (i32, i32, i32) {
    %c0_i32 = arith.constant 0 : i32
    %c0_i32_0 = arith.constant 0 : i32
    %c0_i32_1 = arith.constant 0 : i32
    return %arg0, %c0_i32, %c0_i32_0 : i32, i32, i32
  }
}

</mosaic_0001>

<llo_original>
// kernel: yolo_forward.1
$region0: #{yolo_forward.1}
  #allocation0 [shape = 'u32[]', space=smem, size = 0x4, offset = 0x4, fixed_abs, tag = 'smem constant byte address 0x4 - core index']
  #allocation1 [shape = 'u32[72,128]{1,0:T(1,128)}', space=vmem, size = 0x9000, scoped, tag = 'internal scratch']
  %s0 = inlined_call_operand.vmem [shape: bf16[2,256,128], index: 0, kind: input, shape index: {}]
  %s1 = inlined_call_operand.vmem [shape: bf16[9,64,256], index: 1, kind: input, shape index: {}]
  %s2 = inlined_call_operand.hbm [shape: bf16[9,128,128], index: 2, kind: input, shape index: {}]
  %s3 = inlined_call_operand.vmem [shape: f32[1,128], index: 3, kind: input, shape index: {}]
  %s4 = inlined_call_operand.vmem [shape: bf16[9,16,64], index: 4, kind: input, shape index: {}]
  %s5 = inlined_call_operand.hbm [shape: bf16[9,128,128], index: 5, kind: input, shape index: {}]
  %s6 = inlined_call_operand.vmem [shape: f32[1,128], index: 6, kind: input, shape index: {}]
  %s7 = inlined_call_operand.vmem [shape: bf16[128,128], index: 7, kind: input, shape index: {}]
  %s8 = inlined_call_operand.vmem [shape: f32[1,128], index: 8, kind: input, shape index: {}]
  %s9 = inlined_call_operand.vmem [shape: bf16[128,128], index: 9, kind: input, shape index: {}]
  %s10 = inlined_call_operand.vmem [shape: f32[1,128], index: 10, kind: input, shape index: {}]
  %s11 = inlined_call_operand.hbm [shape: f32[2,16,128], index: 11, kind: output, shape index: {}]
  %s12 = sld [smem:[#allocation0]]
  $region85: #{yolo_forward.1} parent=0
    _
  %s14 = ssub.s32 1, %s12
  %s15 = scalar_select 0, %s14, %s12
  $region1: #{yolo_forward.1} parent=0
    #allocation2 [shape = 'u8[294912]{0}', space=vmem, size = 0x48000, scoped, tag = 'input window, operand 2, single buffered']
    #allocation3 [shape = 's32[2]{0}', space=sflag, size = 0x8, scoped, tag = 'scoped memory for yolo_forward.1']
    #allocation4 [shape = 's32[2]{0}', space=sflag, size = 0x8, scoped, tag = 'scoped memory for yolo_forward.1']
    #allocation5 [shape = 'u8[294912]{0}', space=vmem, size = 0x48000, scoped, tag = 'input window, operand 5, single buffered']
    #allocation6 [shape = 's32[1]{0}', space=sflag, size = 0x4, scoped, tag = 'scoped memory for yolo_forward.1']
    #allocation7 [shape = 'u8[16384]{0}', space=vmem, size = 0x4000, scoped, tag = 'output window, operand 0']
    %16 = vsyncpa [#allocation3], 0
    %17 = vsyncpa [#allocation6], 0
    %18 = vsyncpa [#allocation4], 0
    %s19 = scalar_lea.sflag [#allocation4], 1
    %20 = vsyncpa %s19, 0
    loop: start=0, step=1, limit=4
    $region2: #{yolo_forward.1} parent=1 // loop_pre_header
      _
    $region3: #{yolo_forward.1} parent=1 // loop_header
      %s22 = sphi 0, %s26
      %p23 = scmp.ge.s32.totalorder %s22, 4
      %s32 = sphi 0, %s34
      %s35 = sphi 0, %s32
      %s36 = sphi 0, %s35
      %s52 = sphi 0, %s36
      %s56 = sphi 0, %s56
      %s58 = sphi 0, %s56
      %s59 = sphi 0, %s58
      %s73 = sphi 0, %s59
      %s77 = sphi 0, %s77
      %s79 = sphi 0, %s77
      %s80 = sphi 0, %s79
      %s94 = sphi 0, %s80
      %s98 = sphi 0, %s98
      %s100 = sphi 0, %s98
      %s101 = sphi 0, %s100
      %s115 = sphi 0, %s101
      %s119 = sphi 0, %s119
      %s121 = sphi 0, %s119
      %s122 = sphi 0, %s121
      %s136 = sphi 0, %s122
      %s140 = sphi 0, %s140
      %s142 = sphi 0, %s140
      %s143 = sphi 0, %s142
      %s157 = sphi 0, %s143
      %s161 = sphi 0, %s161
      %s163 = sphi 0, %s161
      %s164 = sphi 0, %s163
      %s178 = sphi 0, %s164
      %s182 = sphi 0, %s182
      %s184 = sphi 0, %s182
      %s185 = sphi 0, %s184
      %s199 = sphi 0, %s185
      %s203 = sphi 0, %s203
      %s205 = sphi 0, %s203
      %s206 = sphi 0, %s205
      %s220 = sphi 0, %s206
      %s224 = sphi 0, %s224
      %s226 = sphi 0, %s224
      %s227 = sphi 0, %s226
      %s241 = sphi 0, %s227
      %s245 = sphi 0, %s245
      %s247 = sphi 0, %s245
      %s248 = sphi 0, %s247
      %s262 = sphi 0, %s248
      %s268 = sphi 0, %s270
      %s271 = sphi 0, %s268
      %s272 = sphi 0, %s271
      %s288 = sphi 0, %s272
    $region4: #{yolo_forward.1} parent=1 // loop_header_branch
      %25 = sbr.rel (%p23) target = $region8
    $region5: #{yolo_forward.1} parent=1 // loop_body
      %s27 = ssub.s32 %s22, 1
      %s28 = ssub.s32 %s22, 2
      %s29 = sadd.s32 %s22, 1
      %s30 = ssub.s32 %s22, %s29
      %p31 = scmp.eq.s32.totalorder %s30, 0
      %s33 = sadd.s32 %s32, 1
      %s34 = scalar_select %p31, %s32, %s33
      %p37 = pneg %p31
      %p38 = scmp.eq.s32.totalorder %s22, 1
      %p39 = por %p37, %p38
      %p40 = scmp.ne.s32.totalorder %s32, %s35
      %p41 = scmp.eq.s32.totalorder %s22, 0
      %p42 = por %p40, %p41
      %p43 = scmp.ne.s32.totalorder %s32, %s35
      %p44 = scmp.eq.s32.totalorder %s27, 1
      %p45 = por %p43, %p44
      %p46 = scmp.ne.s32.totalorder %s35, %s36
      %p47 = scmp.eq.s32.totalorder %s27, 0
      %p48 = por %p46, %p47
      %p49 = scmp.ne.s32.totalorder %s35, %s36
      %p50 = scmp.eq.s32.totalorder %s28, 1
      %p51 = por %p49, %p50
      %p53 = scmp.ne.s32.totalorder %s36, %s52
      %p54 = scmp.eq.s32.totalorder %s28, 0
      %p55 = por %p53, %p54
      %s57 = sadd.s32 %s56, 1
      %p60 = scmp.eq.s32.totalorder %s22, 1
      %p61 = scmp.ne.s32.totalorder %s56, %s58
      %p62 = scmp.eq.s32.totalorder %s22, 0
      %p63 = por %p61, %p62
      %p64 = scmp.ne.s32.totalorder %s56, %s58
      %p65 = scmp.eq.s32.totalorder %s27, 1
      %p66 = por %p64, %p65
      %p67 = scmp.ne.s32.totalorder %s58, %s59
      %p68 = scmp.eq.s32.totalorder %s27, 0
      %p69 = por %p67, %p68
      %p70 = scmp.ne.s32.totalorder %s58, %s59
      %p71 = scmp.eq.s32.totalorder %s28, 1
      %p72 = por %p70, %p71
      %p74 = scmp.ne.s32.totalorder %s59, %s73
      %p75 = scmp.eq.s32.totalorder %s28, 0
      %p76 = por %p74, %p75
      %s78 = sadd.s32 %s77, 1
      %p81 = scmp.eq.s32.totalorder %s22, 1
      %p82 = scmp.ne.s32.totalorder %s77, %s79
      %p83 = scmp.eq.s32.totalorder %s22, 0
      %p84 = por %p82, %p83
      %p85 = scmp.ne.s32.totalorder %s77, %s79
      %p86 = scmp.eq.s32.totalorder %s27, 1
      %p87 = por %p85, %p86
      %p88 = scmp.ne.s32.totalorder %s79, %s80
      %p89 = scmp.eq.s32.totalorder %s27, 0
      %p90 = por %p88, %p89
      %p91 = scmp.ne.s32.totalorder %s79, %s80
      %p92 = scmp.eq.s32.totalorder %s28, 1
      %p93 = por %p91, %p92
      %p95 = scmp.ne.s32.totalorder %s80, %s94
      %p96 = scmp.eq.s32.totalorder %s28, 0
      %p97 = por %p95, %p96
      %s99 = sadd.s32 %s98, 1
      %p102 = scmp.eq.s32.totalorder %s22, 1
      %p103 = scmp.ne.s32.totalorder %s98, %s100
      %p104 = scmp.eq.s32.totalorder %s22, 0
      %p105 = por %p103, %p104
      %p106 = scmp.ne.s32.totalorder %s98, %s100
      %p107 = scmp.eq.s32.totalorder %s27, 1
      %p108 = por %p106, %p107
      %p109 = scmp.ne.s32.totalorder %s100, %s101
      %p110 = scmp.eq.s32.totalorder %s27, 0
      %p111 = por %p109, %p110
      %p112 = scmp.ne.s32.totalorder %s100, %s101
      %p113 = scmp.eq.s32.totalorder %s28, 1
      %p114 = por %p112, %p113
      %p116 = scmp.ne.s32.totalorder %s101, %s115
      %p117 = scmp.eq.s32.totalorder %s28, 0
      %p118 = por %p116, %p117
      %s120 = sadd.s32 %s119, 1
      %p123 = scmp.eq.s32.totalorder %s22, 1
      %p124 = scmp.ne.s32.totalorder %s119, %s121
      %p125 = scmp.eq.s32.totalorder %s22, 0
      %p126 = por %p124, %p125
      %p127 = scmp.ne.s32.totalorder %s119, %s121
      %p128 = scmp.eq.s32.totalorder %s27, 1
      %p129 = por %p127, %p128
      %p130 = scmp.ne.s32.totalorder %s121, %s122
      %p131 = scmp.eq.s32.totalorder %s27, 0
      %p132 = por %p130, %p131
      %p133 = scmp.ne.s32.totalorder %s121, %s122
      %p134 = scmp.eq.s32.totalorder %s28, 1
      %p135 = por %p133, %p134
      %p137 = scmp.ne.s32.totalorder %s122, %s136
      %p138 = scmp.eq.s32.totalorder %s28, 0
      %p139 = por %p137, %p138
      %s141 = sadd.s32 %s140, 1
      %p144 = scmp.eq.s32.totalorder %s22, 1
      %p145 = scmp.ne.s32.totalorder %s140, %s142
      %p146 = scmp.eq.s32.totalorder %s22, 0
      %p147 = por %p145, %p146
      %p148 = scmp.ne.s32.totalorder %s140, %s142
      %p149 = scmp.eq.s32.totalorder %s27, 1
      %p150 = por %p148, %p149
      %p151 = scmp.ne.s32.totalorder %s142, %s143
      %p152 = scmp.eq.s32.totalorder %s27, 0
      %p153 = por %p151, %p152
      %p154 = scmp.ne.s32.totalorder %s142, %s143
      %p155 = scmp.eq.s32.totalorder %s28, 1
      %p156 = por %p154, %p155
      %p158 = scmp.ne.s32.totalorder %s143, %s157
      %p159 = scmp.eq.s32.totalorder %s28, 0
      %p160 = por %p158, %p159
      %s162 = sadd.s32 %s161, 1
      %p165 = scmp.eq.s32.totalorder %s22, 1
      %p166 = scmp.ne.s32.totalorder %s161, %s163
      %p167 = scmp.eq.s32.totalorder %s22, 0
      %p168 = por %p166, %p167
      %p169 = scmp.ne.s32.totalorder %s161, %s163
      %p170 = scmp.eq.s32.totalorder %s27, 1
      %p171 = por %p169, %p170
      %p172 = scmp.ne.s32.totalorder %s163, %s164
      %p173 = scmp.eq.s32.totalorder %s27, 0
      %p174 = por %p172, %p173
      %p175 = scmp.ne.s32.totalorder %s163, %s164
      %p176 = scmp.eq.s32.totalorder %s28, 1
      %p177 = por %p175, %p176
      %p179 = scmp.ne.s32.totalorder %s164, %s178
      %p180 = scmp.eq.s32.totalorder %s28, 0
      %p181 = por %p179, %p180
      %s183 = sadd.s32 %s182, 1
      %p186 = scmp.eq.s32.totalorder %s22, 1
      %p187 = scmp.ne.s32.totalorder %s182, %s184
      %p188 = scmp.eq.s32.totalorder %s22, 0
      %p189 = por %p187, %p188
      %p190 = scmp.ne.s32.totalorder %s182, %s184
      %p191 = scmp.eq.s32.totalorder %s27, 1
      %p192 = por %p190, %p191
      %p193 = scmp.ne.s32.totalorder %s184, %s185
      %p194 = scmp.eq.s32.totalorder %s27, 0
      %p195 = por %p193, %p194
      %p196 = scmp.ne.s32.totalorder %s184, %s185
      %p197 = scmp.eq.s32.totalorder %s28, 1
      %p198 = por %p196, %p197
      %p200 = scmp.ne.s32.totalorder %s185, %s199
      %p201 = scmp.eq.s32.totalorder %s28, 0
      %p202 = por %p200, %p201
      %s204 = sadd.s32 %s203, 1
      %p207 = scmp.eq.s32.totalorder %s22, 1
      %p208 = scmp.ne.s32.totalorder %s203, %s205
      %p209 = scmp.eq.s32.totalorder %s22, 0
      %p210 = por %p208, %p209
      %p211 = scmp.ne.s32.totalorder %s203, %s205
      %p212 = scmp.eq.s32.totalorder %s27, 1
      %p213 = por %p211, %p212
      %p214 = scmp.ne.s32.totalorder %s205, %s206
      %p215 = scmp.eq.s32.totalorder %s27, 0
      %p216 = por %p214, %p215
      %p217 = scmp.ne.s32.totalorder %s205, %s206
      %p218 = scmp.eq.s32.totalorder %s28, 1
      %p219 = por %p217, %p218
      %p221 = scmp.ne.s32.totalorder %s206, %s220
      %p222 = scmp.eq.s32.totalorder %s28, 0
      %p223 = por %p221, %p222
      %s225 = sadd.s32 %s224, 1
      %p228 = scmp.eq.s32.totalorder %s22, 1
      %p229 = scmp.ne.s32.totalorder %s224, %s226
      %p230 = scmp.eq.s32.totalorder %s22, 0
      %p231 = por %p229, %p230
      %p232 = scmp.ne.s32.totalorder %s224, %s226
      %p233 = scmp.eq.s32.totalorder %s27, 1
      %p234 = por %p232, %p233
      %p235 = scmp.ne.s32.totalorder %s226, %s227
      %p236 = scmp.eq.s32.totalorder %s27, 0
      %p237 = por %p235, %p236
      %p238 = scmp.ne.s32.totalorder %s226, %s227
      %p239 = scmp.eq.s32.totalorder %s28, 1
      %p240 = por %p238, %p239
      %p242 = scmp.ne.s32.totalorder %s227, %s241
      %p243 = scmp.eq.s32.totalorder %s28, 0
      %p244 = por %p242, %p243
      %s246 = sadd.s32 %s245, 1
      %p249 = scmp.eq.s32.totalorder %s22, 1
      %p250 = scmp.ne.s32.totalorder %s245, %s247
      %p251 = scmp.eq.s32.totalorder %s22, 0
      %p252 = por %p250, %p251
      %p253 = scmp.ne.s32.totalorder %s245, %s247
      %p254 = scmp.eq.s32.totalorder %s27, 1
      %p255 = por %p253, %p254
      %p256 = scmp.ne.s32.totalorder %s247, %s248
      %p257 = scmp.eq.s32.totalorder %s27, 0
      %p258 = por %p256, %p257
      %p259 = scmp.ne.s32.totalorder %s247, %s248
      %p260 = scmp.eq.s32.totalorder %s28, 1
      %p261 = por %p259, %p260
      %p263 = scmp.ne.s32.totalorder %s248, %s262
      %p264 = scmp.eq.s32.totalorder %s28, 0
      %p265 = por %p263, %p264
      %s266 = ssub.s32 %s22, %s29
      %p267 = scmp.eq.s32.totalorder %s266, 0
      %s269 = sadd.s32 %s268, 1
      %s270 = scalar_select %p267, %s268, %s269
      %p273 = pneg %p267
      %p274 = scmp.eq.s32.totalorder %s22, 1
      %p275 = por %p273, %p274
      %p276 = scmp.ne.s32.totalorder %s268, %s271
      %p277 = scmp.eq.s32.totalorder %s22, 0
      %p278 = por %p276, %p277
      %p279 = scmp.ne.s32.totalorder %s268, %s271
      %p280 = scmp.eq.s32.totalorder %s27, 1
      %p281 = por %p279, %p280
      %p282 = scmp.ne.s32.totalorder %s271, %s272
      %p283 = scmp.eq.s32.totalorder %s27, 0
      %p284 = por %p282, %p283
      %p285 = scmp.ne.s32.totalorder %s271, %s272
      %p286 = scmp.eq.s32.totalorder %s28, 1
      %p287 = por %p285, %p286
      %p289 = scmp.ne.s32.totalorder %s272, %s288
      %p290 = scmp.eq.s32.totalorder %s28, 0
      %p291 = por %p289, %p290
      %p292 = scmp.le.s32.totalorder 1, %s22
      %p293 = scmp.lt.s32.totalorder %s22, 3
      %p294 = pnand %p292, %p293
      %p295 = pneg %p294
      // Predicated region
      $region9: #{yolo_forward.1} parent=5 // pred_check
        _
      $region10: #{yolo_forward.1} parent=5 // pred_check_branch
        %297 = sbr.rel (%p294) target = $region12
      $region11: #{yolo_forward.1} parent=5 // pred_region
        %s298 = ssub.s32 %s22, 1
        // Predicated region
        $region13: #{yolo_forward.1} parent=11 // pred_check
          %p299 = pneg %p69
        $region14: #{yolo_forward.1} parent=11 // pred_check_branch
          %301 = sbr.rel (%p299) target = $region16
        $region15: #{yolo_forward.1} parent=11 // pred_region
          _
        $region16: #{yolo_forward.1} parent=11 // pred_fallthru
          _
        // Predicated region
        $region17: #{yolo_forward.1} parent=11 // pred_check
          %p302 = pneg %p90
        $region18: #{yolo_forward.1} parent=11 // pred_check_branch
          %304 = sbr.rel (%p302) target = $region20
        $region19: #{yolo_forward.1} parent=11 // pred_region
          %306 = vsyncadd [#allocation3], 0
          %s307 = sshll.u32 %s2, 4
          %s308 = int_to_ptr.hbm [resolvable:$true] %s307
          %s309 = sshll.u32 [#allocation2], 4
          %s310 = int_to_ptr.vmem [resolvable:$true] %s309
          %315 = dma.hbm_to_vmem [thread:$0]  %s308, 9216, %s310, [#allocation3], 64, 64, 4
        $region20: #{yolo_forward.1} parent=11 // pred_fallthru
          _
        // Predicated region
        $region21: #{yolo_forward.1} parent=11 // pred_check
          %p316 = pneg %p111
        $region22: #{yolo_forward.1} parent=11 // pred_check_branch
          %318 = sbr.rel (%p316) target = $region24
        $region23: #{yolo_forward.1} parent=11 // pred_region
          _
        $region24: #{yolo_forward.1} parent=11 // pred_fallthru
          _
        // Predicated region
        $region25: #{yolo_forward.1} parent=11 // pred_check
          %p319 = pneg %p132
        $region26: #{yolo_forward.1} parent=11 // pred_check_branch
          %321 = sbr.rel (%p319) target = $region28
        $region27: #{yolo_forward.1} parent=11 // pred_region
          _
        $region28: #{yolo_forward.1} parent=11 // pred_fallthru
          _
        // Predicated region
        $region29: #{yolo_forward.1} parent=11 // pred_check
          %p322 = pneg %p153
        $region30: #{yolo_forward.1} parent=11 // pred_check_branch
          %324 = sbr.rel (%p322) target = $region32
        $region31: #{yolo_forward.1} parent=11 // pred_region
          %326 = vsyncadd [#allocation6], 0
          %s327 = sshll.u32 %s5, 4
          %s328 = int_to_ptr.hbm [resolvable:$true] %s327
          %s329 = sshll.u32 [#allocation5], 4
          %s330 = int_to_ptr.vmem [resolvable:$true] %s329
          %335 = dma.hbm_to_vmem [thread:$0]  %s328, 9216, %s330, [#allocation6], 64, 64, 4
        $region32: #{yolo_forward.1} parent=11 // pred_fallthru
          _
        // Predicated region
        $region33: #{yolo_forward.1} parent=11 // pred_check
          %p336 = pneg %p174
        $region34: #{yolo_forward.1} parent=11 // pred_check_branch
          %338 = sbr.rel (%p336) target = $region36
        $region35: #{yolo_forward.1} parent=11 // pred_region
          _
        $region36: #{yolo_forward.1} parent=11 // pred_fallthru
          _
        // Predicated region
        $region37: #{yolo_forward.1} parent=11 // pred_check
          %p339 = pneg %p195
        $region38: #{yolo_forward.1} parent=11 // pred_check_branch
          %341 = sbr.rel (%p339) target = $region40
        $region39: #{yolo_forward.1} parent=11 // pred_region
          _
        $region40: #{yolo_forward.1} parent=11 // pred_fallthru
          _
        // Predicated region
        $region41: #{yolo_forward.1} parent=11 // pred_check
          %p342 = pneg %p216
        $region42: #{yolo_forward.1} parent=11 // pred_check_branch
          %344 = sbr.rel (%p342) target = $region44
        $region43: #{yolo_forward.1} parent=11 // pred_region
          _
        $region44: #{yolo_forward.1} parent=11 // pred_fallthru
          _
        // Predicated region
        $region45: #{yolo_forward.1} parent=11 // pred_check
          %p345 = pneg %p237
        $region46: #{yolo_forward.1} parent=11 // pred_check_branch
          %347 = sbr.rel (%p345) target = $region48
        $region47: #{yolo_forward.1} parent=11 // pred_region
          _
        $region48: #{yolo_forward.1} parent=11 // pred_fallthru
          _
        // Predicated region
        $region49: #{yolo_forward.1} parent=11 // pred_check
          %p348 = pneg %p258
        $region50: #{yolo_forward.1} parent=11 // pred_check_branch
          %350 = sbr.rel (%p348) target = $region52
        $region51: #{yolo_forward.1} parent=11 // pred_region
          _
        $region52: #{yolo_forward.1} parent=11 // pred_fallthru
          _
      $region12: #{yolo_forward.1} parent=5 // pred_fallthru
        _
      %p351 = scmp.lt.s32.totalorder %s22, 2
      // Predicated region
      $region53: #{yolo_forward.1} parent=5 // pred_check
        %p352 = pneg %p351
      $region54: #{yolo_forward.1} parent=5 // pred_check_branch
        %354 = sbr.rel (%p352) target = $region56
      $region55: #{yolo_forward.1} parent=5 // pred_region
        // Predicated region
        $region57: #{yolo_forward.1} parent=55 // pred_check
          %p355 = pneg %p42
        $region58: #{yolo_forward.1} parent=55 // pred_check_branch
          %357 = sbr.rel (%p355) target = $region60
        $region59: #{yolo_forward.1} parent=55 // pred_region
          %p358 = scmp.lt.s32.totalorder %s22, 1
          %s359 = scalar_select %p358, %s22, 1
          %s360 = smul.addr %s359, 32
          %s361 = smul.addr %s360, 4
          %s362 = scalar_lea.vmem %s0, %s361
        $region60: #{yolo_forward.1} parent=55 // pred_fallthru
          _
      $region56: #{yolo_forward.1} parent=5 // pred_fallthru
        _
      %p363 = scmp.le.s32.totalorder 1, %s22
      %p364 = scmp.lt.s32.totalorder %s22, 3
      %p365 = pnand %p363, %p364
      %p366 = pneg %p365
      // Predicated region
      $region61: #{yolo_forward.1} parent=5 // pred_check
        _
      $region62: #{yolo_forward.1} parent=5 // pred_check_branch
        %368 = sbr.rel (%p365) target = $region64
      $region63: #{yolo_forward.1} parent=5 // pred_region
        %s369 = ssub.s32 %s22, 1
        // Predicated region
        $region65: #{yolo_forward.1} parent=63 // pred_check
          %p370 = pneg %p90
        $region66: #{yolo_forward.1} parent=63 // pred_check_branch
          %372 = sbr.rel (%p370) target = $region68
        $region67: #{yolo_forward.1} parent=63 // pred_region
          %374 = dma.done [#allocation3], 9216
        $region68: #{yolo_forward.1} parent=63 // pred_fallthru
          _
        // Predicated region
        $region69: #{yolo_forward.1} parent=63 // pred_check
          %p375 = pneg %p153
        $region70: #{yolo_forward.1} parent=63 // pred_check_branch
          %377 = sbr.rel (%p375) target = $region72
        $region71: #{yolo_forward.1} parent=63 // pred_region
          %379 = dma.done [#allocation6], 9216
        $region72: #{yolo_forward.1} parent=63 // pred_fallthru
          _
        %p380 = scmp.lt.s32.totalorder %s27, 1
        %s381 = scalar_select %p380, %s27, 1
        %s382 = smul.addr %s381, 32
        %s383 = smul.addr %s382, 4
        %s384 = scalar_lea.vmem %s0, %s383
        %p385 = pneg %p48
        %p386 = pneg %p45
        %p387 = pneg %p69
        %p388 = pneg %p66
        %p389 = pneg %p90
        %p390 = pneg %p87
        %p391 = pneg %p111
        %p392 = pneg %p108
        %p393 = pneg %p132
        %p394 = pneg %p129
        %p395 = pneg %p153
        %p396 = pneg %p150
        %p397 = pneg %p174
        %p398 = pneg %p171
        %p399 = pneg %p195
        %p400 = pneg %p192
        %p401 = pneg %p216
        %p402 = pneg %p213
        %p403 = pneg %p237
        %p404 = pneg %p234
        %p405 = pneg %p258
        %p406 = pneg %p255
        %p407 = pneg %p284
        %p408 = pneg %p281
        %s409 = sand.u32 %s271, 1
        %s410 = scalar_lea.sflag [#allocation4], %s409
        %s411 = sand.u32 %s271, 1
        %s412 = smul.addr %s411, 16
        %s413 = scalar_lea.vmem [#allocation7], %s412
        %p414 = scmp.lt.s32.totalorder %s27, 1
        %s415 = scalar_select %p414, %s27, 1
        %s416 = smul.addr %s415, 32
        %s417 = smul.addr %s416, 4
        %s418 = scalar_lea.vmem %s0, %s417
        %v420 = vld [vmem:[%s418] sm:$0xf]
        %v421 = vld [vmem:[%s418 + $0x4] sm:$0xf]
        %v422 = vld [vmem:[%s418 + $0x8] sm:$0xf]
        %v423 = vld [vmem:[%s418 + $0xc] sm:$0xf]
        %v424 = vld [vmem:[%s418 + $0x10] sm:$0xf]
        %v425 = vld [vmem:[%s418 + $0x14] sm:$0xf]
        %v426 = vld [vmem:[%s418 + $0x18] sm:$0xf]
        %v427 = vld [vmem:[%s418 + $0x1c] sm:$0xf]
        %v428 = vld [vmem:[%s418 + $0x20] sm:$0xf]
        %v429 = vld [vmem:[%s418 + $0x24] sm:$0xf]
        %v430 = vld [vmem:[%s418 + $0x28] sm:$0xf]
        %v431 = vld [vmem:[%s418 + $0x2c] sm:$0xf]
        %v432 = vld [vmem:[%s418 + $0x30] sm:$0xf]
        %v433 = vld [vmem:[%s418 + $0x34] sm:$0xf]
        %v434 = vld [vmem:[%s418 + $0x38] sm:$0xf]
        %v435 = vld [vmem:[%s418 + $0x3c] sm:$0xf]
        %v436 = vld [vmem:[%s418 + $0x40] sm:$0xf]
        %v437 = vld [vmem:[%s418 + $0x44] sm:$0xf]
        %v438 = vld [vmem:[%s418 + $0x48] sm:$0xf]
        %v439 = vld [vmem:[%s418 + $0x4c] sm:$0xf]
        %v440 = vld [vmem:[%s418 + $0x50] sm:$0xf]
        %v441 = vld [vmem:[%s418 + $0x54] sm:$0xf]
        %v442 = vld [vmem:[%s418 + $0x58] sm:$0xf]
        %v443 = vld [vmem:[%s418 + $0x5c] sm:$0xf]
        %v444 = vld [vmem:[%s418 + $0x60] sm:$0xf]
        %v445 = vld [vmem:[%s418 + $0x64] sm:$0xf]
        %v446 = vld [vmem:[%s418 + $0x68] sm:$0xf]
        %v447 = vld [vmem:[%s418 + $0x6c] sm:$0xf]
        %v448 = vld [vmem:[%s418 + $0x70] sm:$0xf]
        %v449 = vld [vmem:[%s418 + $0x74] sm:$0xf]
        %v450 = vld [vmem:[%s418 + $0x78] sm:$0xf]
        %v451 = vld [vmem:[%s418 + $0x7c] sm:$0xf]
        %v452 = vld [vmem:[%s1] sm:$0xff]
        %v453 = vld [vmem:[%s1 + $0x8] sm:$0xff]
        %v454 = vld [vmem:[%s1 + $0x10] sm:$0xff]
        %v455 = vld [vmem:[%s1 + $0x18] sm:$0xff]
        %v456 = vld [vmem:[%s1 + $0x20] sm:$0xff]
        %v457 = vld [vmem:[%s1 + $0x28] sm:$0xff]
        %v458 = vld [vmem:[%s1 + $0x30] sm:$0xff]
        %v459 = vld [vmem:[%s1 + $0x38] sm:$0xff]
        %v468 = vunpack.c.l.b16 %v452
        %v469 = vunpack.c.h.b16 %v452
        %v470 = vunpack.c.l.b16 %v453
        %v471 = vunpack.c.h.b16 %v453
        %v472 = vunpack.c.l.b16 %v454
        %v473 = vunpack.c.h.b16 %v454
        %v474 = vunpack.c.l.b16 %v455
        %v475 = vunpack.c.h.b16 %v455
        %v476 = vunpack.c.l.b16 %v456
        %v477 = vunpack.c.h.b16 %v456
        %v478 = vunpack.c.l.b16 %v457
        %v479 = vunpack.c.h.b16 %v457
        %v480 = vunpack.c.l.b16 %v458
        %v481 = vunpack.c.h.b16 %v458
        %v482 = vunpack.c.l.b16 %v459
        %v483 = vunpack.c.h.b16 %v459
        %v484 = vpack.c.b16 %v470, %v468
        %v485 = vpack.c.b16 %v471, %v469
        %v486 = vpack.c.b16 %v474, %v472
        %v487 = vpack.c.b16 %v475, %v473
        %v488 = vpack.c.b16 %v478, %v476
        %v489 = vpack.c.b16 %v479, %v477
        %v490 = vpack.c.b16 %v482, %v480
        %v491 = vpack.c.b16 %v483, %v481
        %v532 = vunpack.c.l.b16 %v420
        %v533 = vunpack.c.l.b16 %v421
        %v534 = vunpack.c.l.b16 %v422
        %v535 = vunpack.c.l.b16 %v423
        %v536 = vunpack.c.l.b16 %v424
        %v537 = vunpack.c.l.b16 %v425
        %v538 = vunpack.c.l.b16 %v426
        %v539 = vunpack.c.l.b16 %v427
        %v540 = vunpack.c.l.b16 %v428
        %v541 = vunpack.c.l.b16 %v429
        %v542 = vunpack.c.l.b16 %v430
        %v543 = vunpack.c.l.b16 %v431
        %v544 = vunpack.c.l.b16 %v432
        %v545 = vunpack.c.l.b16 %v433
        %v546 = vunpack.c.l.b16 %v434
        %v547 = vunpack.c.l.b16 %v435
        %v548 = vunpack.c.l.b16 %v436
        %v549 = vunpack.c.l.b16 %v437
        %v550 = vunpack.c.l.b16 %v438
        %v551 = vunpack.c.l.b16 %v439
        %v552 = vunpack.c.l.b16 %v440
        %v553 = vunpack.c.l.b16 %v441
        %v554 = vunpack.c.l.b16 %v442
        %v555 = vunpack.c.l.b16 %v443
        %v556 = vunpack.c.l.b16 %v444
        %v557 = vunpack.c.l.b16 %v445
        %v558 = vunpack.c.l.b16 %v446
        %v559 = vunpack.c.l.b16 %v447
        %v560 = vunpack.c.l.b16 %v448
        %v561 = vunpack.c.l.b16 %v449
        %v562 = vunpack.c.l.b16 %v450
        %v563 = vunpack.c.l.b16 %v451
        %v564 = vpack.c.b16 %v533, %v532
        %v565 = vpack.c.b16 %v535, %v534
        %v566 = vpack.c.b16 %v537, %v536
        %v567 = vpack.c.b16 %v539, %v538
        %v568 = vpack.c.b16 %v541, %v540
        %v569 = vpack.c.b16 %v543, %v542
        %v570 = vpack.c.b16 %v545, %v544
        %v571 = vpack.c.b16 %v547, %v546
        %v572 = vpack.c.b16 %v549, %v548
        %v573 = vpack.c.b16 %v551, %v550
        %v574 = vpack.c.b16 %v553, %v552
        %v575 = vpack.c.b16 %v555, %v554
        %v576 = vpack.c.b16 %v557, %v556
        %v577 = vpack.c.b16 %v559, %v558
        %v578 = vpack.c.b16 %v561, %v560
        %v579 = vpack.c.b16 %v563, %v562
        %596 = vmatpush.bf16.msra.mxu0 %v571
        %597 = vmatpush.bf16.msra.mxu0 %v570
        %598 = vmatpush.bf16.msra.mxu0 %v569
        %599 = vmatpush.bf16.msra.mxu0 %v568
        %600 = vmatpush.bf16.msra.mxu0 %v567
        %601 = vmatpush.bf16.msra.mxu0 %v566
        %602 = vmatpush.bf16.msra.mxu0 %v565
        %603 = vmatpush.bf16.msra.mxu0 %v564
        %604 = vmatmul.bf16.gmra.mxu0 %v484
        %v605 = vpop.f32.mrf.mxu0
        %v606 = vadd.f32 0.0, %v605
        %v607 = vpop.f32.mrf.mxu0
        %v608 = vadd.f32 0.0, %v607
        %609 = vmatmul.bf16.gmra.mxu0 %v486
        %v610 = vpop.f32.mrf.mxu0
        %v611 = vadd.f32 0.0, %v610
        %v612 = vpop.f32.mrf.mxu0
        %v613 = vadd.f32 0.0, %v612
        %614 = vmatmul.bf16.gmra.mxu0 %v488
        %v615 = vpop.f32.mrf.mxu0
        %v616 = vadd.f32 0.0, %v615
        %v617 = vpop.f32.mrf.mxu0
        %v618 = vadd.f32 0.0, %v617
        %619 = vmatmul.bf16.gmra.mxu0 %v490
        %v620 = vpop.f32.mrf.mxu0
        %v621 = vadd.f32 0.0, %v620
        %v622 = vpop.f32.mrf.mxu0
        %v623 = vadd.f32 0.0, %v622
        %624 = vdwg.mxu0
        %625 = vmatpush.bf16.msra.mxu0 %v579
        %626 = vmatpush.bf16.msra.mxu0 %v578
        %627 = vmatpush.bf16.msra.mxu0 %v577
        %628 = vmatpush.bf16.msra.mxu0 %v576
        %629 = vmatpush.bf16.msra.mxu0 %v575
        %630 = vmatpush.bf16.msra.mxu0 %v574
        %631 = vmatpush.bf16.msra.mxu0 %v573
        %632 = vmatpush.bf16.msra.mxu0 %v572
        %633 = vmatmul.bf16.gmra.mxu0 %v485
        %v634 = vpop.f32.mrf.mxu0
        %v635 = vadd.f32 %v606, %v634
        %v636 = vpop.f32.mrf.mxu0
        %v637 = vadd.f32 %v608, %v636
        %638 = vmatmul.bf16.gmra.mxu0 %v487
        %v639 = vpop.f32.mrf.mxu0
        %v640 = vadd.f32 %v611, %v639
        %v641 = vpop.f32.mrf.mxu0
        %v642 = vadd.f32 %v613, %v641
        %643 = vmatmul.bf16.gmra.mxu0 %v489
        %v644 = vpop.f32.mrf.mxu0
        %v645 = vadd.f32 %v616, %v644
        %v646 = vpop.f32.mrf.mxu0
        %v647 = vadd.f32 %v618, %v646
        %648 = vmatmul.bf16.gmra.mxu0 %v491
        %v649 = vpop.f32.mrf.mxu0
        %v650 = vadd.f32 %v621, %v649
        %v651 = vpop.f32.mrf.mxu0
        %v652 = vadd.f32 %v623, %v651
        %653 = vdwg.mxu0
        %v654 = vpack.c.bf16 %v637, %v635
        %v655 = vpack.c.bf16 %v642, %v640
        %v656 = vpack.c.bf16 %v647, %v645
        %v657 = vpack.c.bf16 %v652, %v650
        %v658 = vld [vmem:[#allocation2] sm:$0xf]
        %v659 = vld [vmem:[#allocation2 + $0x4] sm:$0xf]
        %v660 = vld [vmem:[#allocation2 + $0x8] sm:$0xf]
        %v661 = vld [vmem:[#allocation2 + $0xc] sm:$0xf]
        %v662 = vld [vmem:[#allocation2 + $0x10] sm:$0xf]
        %v663 = vld [vmem:[#allocation2 + $0x14] sm:$0xf]
        %v664 = vld [vmem:[#allocation2 + $0x18] sm:$0xf]
        %v665 = vld [vmem:[#allocation2 + $0x1c] sm:$0xf]
        %v666 = vld [vmem:[#allocation2 + $0x20] sm:$0xf]
        %v667 = vld [vmem:[#allocation2 + $0x24] sm:$0xf]
        %v668 = vld [vmem:[#allocation2 + $0x28] sm:$0xf]
        %v669 = vld [vmem:[#allocation2 + $0x2c] sm:$0xf]
        %v670 = vld [vmem:[#allocation2 + $0x30] sm:$0xf]
        %v671 = vld [vmem:[#allocation2 + $0x34] sm:$0xf]
        %v672 = vld [vmem:[#allocation2 + $0x38] sm:$0xf]
        %v673 = vld [vmem:[#allocation2 + $0x3c] sm:$0xf]
        %s674 = scalar_lea.vmem %s1, 64
        %v675 = vld [vmem:[%s674] sm:$0xff]
        %v676 = vld [vmem:[%s674 + $0x8] sm:$0xff]
        %v677 = vld [vmem:[%s674 + $0x10] sm:$0xff]
        %v678 = vld [vmem:[%s674 + $0x18] sm:$0xff]
        %v679 = vld [vmem:[%s674 + $0x20] sm:$0xff]
        %v680 = vld [vmem:[%s674 + $0x28] sm:$0xff]
        %v681 = vld [vmem:[%s674 + $0x30] sm:$0xff]
        %v682 = vld [vmem:[%s674 + $0x38] sm:$0xff]
        %v691 = vunpack.c.l.b16 %v675
        %v692 = vunpack.c.h.b16 %v675
        %v693 = vunpack.c.l.b16 %v676
        %v694 = vunpack.c.h.b16 %v676
        %v695 = vunpack.c.l.b16 %v677
        %v696 = vunpack.c.h.b16 %v677
        %v697 = vunpack.c.l.b16 %v678
        %v698 = vunpack.c.h.b16 %v678
        %v699 = vunpack.c.l.b16 %v679
        %v700 = vunpack.c.h.b16 %v679
        %v701 = vunpack.c.l.b16 %v680
        %v702 = vunpack.c.h.b16 %v680
        %v703 = vunpack.c.l.b16 %v681
        %v704 = vunpack.c.h.b16 %v681
        %v705 = vunpack.c.l.b16 %v682
        %v706 = vunpack.c.h.b16 %v682
        %v707 = vpack.c.b16 %v693, %v691
        %v708 = vpack.c.b16 %v694, %v692
        %v709 = vpack.c.b16 %v697, %v695
        %v710 = vpack.c.b16 %v698, %v696
        %v711 = vpack.c.b16 %v701, %v699
        %v712 = vpack.c.b16 %v702, %v700
        %v713 = vpack.c.b16 %v705, %v703
        %v714 = vpack.c.b16 %v706, %v704
        %723 = vmatpush.bf16.msra.mxu0 %v571
        %724 = vmatpush.bf16.msra.mxu0 %v570
        %725 = vmatpush.bf16.msra.mxu0 %v569
        %726 = vmatpush.bf16.msra.mxu0 %v568
        %727 = vmatpush.bf16.msra.mxu0 %v567
        %728 = vmatpush.bf16.msra.mxu0 %v566
        %729 = vmatpush.bf16.msra.mxu0 %v565
        %730 = vmatpush.bf16.msra.mxu0 %v564
        %731 = vmatmul.bf16.gmra.mxu0 %v707
        %v732 = vpop.f32.mrf.mxu0
        %v733 = vadd.f32 0.0, %v732
        %v734 = vpop.f32.mrf.mxu0
        %v735 = vadd.f32 0.0, %v734
        %736 = vmatmul.bf16.gmra.mxu0 %v709
        %v737 = vpop.f32.mrf.mxu0
        %v738 = vadd.f32 0.0, %v737
        %v739 = vpop.f32.mrf.mxu0
        %v740 = vadd.f32 0.0, %v739
        %741 = vmatmul.bf16.gmra.mxu0 %v711
        %v742 = vpop.f32.mrf.mxu0
        %v743 = vadd.f32 0.0, %v742
        %v744 = vpop.f32.mrf.mxu0
        %v745 = vadd.f32 0.0, %v744
        %746 = vmatmul.bf16.gmra.mxu0 %v713
        %v747 = vpop.f32.mrf.mxu0
        %v748 = vadd.f32 0.0, %v747
        %v749 = vpop.f32.mrf.mxu0
        %v750 = vadd.f32 0.0, %v749
        %751 = vdwg.mxu0
        %752 = vmatpush.bf16.msra.mxu0 %v579
        %753 = vmatpush.bf16.msra.mxu0 %v578
        %754 = vmatpush.bf16.msra.mxu0 %v577
        %755 = vmatpush.bf16.msra.mxu0 %v576
        %756 = vmatpush.bf16.msra.mxu0 %v575
        %757 = vmatpush.bf16.msra.mxu0 %v574
        %758 = vmatpush.bf16.msra.mxu0 %v573
        %759 = vmatpush.bf16.msra.mxu0 %v572
        %760 = vmatmul.bf16.gmra.mxu0 %v708
        %v761 = vpop.f32.mrf.mxu0
        %v762 = vadd.f32 %v733, %v761
        %v763 = vpop.f32.mrf.mxu0
        %v764 = vadd.f32 %v735, %v763
        %765 = vmatmul.bf16.gmra.mxu0 %v710
        %v766 = vpop.f32.mrf.mxu0
        %v767 = vadd.f32 %v738, %v766
        %v768 = vpop.f32.mrf.mxu0
        %v769 = vadd.f32 %v740, %v768
        %770 = vmatmul.bf16.gmra.mxu0 %v712
        %v771 = vpop.f32.mrf.mxu0
        %v772 = vadd.f32 %v743, %v771
        %v773 = vpop.f32.mrf.mxu0
        %v774 = vadd.f32 %v745, %v773
        %775 = vmatmul.bf16.gmra.mxu0 %v714
        %v776 = vpop.f32.mrf.mxu0
        %v777 = vadd.f32 %v748, %v776
        %v778 = vpop.f32.mrf.mxu0
        %v779 = vadd.f32 %v750, %v778
        %780 = vdwg.mxu0
        %v781 = vpack.c.bf16 %v764, %v762
        %v782 = vpack.c.bf16 %v769, %v767
        %v783 = vpack.c.bf16 %v774, %v772
        %v784 = vpack.c.bf16 %v779, %v777
        %s785 = scalar_lea.vmem [#allocation2], 64
        %v786 = vld [vmem:[%s785] sm:$0xf]
        %v787 = vld [vmem:[%s785 + $0x4] sm:$0xf]
        %v788 = vld [vmem:[%s785 + $0x8] sm:$0xf]
        %v789 = vld [vmem:[%s785 + $0xc] sm:$0xf]
        %v790 = vld [vmem:[%s785 + $0x10] sm:$0xf]
        %v791 = vld [vmem:[%s785 + $0x14] sm:$0xf]
        %v792 = vld [vmem:[%s785 + $0x18] sm:$0xf]
        %v793 = vld [vmem:[%s785 + $0x1c] sm:$0xf]
        %v794 = vld [vmem:[%s785 + $0x20] sm:$0xf]
        %v795 = vld [vmem:[%s785 + $0x24] sm:$0xf]
        %v796 = vld [vmem:[%s785 + $0x28] sm:$0xf]
        %v797 = vld [vmem:[%s785 + $0x2c] sm:$0xf]
        %v798 = vld [vmem:[%s785 + $0x30] sm:$0xf]
        %v799 = vld [vmem:[%s785 + $0x34] sm:$0xf]
        %v800 = vld [vmem:[%s785 + $0x38] sm:$0xf]
        %v801 = vld [vmem:[%s785 + $0x3c] sm:$0xf]
        %v818 = vunpack.c.l.b16 %v786
        %v819 = vunpack.c.l.b16 %v787
        %v820 = vunpack.c.l.b16 %v788
        %v821 = vunpack.c.l.b16 %v789
        %v822 = vunpack.c.l.b16 %v790
        %v823 = vunpack.c.l.b16 %v791
        %v824 = vunpack.c.l.b16 %v792
        %v825 = vunpack.c.l.b16 %v793
        %v826 = vunpack.c.l.b16 %v794
        %v827 = vunpack.c.l.b16 %v795
        %v828 = vunpack.c.l.b16 %v796
        %v829 = vunpack.c.l.b16 %v797
        %v830 = vunpack.c.l.b16 %v798
        %v831 = vunpack.c.l.b16 %v799
        %v832 = vunpack.c.l.b16 %v800
        %v833 = vunpack.c.l.b16 %v801
        %v834 = vpack.c.b16 %v819, %v818
        %v835 = vpack.c.b16 %v821, %v820
        %v836 = vpack.c.b16 %v823, %v822
        %v837 = vpack.c.b16 %v825, %v824
        %v838 = vpack.c.b16 %v827, %v826
        %v839 = vpack.c.b16 %v829, %v828
        %v840 = vpack.c.b16 %v831, %v830
        %v841 = vpack.c.b16 %v833, %v832
        %850 = vmatpush.bf16.msra.mxu0 %v841
        %851 = vmatpush.bf16.msra.mxu0 %v840
        %852 = vmatpush.bf16.msra.mxu0 %v839
        %853 = vmatpush.bf16.msra.mxu0 %v838
        %854 = vmatpush.bf16.msra.mxu0 %v837
        %855 = vmatpush.bf16.msra.mxu0 %v836
        %856 = vmatpush.bf16.msra.mxu0 %v835
        %857 = vmatpush.bf16.msra.mxu0 %v834
        %858 = vmatmul.bf16.gmra.mxu0 %v781
        %v859 = vpop.f32.mrf.mxu0
        %v860 = vadd.f32 0.0, %v859
        %v861 = vpop.f32.mrf.mxu0
        %v862 = vadd.f32 0.0, %v861
        %863 = vmatmul.bf16.gmra.mxu0 %v782
        %v864 = vpop.f32.mrf.mxu0
        %v865 = vadd.f32 0.0, %v864
        %v866 = vpop.f32.mrf.mxu0
        %v867 = vadd.f32 0.0, %v866
        %868 = vmatmul.bf16.gmra.mxu0 %v783
        %v869 = vpop.f32.mrf.mxu0
        %v870 = vadd.f32 0.0, %v869
        %v871 = vpop.f32.mrf.mxu0
        %v872 = vadd.f32 0.0, %v871
        %873 = vmatmul.bf16.gmra.mxu0 %v784
        %v874 = vpop.f32.mrf.mxu0
        %v875 = vadd.f32 0.0, %v874
        %v876 = vpop.f32.mrf.mxu0
        %v877 = vadd.f32 0.0, %v876
        %878 = vdwg.mxu0
        %v895 = vunpack.c.l.b16 %v658
        %v896 = vunpack.c.l.b16 %v659
        %v897 = vunpack.c.l.b16 %v660
        %v898 = vunpack.c.l.b16 %v661
        %v899 = vunpack.c.l.b16 %v662
        %v900 = vunpack.c.l.b16 %v663
        %v901 = vunpack.c.l.b16 %v664
        %v902 = vunpack.c.l.b16 %v665
        %v903 = vunpack.c.l.b16 %v666
        %v904 = vunpack.c.l.b16 %v667
        %v905 = vunpack.c.l.b16 %v668
        %v906 = vunpack.c.l.b16 %v669
        %v907 = vunpack.c.l.b16 %v670
        %v908 = vunpack.c.l.b16 %v671
        %v909 = vunpack.c.l.b16 %v672
        %v910 = vunpack.c.l.b16 %v673
        %v911 = vpack.c.b16 %v896, %v895
        %v912 = vpack.c.b16 %v898, %v897
        %v913 = vpack.c.b16 %v900, %v899
        %v914 = vpack.c.b16 %v902, %v901
        %v915 = vpack.c.b16 %v904, %v903
        %v916 = vpack.c.b16 %v906, %v905
        %v917 = vpack.c.b16 %v908, %v907
        %v918 = vpack.c.b16 %v910, %v909
        %927 = vmatpush.bf16.msra.mxu0 %v918
        %928 = vmatpush.bf16.msra.mxu0 %v917
        %929 = vmatpush.bf16.msra.mxu0 %v916
        %930 = vmatpush.bf16.msra.mxu0 %v915
        %931 = vmatpush.bf16.msra.mxu0 %v914
        %932 = vmatpush.bf16.msra.mxu0 %v913
        %933 = vmatpush.bf16.msra.mxu0 %v912
        %934 = vmatpush.bf16.msra.mxu0 %v911
        %935 = vmatmul.bf16.gmra.mxu0 %v654
        %v936 = vpop.f32.mrf.mxu0
        %v937 = vadd.f32 %v860, %v936
        %v938 = vpop.f32.mrf.mxu0
        %v939 = vadd.f32 %v862, %v938
        %940 = vmatmul.bf16.gmra.mxu0 %v655
        %v941 = vpop.f32.mrf.mxu0
        %v942 = vadd.f32 %v865, %v941
        %v943 = vpop.f32.mrf.mxu0
        %v944 = vadd.f32 %v867, %v943
        %945 = vmatmul.bf16.gmra.mxu0 %v656
        %v946 = vpop.f32.mrf.mxu0
        %v947 = vadd.f32 %v870, %v946
        %v948 = vpop.f32.mrf.mxu0
        %v949 = vadd.f32 %v872, %v948
        %950 = vmatmul.bf16.gmra.mxu0 %v657
        %v951 = vpop.f32.mrf.mxu0
        %v952 = vadd.f32 %v875, %v951
        %v953 = vpop.f32.mrf.mxu0
        %v954 = vadd.f32 %v877, %v953
        %955 = vdwg.mxu0
        %s956 = scalar_lea.vmem %s1, 128
        %v957 = vld [vmem:[%s956] sm:$0xff]
        %v958 = vld [vmem:[%s956 + $0x8] sm:$0xff]
        %v959 = vld [vmem:[%s956 + $0x10] sm:$0xff]
        %v960 = vld [vmem:[%s956 + $0x18] sm:$0xff]
        %v961 = vld [vmem:[%s956 + $0x20] sm:$0xff]
        %v962 = vld [vmem:[%s956 + $0x28] sm:$0xff]
        %v963 = vld [vmem:[%s956 + $0x30] sm:$0xff]
        %v964 = vld [vmem:[%s956 + $0x38] sm:$0xff]
        %v973 = vunpack.c.l.b16 %v957
        %v974 = vunpack.c.h.b16 %v957
        %v975 = vunpack.c.l.b16 %v958
        %v976 = vunpack.c.h.b16 %v958
        %v977 = vunpack.c.l.b16 %v959
        %v978 = vunpack.c.h.b16 %v959
        %v979 = vunpack.c.l.b16 %v960
        %v980 = vunpack.c.h.b16 %v960
        %v981 = vunpack.c.l.b16 %v961
        %v982 = vunpack.c.h.b16 %v961
        %v983 = vunpack.c.l.b16 %v962
        %v984 = vunpack.c.h.b16 %v962
        %v985 = vunpack.c.l.b16 %v963
        %v986 = vunpack.c.h.b16 %v963
        %v987 = vunpack.c.l.b16 %v964
        %v988 = vunpack.c.h.b16 %v964
        %v989 = vpack.c.b16 %v975, %v973
        %v990 = vpack.c.b16 %v976, %v974
        %v991 = vpack.c.b16 %v979, %v977
        %v992 = vpack.c.b16 %v980, %v978
        %v993 = vpack.c.b16 %v983, %v981
        %v994 = vpack.c.b16 %v984, %v982
        %v995 = vpack.c.b16 %v987, %v985
        %v996 = vpack.c.b16 %v988, %v986
        %1005 = vmatpush.bf16.msra.mxu0 %v571
        %1006 = vmatpush.bf16.msra.mxu0 %v570
        %1007 = vmatpush.bf16.msra.mxu0 %v569
        %1008 = vmatpush.bf16.msra.mxu0 %v568
        %1009 = vmatpush.bf16.msra.mxu0 %v567
        %1010 = vmatpush.bf16.msra.mxu0 %v566
        %1011 = vmatpush.bf16.msra.mxu0 %v565
        %1012 = vmatpush.bf16.msra.mxu0 %v564
        %1013 = vmatmul.bf16.gmra.mxu0 %v989
        %v1014 = vpop.f32.mrf.mxu0
        %v1015 = vadd.f32 0.0, %v1014
        %v1016 = vpop.f32.mrf.mxu0
        %v1017 = vadd.f32 0.0, %v1016
        %1018 = vmatmul.bf16.gmra.mxu0 %v991
        %v1019 = vpop.f32.mrf.mxu0
        %v1020 = vadd.f32 0.0, %v1019
        %v1021 = vpop.f32.mrf.mxu0
        %v1022 = vadd.f32 0.0, %v1021
        %1023 = vmatmul.bf16.gmra.mxu0 %v993
        %v1024 = vpop.f32.mrf.mxu0
        %v1025 = vadd.f32 0.0, %v1024
        %v1026 = vpop.f32.mrf.mxu0
        %v1027 = vadd.f32 0.0, %v1026
        %1028 = vmatmul.bf16.gmra.mxu0 %v995
        %v1029 = vpop.f32.mrf.mxu0
        %v1030 = vadd.f32 0.0, %v1029
        %v1031 = vpop.f32.mrf.mxu0
        %v1032 = vadd.f32 0.0, %v1031
        %1033 = vdwg.mxu0
        %1034 = vmatpush.bf16.msra.mxu0 %v579
        %1035 = vmatpush.bf16.msra.mxu0 %v578
        %1036 = vmatpush.bf16.msra.mxu0 %v577
        %1037 = vmatpush.bf16.msra.mxu0 %v576
        %1038 = vmatpush.bf16.msra.mxu0 %v575
        %1039 = vmatpush.bf16.msra.mxu0 %v574
        %1040 = vmatpush.bf16.msra.mxu0 %v573
        %1041 = vmatpush.bf16.msra.mxu0 %v572
        %1042 = vmatmul.bf16.gmra.mxu0 %v990
        %v1043 = vpop.f32.mrf.mxu0
        %v1044 = vadd.f32 %v1015, %v1043
        %v1045 = vpop.f32.mrf.mxu0
        %v1046 = vadd.f32 %v1017, %v1045
        %1047 = vmatmul.bf16.gmra.mxu0 %v992
        %v1048 = vpop.f32.mrf.mxu0
        %v1049 = vadd.f32 %v1020, %v1048
        %v1050 = vpop.f32.mrf.mxu0
        %v1051 = vadd.f32 %v1022, %v1050
        %1052 = vmatmul.bf16.gmra.mxu0 %v994
        %v1053 = vpop.f32.mrf.mxu0
        %v1054 = vadd.f32 %v1025, %v1053
        %v1055 = vpop.f32.mrf.mxu0
        %v1056 = vadd.f32 %v1027, %v1055
        %1057 = vmatmul.bf16.gmra.mxu0 %v996
        %v1058 = vpop.f32.mrf.mxu0
        %v1059 = vadd.f32 %v1030, %v1058
        %v1060 = vpop.f32.mrf.mxu0
        %v1061 = vadd.f32 %v1032, %v1060
        %1062 = vdwg.mxu0
        %v1063 = vpack.c.bf16 %v1046, %v1044
        %v1064 = vpack.c.bf16 %v1051, %v1049
        %v1065 = vpack.c.bf16 %v1056, %v1054
        %v1066 = vpack.c.bf16 %v1061, %v1059
        %s1067 = scalar_lea.vmem [#allocation2], 128
        %v1068 = vld [vmem:[%s1067] sm:$0xf]
        %v1069 = vld [vmem:[%s1067 + $0x4] sm:$0xf]
        %v1070 = vld [vmem:[%s1067 + $0x8] sm:$0xf]
        %v1071 = vld [vmem:[%s1067 + $0xc] sm:$0xf]
        %v1072 = vld [vmem:[%s1067 + $0x10] sm:$0xf]
        %v1073 = vld [vmem:[%s1067 + $0x14] sm:$0xf]
        %v1074 = vld [vmem:[%s1067 + $0x18] sm:$0xf]
        %v1075 = vld [vmem:[%s1067 + $0x1c] sm:$0xf]
        %v1076 = vld [vmem:[%s1067 + $0x20] sm:$0xf]
        %v1077 = vld [vmem:[%s1067 + $0x24] sm:$0xf]
        %v1078 = vld [vmem:[%s1067 + $0x28] sm:$0xf]
        %v1079 = vld [vmem:[%s1067 + $0x2c] sm:$0xf]
        %v1080 = vld [vmem:[%s1067 + $0x30] sm:$0xf]
        %v1081 = vld [vmem:[%s1067 + $0x34] sm:$0xf]
        %v1082 = vld [vmem:[%s1067 + $0x38] sm:$0xf]
        %v1083 = vld [vmem:[%s1067 + $0x3c] sm:$0xf]
        %v1100 = vunpack.c.l.b16 %v1068
        %v1101 = vunpack.c.l.b16 %v1069
        %v1102 = vunpack.c.l.b16 %v1070
        %v1103 = vunpack.c.l.b16 %v1071
        %v1104 = vunpack.c.l.b16 %v1072
        %v1105 = vunpack.c.l.b16 %v1073
        %v1106 = vunpack.c.l.b16 %v1074
        %v1107 = vunpack.c.l.b16 %v1075
        %v1108 = vunpack.c.l.b16 %v1076
        %v1109 = vunpack.c.l.b16 %v1077
        %v1110 = vunpack.c.l.b16 %v1078
        %v1111 = vunpack.c.l.b16 %v1079
        %v1112 = vunpack.c.l.b16 %v1080
        %v1113 = vunpack.c.l.b16 %v1081
        %v1114 = vunpack.c.l.b16 %v1082
        %v1115 = vunpack.c.l.b16 %v1083
        %v1116 = vpack.c.b16 %v1101, %v1100
        %v1117 = vpack.c.b16 %v1103, %v1102
        %v1118 = vpack.c.b16 %v1105, %v1104
        %v1119 = vpack.c.b16 %v1107, %v1106
        %v1120 = vpack.c.b16 %v1109, %v1108
        %v1121 = vpack.c.b16 %v1111, %v1110
        %v1122 = vpack.c.b16 %v1113, %v1112
        %v1123 = vpack.c.b16 %v1115, %v1114
        %1132 = vmatpush.bf16.msra.mxu0 %v1123
        %1133 = vmatpush.bf16.msra.mxu0 %v1122
        %1134 = vmatpush.bf16.msra.mxu0 %v1121
        %1135 = vmatpush.bf16.msra.mxu0 %v1120
        %1136 = vmatpush.bf16.msra.mxu0 %v1119
        %1137 = vmatpush.bf16.msra.mxu0 %v1118
        %1138 = vmatpush.bf16.msra.mxu0 %v1117
        %1139 = vmatpush.bf16.msra.mxu0 %v1116
        %1140 = vmatmul.bf16.gmra.mxu0 %v1063
        %v1141 = vpop.f32.mrf.mxu0
        %v1142 = vadd.f32 0.0, %v1141
        %v1143 = vpop.f32.mrf.mxu0
        %v1144 = vadd.f32 0.0, %v1143
        %1145 = vmatmul.bf16.gmra.mxu0 %v1064
        %v1146 = vpop.f32.mrf.mxu0
        %v1147 = vadd.f32 0.0, %v1146
        %v1148 = vpop.f32.mrf.mxu0
        %v1149 = vadd.f32 0.0, %v1148
        %1150 = vmatmul.bf16.gmra.mxu0 %v1065
        %v1151 = vpop.f32.mrf.mxu0
        %v1152 = vadd.f32 0.0, %v1151
        %v1153 = vpop.f32.mrf.mxu0
        %v1154 = vadd.f32 0.0, %v1153
        %1155 = vmatmul.bf16.gmra.mxu0 %v1066
        %v1156 = vpop.f32.mrf.mxu0
        %v1157 = vadd.f32 0.0, %v1156
        %v1158 = vpop.f32.mrf.mxu0
        %v1159 = vadd.f32 0.0, %v1158
        %1160 = vdwg.mxu0
        %v1161 = vadd.f32 %v937, %v1142
        %v1162 = vadd.f32 %v939, %v1144
        %v1163 = vadd.f32 %v942, %v1147
        %v1164 = vadd.f32 %v944, %v1149
        %v1165 = vadd.f32 %v947, %v1152
        %v1166 = vadd.f32 %v949, %v1154
        %v1167 = vadd.f32 %v952, %v1157
        %v1168 = vadd.f32 %v954, %v1159
        %s1169 = scalar_lea.vmem %s1, 192
        %v1170 = vld [vmem:[%s1169] sm:$0xff]
        %v1171 = vld [vmem:[%s1169 + $0x8] sm:$0xff]
        %v1172 = vld [vmem:[%s1169 + $0x10] sm:$0xff]
        %v1173 = vld [vmem:[%s1169 + $0x18] sm:$0xff]
        %v1174 = vld [vmem:[%s1169 + $0x20] sm:$0xff]
        %v1175 = vld [vmem:[%s1169 + $0x28] sm:$0xff]
        %v1176 = vld [vmem:[%s1169 + $0x30] sm:$0xff]
        %v1177 = vld [vmem:[%s1169 + $0x38] sm:$0xff]
        %v1186 = vunpack.c.l.b16 %v1170
        %v1187 = vunpack.c.h.b16 %v1170
        %v1188 = vunpack.c.l.b16 %v1171
        %v1189 = vunpack.c.h.b16 %v1171
        %v1190 = vunpack.c.l.b16 %v1172
        %v1191 = vunpack.c.h.b16 %v1172
        %v1192 = vunpack.c.l.b16 %v1173
        %v1193 = vunpack.c.h.b16 %v1173
        %v1194 = vunpack.c.l.b16 %v1174
        %v1195 = vunpack.c.h.b16 %v1174
        %v1196 = vunpack.c.l.b16 %v1175
        %v1197 = vunpack.c.h.b16 %v1175
        %v1198 = vunpack.c.l.b16 %v1176
        %v1199 = vunpack.c.h.b16 %v1176
        %v1200 = vunpack.c.l.b16 %v1177
        %v1201 = vunpack.c.h.b16 %v1177
        %v1202 = vpack.c.b16 %v1188, %v1186
        %v1203 = vpack.c.b16 %v1189, %v1187
        %v1204 = vpack.c.b16 %v1192, %v1190
        %v1205 = vpack.c.b16 %v1193, %v1191
        %v1206 = vpack.c.b16 %v1196, %v1194
        %v1207 = vpack.c.b16 %v1197, %v1195
        %v1208 = vpack.c.b16 %v1200, %v1198
        %v1209 = vpack.c.b16 %v1201, %v1199
        %1218 = vmatpush.bf16.msra.mxu0 %v571
        %1219 = vmatpush.bf16.msra.mxu0 %v570
        %1220 = vmatpush.bf16.msra.mxu0 %v569
        %1221 = vmatpush.bf16.msra.mxu0 %v568
        %1222 = vmatpush.bf16.msra.mxu0 %v567
        %1223 = vmatpush.bf16.msra.mxu0 %v566
        %1224 = vmatpush.bf16.msra.mxu0 %v565
        %1225 = vmatpush.bf16.msra.mxu0 %v564
        %1226 = vmatmul.bf16.gmra.mxu0 %v1202
        %v1227 = vpop.f32.mrf.mxu0
        %v1228 = vadd.f32 0.0, %v1227
        %v1229 = vpop.f32.mrf.mxu0
        %v1230 = vadd.f32 0.0, %v1229
        %1231 = vmatmul.bf16.gmra.mxu0 %v1204
        %v1232 = vpop.f32.mrf.mxu0
        %v1233 = vadd.f32 0.0, %v1232
        %v1234 = vpop.f32.mrf.mxu0
        %v1235 = vadd.f32 0.0, %v1234
        %1236 = vmatmul.bf16.gmra.mxu0 %v1206
        %v1237 = vpop.f32.mrf.mxu0
        %v1238 = vadd.f32 0.0, %v1237
        %v1239 = vpop.f32.mrf.mxu0
        %v1240 = vadd.f32 0.0, %v1239
        %1241 = vmatmul.bf16.gmra.mxu0 %v1208
        %v1242 = vpop.f32.mrf.mxu0
        %v1243 = vadd.f32 0.0, %v1242
        %v1244 = vpop.f32.mrf.mxu0
        %v1245 = vadd.f32 0.0, %v1244
        %1246 = vdwg.mxu0
        %1247 = vmatpush.bf16.msra.mxu0 %v579
        %1248 = vmatpush.bf16.msra.mxu0 %v578
        %1249 = vmatpush.bf16.msra.mxu0 %v577
        %1250 = vmatpush.bf16.msra.mxu0 %v576
        %1251 = vmatpush.bf16.msra.mxu0 %v575
        %1252 = vmatpush.bf16.msra.mxu0 %v574
        %1253 = vmatpush.bf16.msra.mxu0 %v573
        %1254 = vmatpush.bf16.msra.mxu0 %v572
        %1255 = vmatmul.bf16.gmra.mxu0 %v1203
        %v1256 = vpop.f32.mrf.mxu0
        %v1257 = vadd.f32 %v1228, %v1256
        %v1258 = vpop.f32.mrf.mxu0
        %v1259 = vadd.f32 %v1230, %v1258
        %1260 = vmatmul.bf16.gmra.mxu0 %v1205
        %v1261 = vpop.f32.mrf.mxu0
        %v1262 = vadd.f32 %v1233, %v1261
        %v1263 = vpop.f32.mrf.mxu0
        %v1264 = vadd.f32 %v1235, %v1263
        %1265 = vmatmul.bf16.gmra.mxu0 %v1207
        %v1266 = vpop.f32.mrf.mxu0
        %v1267 = vadd.f32 %v1238, %v1266
        %v1268 = vpop.f32.mrf.mxu0
        %v1269 = vadd.f32 %v1240, %v1268
        %1270 = vmatmul.bf16.gmra.mxu0 %v1209
        %v1271 = vpop.f32.mrf.mxu0
        %v1272 = vadd.f32 %v1243, %v1271
        %v1273 = vpop.f32.mrf.mxu0
        %v1274 = vadd.f32 %v1245, %v1273
        %1275 = vdwg.mxu0
        %v1276 = vpack.c.bf16 %v1259, %v1257
        %v1277 = vpack.c.bf16 %v1264, %v1262
        %v1278 = vpack.c.bf16 %v1269, %v1267
        %v1279 = vpack.c.bf16 %v1274, %v1272
        %s1280 = scalar_lea.vmem [#allocation2], 192
        %v1281 = vld [vmem:[%s1280] sm:$0xf]
        %v1282 = vld [vmem:[%s1280 + $0x4] sm:$0xf]
        %v1283 = vld [vmem:[%s1280 + $0x8] sm:$0xf]
        %v1284 = vld [vmem:[%s1280 + $0xc] sm:$0xf]
        %v1285 = vld [vmem:[%s1280 + $0x10] sm:$0xf]
        %v1286 = vld [vmem:[%s1280 + $0x14] sm:$0xf]
        %v1287 = vld [vmem:[%s1280 + $0x18] sm:$0xf]
        %v1288 = vld [vmem:[%s1280 + $0x1c] sm:$0xf]
        %v1289 = vld [vmem:[%s1280 + $0x20] sm:$0xf]
        %v1290 = vld [vmem:[%s1280 + $0x24] sm:$0xf]
        %v1291 = vld [vmem:[%s1280 + $0x28] sm:$0xf]
        %v1292 = vld [vmem:[%s1280 + $0x2c] sm:$0xf]
        %v1293 = vld [vmem:[%s1280 + $0x30] sm:$0xf]
        %v1294 = vld [vmem:[%s1280 + $0x34] sm:$0xf]
        %v1295 = vld [vmem:[%s1280 + $0x38] sm:$0xf]
        %v1296 = vld [vmem:[%s1280 + $0x3c] sm:$0xf]
        %v1313 = vunpack.c.l.b16 %v1281
        %v1314 = vunpack.c.l.b16 %v1282
        %v1315 = vunpack.c.l.b16 %v1283
        %v1316 = vunpack.c.l.b16 %v1284
        %v1317 = vunpack.c.l.b16 %v1285
        %v1318 = vunpack.c.l.b16 %v1286
        %v1319 = vunpack.c.l.b16 %v1287
        %v1320 = vunpack.c.l.b16 %v1288
        %v1321 = vunpack.c.l.b16 %v1289
        %v1322 = vunpack.c.l.b16 %v1290
        %v1323 = vunpack.c.l.b16 %v1291
        %v1324 = vunpack.c.l.b16 %v1292
        %v1325 = vunpack.c.l.b16 %v1293
        %v1326 = vunpack.c.l.b16 %v1294
        %v1327 = vunpack.c.l.b16 %v1295
        %v1328 = vunpack.c.l.b16 %v1296
        %v1329 = vpack.c.b16 %v1314, %v1313
        %v1330 = vpack.c.b16 %v1316, %v1315
        %v1331 = vpack.c.b16 %v1318, %v1317
        %v1332 = vpack.c.b16 %v1320, %v1319
        %v1333 = vpack.c.b16 %v1322, %v1321
        %v1334 = vpack.c.b16 %v1324, %v1323
        %v1335 = vpack.c.b16 %v1326, %v1325
        %v1336 = vpack.c.b16 %v1328, %v1327
        %1345 = vmatpush.bf16.msra.mxu0 %v1336
        %1346 = vmatpush.bf16.msra.mxu0 %v1335
        %1347 = vmatpush.bf16.msra.mxu0 %v1334
        %1348 = vmatpush.bf16.msra.mxu0 %v1333
        %1349 = vmatpush.bf16.msra.mxu0 %v1332
        %1350 = vmatpush.bf16.msra.mxu0 %v1331
        %1351 = vmatpush.bf16.msra.mxu0 %v1330
        %1352 = vmatpush.bf16.msra.mxu0 %v1329
        %1353 = vmatmul.bf16.gmra.mxu0 %v1276
        %v1354 = vpop.f32.mrf.mxu0
        %v1355 = vadd.f32 0.0, %v1354
        %v1356 = vpop.f32.mrf.mxu0
        %v1357 = vadd.f32 0.0, %v1356
        %1358 = vmatmul.bf16.gmra.mxu0 %v1277
        %v1359 = vpop.f32.mrf.mxu0
        %v1360 = vadd.f32 0.0, %v1359
        %v1361 = vpop.f32.mrf.mxu0
        %v1362 = vadd.f32 0.0, %v1361
        %1363 = vmatmul.bf16.gmra.mxu0 %v1278
        %v1364 = vpop.f32.mrf.mxu0
        %v1365 = vadd.f32 0.0, %v1364
        %v1366 = vpop.f32.mrf.mxu0
        %v1367 = vadd.f32 0.0, %v1366
        %1368 = vmatmul.bf16.gmra.mxu0 %v1279
        %v1369 = vpop.f32.mrf.mxu0
        %v1370 = vadd.f32 0.0, %v1369
        %v1371 = vpop.f32.mrf.mxu0
        %v1372 = vadd.f32 0.0, %v1371
        %1373 = vdwg.mxu0
        %v1374 = vadd.f32 %v1161, %v1355
        %v1375 = vadd.f32 %v1162, %v1357
        %v1376 = vadd.f32 %v1163, %v1360
        %v1377 = vadd.f32 %v1164, %v1362
        %v1378 = vadd.f32 %v1165, %v1365
        %v1379 = vadd.f32 %v1166, %v1367
        %v1380 = vadd.f32 %v1167, %v1370
        %v1381 = vadd.f32 %v1168, %v1372
        %s1382 = scalar_lea.vmem %s1, 256
        %v1383 = vld [vmem:[%s1382] sm:$0xff]
        %v1384 = vld [vmem:[%s1382 + $0x8] sm:$0xff]
        %v1385 = vld [vmem:[%s1382 + $0x10] sm:$0xff]
        %v1386 = vld [vmem:[%s1382 + $0x18] sm:$0xff]
        %v1387 = vld [vmem:[%s1382 + $0x20] sm:$0xff]
        %v1388 = vld [vmem:[%s1382 + $0x28] sm:$0xff]
        %v1389 = vld [vmem:[%s1382 + $0x30] sm:$0xff]
        %v1390 = vld [vmem:[%s1382 + $0x38] sm:$0xff]
        %v1399 = vunpack.c.l.b16 %v1383
        %v1400 = vunpack.c.h.b16 %v1383
        %v1401 = vunpack.c.l.b16 %v1384
        %v1402 = vunpack.c.h.b16 %v1384
        %v1403 = vunpack.c.l.b16 %v1385
        %v1404 = vunpack.c.h.b16 %v1385
        %v1405 = vunpack.c.l.b16 %v1386
        %v1406 = vunpack.c.h.b16 %v1386
        %v1407 = vunpack.c.l.b16 %v1387
        %v1408 = vunpack.c.h.b16 %v1387
        %v1409 = vunpack.c.l.b16 %v1388
        %v1410 = vunpack.c.h.b16 %v1388
        %v1411 = vunpack.c.l.b16 %v1389
        %v1412 = vunpack.c.h.b16 %v1389
        %v1413 = vunpack.c.l.b16 %v1390
        %v1414 = vunpack.c.h.b16 %v1390
        %v1415 = vpack.c.b16 %v1401, %v1399
        %v1416 = vpack.c.b16 %v1402, %v1400
        %v1417 = vpack.c.b16 %v1405, %v1403
        %v1418 = vpack.c.b16 %v1406, %v1404
        %v1419 = vpack.c.b16 %v1409, %v1407
        %v1420 = vpack.c.b16 %v1410, %v1408
        %v1421 = vpack.c.b16 %v1413, %v1411
        %v1422 = vpack.c.b16 %v1414, %v1412
        %1431 = vmatpush.bf16.msra.mxu0 %v571
        %1432 = vmatpush.bf16.msra.mxu0 %v570
        %1433 = vmatpush.bf16.msra.mxu0 %v569
        %1434 = vmatpush.bf16.msra.mxu0 %v568
        %1435 = vmatpush.bf16.msra.mxu0 %v567
        %1436 = vmatpush.bf16.msra.mxu0 %v566
        %1437 = vmatpush.bf16.msra.mxu0 %v565
        %1438 = vmatpush.bf16.msra.mxu0 %v564
        %1439 = vmatmul.bf16.gmra.mxu0 %v1415
        %v1440 = vpop.f32.mrf.mxu0
        %v1441 = vadd.f32 0.0, %v1440
        %v1442 = vpop.f32.mrf.mxu0
        %v1443 = vadd.f32 0.0, %v1442
        %1444 = vmatmul.bf16.gmra.mxu0 %v1417
        %v1445 = vpop.f32.mrf.mxu0
        %v1446 = vadd.f32 0.0, %v1445
        %v1447 = vpop.f32.mrf.mxu0
        %v1448 = vadd.f32 0.0, %v1447
        %1449 = vmatmul.bf16.gmra.mxu0 %v1419
        %v1450 = vpop.f32.mrf.mxu0
        %v1451 = vadd.f32 0.0, %v1450
        %v1452 = vpop.f32.mrf.mxu0
        %v1453 = vadd.f32 0.0, %v1452
        %1454 = vmatmul.bf16.gmra.mxu0 %v1421
        %v1455 = vpop.f32.mrf.mxu0
        %v1456 = vadd.f32 0.0, %v1455
        %v1457 = vpop.f32.mrf.mxu0
        %v1458 = vadd.f32 0.0, %v1457
        %1459 = vdwg.mxu0
        %1460 = vmatpush.bf16.msra.mxu0 %v579
        %1461 = vmatpush.bf16.msra.mxu0 %v578
        %1462 = vmatpush.bf16.msra.mxu0 %v577
        %1463 = vmatpush.bf16.msra.mxu0 %v576
        %1464 = vmatpush.bf16.msra.mxu0 %v575
        %1465 = vmatpush.bf16.msra.mxu0 %v574
        %1466 = vmatpush.bf16.msra.mxu0 %v573
        %1467 = vmatpush.bf16.msra.mxu0 %v572
        %1468 = vmatmul.bf16.gmra.mxu0 %v1416
        %v1469 = vpop.f32.mrf.mxu0
        %v1470 = vadd.f32 %v1441, %v1469
        %v1471 = vpop.f32.mrf.mxu0
        %v1472 = vadd.f32 %v1443, %v1471
        %1473 = vmatmul.bf16.gmra.mxu0 %v1418
        %v1474 = vpop.f32.mrf.mxu0
        %v1475 = vadd.f32 %v1446, %v1474
        %v1476 = vpop.f32.mrf.mxu0
        %v1477 = vadd.f32 %v1448, %v1476
        %1478 = vmatmul.bf16.gmra.mxu0 %v1420
        %v1479 = vpop.f32.mrf.mxu0
        %v1480 = vadd.f32 %v1451, %v1479
        %v1481 = vpop.f32.mrf.mxu0
        %v1482 = vadd.f32 %v1453, %v1481
        %1483 = vmatmul.bf16.gmra.mxu0 %v1422
        %v1484 = vpop.f32.mrf.mxu0
        %v1485 = vadd.f32 %v1456, %v1484
        %v1486 = vpop.f32.mrf.mxu0
        %v1487 = vadd.f32 %v1458, %v1486
        %1488 = vdwg.mxu0
        %v1489 = vpack.c.bf16 %v1472, %v1470
        %v1490 = vpack.c.bf16 %v1477, %v1475
        %v1491 = vpack.c.bf16 %v1482, %v1480
        %v1492 = vpack.c.bf16 %v1487, %v1485
        %s1493 = scalar_lea.vmem [#allocation2], 256
        %v1494 = vld [vmem:[%s1493] sm:$0xf]
        %v1495 = vld [vmem:[%s1493 + $0x4] sm:$0xf]
        %v1496 = vld [vmem:[%s1493 + $0x8] sm:$0xf]
        %v1497 = vld [vmem:[%s1493 + $0xc] sm:$0xf]
        %v1498 = vld [vmem:[%s1493 + $0x10] sm:$0xf]
        %v1499 = vld [vmem:[%s1493 + $0x14] sm:$0xf]
        %v1500 = vld [vmem:[%s1493 + $0x18] sm:$0xf]
        %v1501 = vld [vmem:[%s1493 + $0x1c] sm:$0xf]
        %v1502 = vld [vmem:[%s1493 + $0x20] sm:$0xf]
        %v1503 = vld [vmem:[%s1493 + $0x24] sm:$0xf]
        %v1504 = vld [vmem:[%s1493 + $0x28] sm:$0xf]
        %v1505 = vld [vmem:[%s1493 + $0x2c] sm:$0xf]
        %v1506 = vld [vmem:[%s1493 + $0x30] sm:$0xf]
        %v1507 = vld [vmem:[%s1493 + $0x34] sm:$0xf]
        %v1508 = vld [vmem:[%s1493 + $0x38] sm:$0xf]
        %v1509 = vld [vmem:[%s1493 + $0x3c] sm:$0xf]
        %v1526 = vunpack.c.l.b16 %v1494
        %v1527 = vunpack.c.l.b16 %v1495
        %v1528 = vunpack.c.l.b16 %v1496
        %v1529 = vunpack.c.l.b16 %v1497
        %v1530 = vunpack.c.l.b16 %v1498
        %v1531 = vunpack.c.l.b16 %v1499
        %v1532 = vunpack.c.l.b16 %v1500
        %v1533 = vunpack.c.l.b16 %v1501
        %v1534 = vunpack.c.l.b16 %v1502
        %v1535 = vunpack.c.l.b16 %v1503
        %v1536 = vunpack.c.l.b16 %v1504
        %v1537 = vunpack.c.l.b16 %v1505
        %v1538 = vunpack.c.l.b16 %v1506
        %v1539 = vunpack.c.l.b16 %v1507
        %v1540 = vunpack.c.l.b16 %v1508
        %v1541 = vunpack.c.l.b16 %v1509
        %v1542 = vpack.c.b16 %v1527, %v1526
        %v1543 = vpack.c.b16 %v1529, %v1528
        %v1544 = vpack.c.b16 %v1531, %v1530
        %v1545 = vpack.c.b16 %v1533, %v1532
        %v1546 = vpack.c.b16 %v1535, %v1534
        %v1547 = vpack.c.b16 %v1537, %v1536
        %v1548 = vpack.c.b16 %v1539, %v1538
        %v1549 = vpack.c.b16 %v1541, %v1540
        %1558 = vmatpush.bf16.msra.mxu0 %v1549
        %1559 = vmatpush.bf16.msra.mxu0 %v1548
        %1560 = vmatpush.bf16.msra.mxu0 %v1547
        %1561 = vmatpush.bf16.msra.mxu0 %v1546
        %1562 = vmatpush.bf16.msra.mxu0 %v1545
        %1563 = vmatpush.bf16.msra.mxu0 %v1544
        %1564 = vmatpush.bf16.msra.mxu0 %v1543
        %1565 = vmatpush.bf16.msra.mxu0 %v1542
        %1566 = vmatmul.bf16.gmra.mxu0 %v1489
        %v1567 = vpop.f32.mrf.mxu0
        %v1568 = vadd.f32 0.0, %v1567
        %v1569 = vpop.f32.mrf.mxu0
        %v1570 = vadd.f32 0.0, %v1569
        %1571 = vmatmul.bf16.gmra.mxu0 %v1490
        %v1572 = vpop.f32.mrf.mxu0
        %v1573 = vadd.f32 0.0, %v1572
        %v1574 = vpop.f32.mrf.mxu0
        %v1575 = vadd.f32 0.0, %v1574
        %1576 = vmatmul.bf16.gmra.mxu0 %v1491
        %v1577 = vpop.f32.mrf.mxu0
        %v1578 = vadd.f32 0.0, %v1577
        %v1579 = vpop.f32.mrf.mxu0
        %v1580 = vadd.f32 0.0, %v1579
        %1581 = vmatmul.bf16.gmra.mxu0 %v1492
        %v1582 = vpop.f32.mrf.mxu0
        %v1583 = vadd.f32 0.0, %v1582
        %v1584 = vpop.f32.mrf.mxu0
        %v1585 = vadd.f32 0.0, %v1584
        %1586 = vdwg.mxu0
        %v1587 = vadd.f32 %v1374, %v1568
        %v1588 = vadd.f32 %v1375, %v1570
        %v1589 = vadd.f32 %v1376, %v1573
        %v1590 = vadd.f32 %v1377, %v1575
        %v1591 = vadd.f32 %v1378, %v1578
        %v1592 = vadd.f32 %v1379, %v1580
        %v1593 = vadd.f32 %v1380, %v1583
        %v1594 = vadd.f32 %v1381, %v1585
        %s1595 = scalar_lea.vmem %s1, 320
        %v1596 = vld [vmem:[%s1595] sm:$0xff]
        %v1597 = vld [vmem:[%s1595 + $0x8] sm:$0xff]
        %v1598 = vld [vmem:[%s1595 + $0x10] sm:$0xff]
        %v1599 = vld [vmem:[%s1595 + $0x18] sm:$0xff]
        %v1600 = vld [vmem:[%s1595 + $0x20] sm:$0xff]
        %v1601 = vld [vmem:[%s1595 + $0x28] sm:$0xff]
        %v1602 = vld [vmem:[%s1595 + $0x30] sm:$0xff]
        %v1603 = vld [vmem:[%s1595 + $0x38] sm:$0xff]
        %v1612 = vunpack.c.l.b16 %v1596
        %v1613 = vunpack.c.h.b16 %v1596
        %v1614 = vunpack.c.l.b16 %v1597
        %v1615 = vunpack.c.h.b16 %v1597
        %v1616 = vunpack.c.l.b16 %v1598
        %v1617 = vunpack.c.h.b16 %v1598
        %v1618 = vunpack.c.l.b16 %v1599
        %v1619 = vunpack.c.h.b16 %v1599
        %v1620 = vunpack.c.l.b16 %v1600
        %v1621 = vunpack.c.h.b16 %v1600
        %v1622 = vunpack.c.l.b16 %v1601
        %v1623 = vunpack.c.h.b16 %v1601
        %v1624 = vunpack.c.l.b16 %v1602
        %v1625 = vunpack.c.h.b16 %v1602
        %v1626 = vunpack.c.l.b16 %v1603
        %v1627 = vunpack.c.h.b16 %v1603
        %v1628 = vpack.c.b16 %v1614, %v1612
        %v1629 = vpack.c.b16 %v1615, %v1613
        %v1630 = vpack.c.b16 %v1618, %v1616
        %v1631 = vpack.c.b16 %v1619, %v1617
        %v1632 = vpack.c.b16 %v1622, %v1620
        %v1633 = vpack.c.b16 %v1623, %v1621
        %v1634 = vpack.c.b16 %v1626, %v1624
        %v1635 = vpack.c.b16 %v1627, %v1625
        %1644 = vmatpush.bf16.msra.mxu0 %v571
        %1645 = vmatpush.bf16.msra.mxu0 %v570
        %1646 = vmatpush.bf16.msra.mxu0 %v569
        %1647 = vmatpush.bf16.msra.mxu0 %v568
        %1648 = vmatpush.bf16.msra.mxu0 %v567
        %1649 = vmatpush.bf16.msra.mxu0 %v566
        %1650 = vmatpush.bf16.msra.mxu0 %v565
        %1651 = vmatpush.bf16.msra.mxu0 %v564
        %1652 = vmatmul.bf16.gmra.mxu0 %v1628
        %v1653 = vpop.f32.mrf.mxu0
        %v1654 = vadd.f32 0.0, %v1653
        %v1655 = vpop.f32.mrf.mxu0
        %v1656 = vadd.f32 0.0, %v1655
        %1657 = vmatmul.bf16.gmra.mxu0 %v1630
        %v1658 = vpop.f32.mrf.mxu0
        %v1659 = vadd.f32 0.0, %v1658
        %v1660 = vpop.f32.mrf.mxu0
        %v1661 = vadd.f32 0.0, %v1660
        %1662 = vmatmul.bf16.gmra.mxu0 %v1632
        %v1663 = vpop.f32.mrf.mxu0
        %v1664 = vadd.f32 0.0, %v1663
        %v1665 = vpop.f32.mrf.mxu0
        %v1666 = vadd.f32 0.0, %v1665
        %1667 = vmatmul.bf16.gmra.mxu0 %v1634
        %v1668 = vpop.f32.mrf.mxu0
        %v1669 = vadd.f32 0.0, %v1668
        %v1670 = vpop.f32.mrf.mxu0
        %v1671 = vadd.f32 0.0, %v1670
        %1672 = vdwg.mxu0
        %1673 = vmatpush.bf16.msra.mxu0 %v579
        %1674 = vmatpush.bf16.msra.mxu0 %v578
        %1675 = vmatpush.bf16.msra.mxu0 %v577
        %1676 = vmatpush.bf16.msra.mxu0 %v576
        %1677 = vmatpush.bf16.msra.mxu0 %v575
        %1678 = vmatpush.bf16.msra.mxu0 %v574
        %1679 = vmatpush.bf16.msra.mxu0 %v573
        %1680 = vmatpush.bf16.msra.mxu0 %v572
        %1681 = vmatmul.bf16.gmra.mxu0 %v1629
        %v1682 = vpop.f32.mrf.mxu0
        %v1683 = vadd.f32 %v1654, %v1682
        %v1684 = vpop.f32.mrf.mxu0
        %v1685 = vadd.f32 %v1656, %v1684
        %1686 = vmatmul.bf16.gmra.mxu0 %v1631
        %v1687 = vpop.f32.mrf.mxu0
        %v1688 = vadd.f32 %v1659, %v1687
        %v1689 = vpop.f32.mrf.mxu0
        %v1690 = vadd.f32 %v1661, %v1689
        %1691 = vmatmul.bf16.gmra.mxu0 %v1633
        %v1692 = vpop.f32.mrf.mxu0
        %v1693 = vadd.f32 %v1664, %v1692
        %v1694 = vpop.f32.mrf.mxu0
        %v1695 = vadd.f32 %v1666, %v1694
        %1696 = vmatmul.bf16.gmra.mxu0 %v1635
        %v1697 = vpop.f32.mrf.mxu0
        %v1698 = vadd.f32 %v1669, %v1697
        %v1699 = vpop.f32.mrf.mxu0
        %v1700 = vadd.f32 %v1671, %v1699
        %1701 = vdwg.mxu0
        %v1702 = vpack.c.bf16 %v1685, %v1683
        %v1703 = vpack.c.bf16 %v1690, %v1688
        %v1704 = vpack.c.bf16 %v1695, %v1693
        %v1705 = vpack.c.bf16 %v1700, %v1698
        %s1706 = scalar_lea.vmem [#allocation2], 320
        %v1707 = vld [vmem:[%s1706] sm:$0xf]
        %v1708 = vld [vmem:[%s1706 + $0x4] sm:$0xf]
        %v1709 = vld [vmem:[%s1706 + $0x8] sm:$0xf]
        %v1710 = vld [vmem:[%s1706 + $0xc] sm:$0xf]
        %v1711 = vld [vmem:[%s1706 + $0x10] sm:$0xf]
        %v1712 = vld [vmem:[%s1706 + $0x14] sm:$0xf]
        %v1713 = vld [vmem:[%s1706 + $0x18] sm:$0xf]
        %v1714 = vld [vmem:[%s1706 + $0x1c] sm:$0xf]
        %v1715 = vld [vmem:[%s1706 + $0x20] sm:$0xf]
        %v1716 = vld [vmem:[%s1706 + $0x24] sm:$0xf]
        %v1717 = vld [vmem:[%s1706 + $0x28] sm:$0xf]
        %v1718 = vld [vmem:[%s1706 + $0x2c] sm:$0xf]
        %v1719 = vld [vmem:[%s1706 + $0x30] sm:$0xf]
        %v1720 = vld [vmem:[%s1706 + $0x34] sm:$0xf]
        %v1721 = vld [vmem:[%s1706 + $0x38] sm:$0xf]
        %v1722 = vld [vmem:[%s1706 + $0x3c] sm:$0xf]
        %v1739 = vunpack.c.l.b16 %v1707
        %v1740 = vunpack.c.l.b16 %v1708
        %v1741 = vunpack.c.l.b16 %v1709
        %v1742 = vunpack.c.l.b16 %v1710
        %v1743 = vunpack.c.l.b16 %v1711
        %v1744 = vunpack.c.l.b16 %v1712
        %v1745 = vunpack.c.l.b16 %v1713
        %v1746 = vunpack.c.l.b16 %v1714
        %v1747 = vunpack.c.l.b16 %v1715
        %v1748 = vunpack.c.l.b16 %v1716
        %v1749 = vunpack.c.l.b16 %v1717
        %v1750 = vunpack.c.l.b16 %v1718
        %v1751 = vunpack.c.l.b16 %v1719
        %v1752 = vunpack.c.l.b16 %v1720
        %v1753 = vunpack.c.l.b16 %v1721
        %v1754 = vunpack.c.l.b16 %v1722
        %v1755 = vpack.c.b16 %v1740, %v1739
        %v1756 = vpack.c.b16 %v1742, %v1741
        %v1757 = vpack.c.b16 %v1744, %v1743
        %v1758 = vpack.c.b16 %v1746, %v1745
        %v1759 = vpack.c.b16 %v1748, %v1747
        %v1760 = vpack.c.b16 %v1750, %v1749
        %v1761 = vpack.c.b16 %v1752, %v1751
        %v1762 = vpack.c.b16 %v1754, %v1753
        %1771 = vmatpush.bf16.msra.mxu0 %v1762
        %1772 = vmatpush.bf16.msra.mxu0 %v1761
        %1773 = vmatpush.bf16.msra.mxu0 %v1760
        %1774 = vmatpush.bf16.msra.mxu0 %v1759
        %1775 = vmatpush.bf16.msra.mxu0 %v1758
        %1776 = vmatpush.bf16.msra.mxu0 %v1757
        %1777 = vmatpush.bf16.msra.mxu0 %v1756
        %1778 = vmatpush.bf16.msra.mxu0 %v1755
        %1779 = vmatmul.bf16.gmra.mxu0 %v1702
        %v1780 = vpop.f32.mrf.mxu0
        %v1781 = vadd.f32 0.0, %v1780
        %v1782 = vpop.f32.mrf.mxu0
        %v1783 = vadd.f32 0.0, %v1782
        %1784 = vmatmul.bf16.gmra.mxu0 %v1703
        %v1785 = vpop.f32.mrf.mxu0
        %v1786 = vadd.f32 0.0, %v1785
        %v1787 = vpop.f32.mrf.mxu0
        %v1788 = vadd.f32 0.0, %v1787
        %1789 = vmatmul.bf16.gmra.mxu0 %v1704
        %v1790 = vpop.f32.mrf.mxu0
        %v1791 = vadd.f32 0.0, %v1790
        %v1792 = vpop.f32.mrf.mxu0
        %v1793 = vadd.f32 0.0, %v1792
        %1794 = vmatmul.bf16.gmra.mxu0 %v1705
        %v1795 = vpop.f32.mrf.mxu0
        %v1796 = vadd.f32 0.0, %v1795
        %v1797 = vpop.f32.mrf.mxu0
        %v1798 = vadd.f32 0.0, %v1797
        %1799 = vdwg.mxu0
        %v1800 = vadd.f32 %v1587, %v1781
        %v1801 = vadd.f32 %v1588, %v1783
        %v1802 = vadd.f32 %v1589, %v1786
        %v1803 = vadd.f32 %v1590, %v1788
        %v1804 = vadd.f32 %v1591, %v1791
        %v1805 = vadd.f32 %v1592, %v1793
        %v1806 = vadd.f32 %v1593, %v1796
        %v1807 = vadd.f32 %v1594, %v1798
        %s1808 = scalar_lea.vmem %s1, 384
        %v1809 = vld [vmem:[%s1808] sm:$0xff]
        %v1810 = vld [vmem:[%s1808 + $0x8] sm:$0xff]
        %v1811 = vld [vmem:[%s1808 + $0x10] sm:$0xff]
        %v1812 = vld [vmem:[%s1808 + $0x18] sm:$0xff]
        %v1813 = vld [vmem:[%s1808 + $0x20] sm:$0xff]
        %v1814 = vld [vmem:[%s1808 + $0x28] sm:$0xff]
        %v1815 = vld [vmem:[%s1808 + $0x30] sm:$0xff]
        %v1816 = vld [vmem:[%s1808 + $0x38] sm:$0xff]
        %v1825 = vunpack.c.l.b16 %v1809
        %v1826 = vunpack.c.h.b16 %v1809
        %v1827 = vunpack.c.l.b16 %v1810
        %v1828 = vunpack.c.h.b16 %v1810
        %v1829 = vunpack.c.l.b16 %v1811
        %v1830 = vunpack.c.h.b16 %v1811
        %v1831 = vunpack.c.l.b16 %v1812
        %v1832 = vunpack.c.h.b16 %v1812
        %v1833 = vunpack.c.l.b16 %v1813
        %v1834 = vunpack.c.h.b16 %v1813
        %v1835 = vunpack.c.l.b16 %v1814
        %v1836 = vunpack.c.h.b16 %v1814
        %v1837 = vunpack.c.l.b16 %v1815
        %v1838 = vunpack.c.h.b16 %v1815
        %v1839 = vunpack.c.l.b16 %v1816
        %v1840 = vunpack.c.h.b16 %v1816
        %v1841 = vpack.c.b16 %v1827, %v1825
        %v1842 = vpack.c.b16 %v1828, %v1826
        %v1843 = vpack.c.b16 %v1831, %v1829
        %v1844 = vpack.c.b16 %v1832, %v1830
        %v1845 = vpack.c.b16 %v1835, %v1833
        %v1846 = vpack.c.b16 %v1836, %v1834
        %v1847 = vpack.c.b16 %v1839, %v1837
        %v1848 = vpack.c.b16 %v1840, %v1838
        %1857 = vmatpush.bf16.msra.mxu0 %v571
        %1858 = vmatpush.bf16.msra.mxu0 %v570
        %1859 = vmatpush.bf16.msra.mxu0 %v569
        %1860 = vmatpush.bf16.msra.mxu0 %v568
        %1861 = vmatpush.bf16.msra.mxu0 %v567
        %1862 = vmatpush.bf16.msra.mxu0 %v566
        %1863 = vmatpush.bf16.msra.mxu0 %v565
        %1864 = vmatpush.bf16.msra.mxu0 %v564
        %1865 = vmatmul.bf16.gmra.mxu0 %v1841
        %v1866 = vpop.f32.mrf.mxu0
        %v1867 = vadd.f32 0.0, %v1866
        %v1868 = vpop.f32.mrf.mxu0
        %v1869 = vadd.f32 0.0, %v1868
        %1870 = vmatmul.bf16.gmra.mxu0 %v1843
        %v1871 = vpop.f32.mrf.mxu0
        %v1872 = vadd.f32 0.0, %v1871
        %v1873 = vpop.f32.mrf.mxu0
        %v1874 = vadd.f32 0.0, %v1873
        %1875 = vmatmul.bf16.gmra.mxu0 %v1845
        %v1876 = vpop.f32.mrf.mxu0
        %v1877 = vadd.f32 0.0, %v1876
        %v1878 = vpop.f32.mrf.mxu0
        %v1879 = vadd.f32 0.0, %v1878
        %1880 = vmatmul.bf16.gmra.mxu0 %v1847
        %v1881 = vpop.f32.mrf.mxu0
        %v1882 = vadd.f32 0.0, %v1881
        %v1883 = vpop.f32.mrf.mxu0
        %v1884 = vadd.f32 0.0, %v1883
        %1885 = vdwg.mxu0
        %1886 = vmatpush.bf16.msra.mxu0 %v579
        %1887 = vmatpush.bf16.msra.mxu0 %v578
        %1888 = vmatpush.bf16.msra.mxu0 %v577
        %1889 = vmatpush.bf16.msra.mxu0 %v576
        %1890 = vmatpush.bf16.msra.mxu0 %v575
        %1891 = vmatpush.bf16.msra.mxu0 %v574
        %1892 = vmatpush.bf16.msra.mxu0 %v573
        %1893 = vmatpush.bf16.msra.mxu0 %v572
        %1894 = vmatmul.bf16.gmra.mxu0 %v1842
        %v1895 = vpop.f32.mrf.mxu0
        %v1896 = vadd.f32 %v1867, %v1895
        %v1897 = vpop.f32.mrf.mxu0
        %v1898 = vadd.f32 %v1869, %v1897
        %1899 = vmatmul.bf16.gmra.mxu0 %v1844
        %v1900 = vpop.f32.mrf.mxu0
        %v1901 = vadd.f32 %v1872, %v1900
        %v1902 = vpop.f32.mrf.mxu0
        %v1903 = vadd.f32 %v1874, %v1902
        %1904 = vmatmul.bf16.gmra.mxu0 %v1846
        %v1905 = vpop.f32.mrf.mxu0
        %v1906 = vadd.f32 %v1877, %v1905
        %v1907 = vpop.f32.mrf.mxu0
        %v1908 = vadd.f32 %v1879, %v1907
        %1909 = vmatmul.bf16.gmra.mxu0 %v1848
        %v1910 = vpop.f32.mrf.mxu0
        %v1911 = vadd.f32 %v1882, %v1910
        %v1912 = vpop.f32.mrf.mxu0
        %v1913 = vadd.f32 %v1884, %v1912
        %1914 = vdwg.mxu0
        %v1915 = vpack.c.bf16 %v1898, %v1896
        %v1916 = vpack.c.bf16 %v1903, %v1901
        %v1917 = vpack.c.bf16 %v1908, %v1906
        %v1918 = vpack.c.bf16 %v1913, %v1911
        %s1919 = scalar_lea.vmem [#allocation2], 384
        %v1920 = vld [vmem:[%s1919] sm:$0xf]
        %v1921 = vld [vmem:[%s1919 + $0x4] sm:$0xf]
        %v1922 = vld [vmem:[%s1919 + $0x8] sm:$0xf]
        %v1923 = vld [vmem:[%s1919 + $0xc] sm:$0xf]
        %v1924 = vld [vmem:[%s1919 + $0x10] sm:$0xf]
        %v1925 = vld [vmem:[%s1919 + $0x14] sm:$0xf]
        %v1926 = vld [vmem:[%s1919 + $0x18] sm:$0xf]
        %v1927 = vld [vmem:[%s1919 + $0x1c] sm:$0xf]
        %v1928 = vld [vmem:[%s1919 + $0x20] sm:$0xf]
        %v1929 = vld [vmem:[%s1919 + $0x24] sm:$0xf]
        %v1930 = vld [vmem:[%s1919 + $0x28] sm:$0xf]
        %v1931 = vld [vmem:[%s1919 + $0x2c] sm:$0xf]
        %v1932 = vld [vmem:[%s1919 + $0x30] sm:$0xf]
        %v1933 = vld [vmem:[%s1919 + $0x34] sm:$0xf]
        %v1934 = vld [vmem:[%s1919 + $0x38] sm:$0xf]
        %v1935 = vld [vmem:[%s1919 + $0x3c] sm:$0xf]
        %v1952 = vunpack.c.l.b16 %v1920
        %v1953 = vunpack.c.l.b16 %v1921
        %v1954 = vunpack.c.l.b16 %v1922
        %v1955 = vunpack.c.l.b16 %v1923
        %v1956 = vunpack.c.l.b16 %v1924
        %v1957 = vunpack.c.l.b16 %v1925
        %v1958 = vunpack.c.l.b16 %v1926
        %v1959 = vunpack.c.l.b16 %v1927
        %v1960 = vunpack.c.l.b16 %v1928
        %v1961 = vunpack.c.l.b16 %v1929
        %v1962 = vunpack.c.l.b16 %v1930
        %v1963 = vunpack.c.l.b16 %v1931
        %v1964 = vunpack.c.l.b16 %v1932
        %v1965 = vunpack.c.l.b16 %v1933
        %v1966 = vunpack.c.l.b16 %v1934
        %v1967 = vunpack.c.l.b16 %v1935
        %v1968 = vpack.c.b16 %v1953, %v1952
        %v1969 = vpack.c.b16 %v1955, %v1954
        %v1970 = vpack.c.b16 %v1957, %v1956
        %v1971 = vpack.c.b16 %v1959, %v1958
        %v1972 = vpack.c.b16 %v1961, %v1960
        %v1973 = vpack.c.b16 %v1963, %v1962
        %v1974 = vpack.c.b16 %v1965, %v1964
        %v1975 = vpack.c.b16 %v1967, %v1966
        %1984 = vmatpush.bf16.msra.mxu0 %v1975
        %1985 = vmatpush.bf16.msra.mxu0 %v1974
        %1986 = vmatpush.bf16.msra.mxu0 %v1973
        %1987 = vmatpush.bf16.msra.mxu0 %v1972
        %1988 = vmatpush.bf16.msra.mxu0 %v1971
        %1989 = vmatpush.bf16.msra.mxu0 %v1970
        %1990 = vmatpush.bf16.msra.mxu0 %v1969
        %1991 = vmatpush.bf16.msra.mxu0 %v1968
        %1992 = vmatmul.bf16.gmra.mxu0 %v1915
        %v1993 = vpop.f32.mrf.mxu0
        %v1994 = vadd.f32 0.0, %v1993
        %v1995 = vpop.f32.mrf.mxu0
        %v1996 = vadd.f32 0.0, %v1995
        %1997 = vmatmul.bf16.gmra.mxu0 %v1916
        %v1998 = vpop.f32.mrf.mxu0
        %v1999 = vadd.f32 0.0, %v1998
        %v2000 = vpop.f32.mrf.mxu0
        %v2001 = vadd.f32 0.0, %v2000
        %2002 = vmatmul.bf16.gmra.mxu0 %v1917
        %v2003 = vpop.f32.mrf.mxu0
        %v2004 = vadd.f32 0.0, %v2003
        %v2005 = vpop.f32.mrf.mxu0
        %v2006 = vadd.f32 0.0, %v2005
        %2007 = vmatmul.bf16.gmra.mxu0 %v1918
        %v2008 = vpop.f32.mrf.mxu0
        %v2009 = vadd.f32 0.0, %v2008
        %v2010 = vpop.f32.mrf.mxu0
        %v2011 = vadd.f32 0.0, %v2010
        %2012 = vdwg.mxu0
        %v2013 = vadd.f32 %v1800, %v1994
        %v2014 = vadd.f32 %v1801, %v1996
        %v2015 = vadd.f32 %v1802, %v1999
        %v2016 = vadd.f32 %v1803, %v2001
        %v2017 = vadd.f32 %v1804, %v2004
        %v2018 = vadd.f32 %v1805, %v2006
        %v2019 = vadd.f32 %v1806, %v2009
        %v2020 = vadd.f32 %v1807, %v2011
        %s2021 = scalar_lea.vmem %s1, 448
        %v2022 = vld [vmem:[%s2021] sm:$0xff]
        %v2023 = vld [vmem:[%s2021 + $0x8] sm:$0xff]
        %v2024 = vld [vmem:[%s2021 + $0x10] sm:$0xff]
        %v2025 = vld [vmem:[%s2021 + $0x18] sm:$0xff]
        %v2026 = vld [vmem:[%s2021 + $0x20] sm:$0xff]
        %v2027 = vld [vmem:[%s2021 + $0x28] sm:$0xff]
        %v2028 = vld [vmem:[%s2021 + $0x30] sm:$0xff]
        %v2029 = vld [vmem:[%s2021 + $0x38] sm:$0xff]
        %v2038 = vunpack.c.l.b16 %v2022
        %v2039 = vunpack.c.h.b16 %v2022
        %v2040 = vunpack.c.l.b16 %v2023
        %v2041 = vunpack.c.h.b16 %v2023
        %v2042 = vunpack.c.l.b16 %v2024
        %v2043 = vunpack.c.h.b16 %v2024
        %v2044 = vunpack.c.l.b16 %v2025
        %v2045 = vunpack.c.h.b16 %v2025
        %v2046 = vunpack.c.l.b16 %v2026
        %v2047 = vunpack.c.h.b16 %v2026
        %v2048 = vunpack.c.l.b16 %v2027
        %v2049 = vunpack.c.h.b16 %v2027
        %v2050 = vunpack.c.l.b16 %v2028
        %v2051 = vunpack.c.h.b16 %v2028
        %v2052 = vunpack.c.l.b16 %v2029
        %v2053 = vunpack.c.h.b16 %v2029
        %v2054 = vpack.c.b16 %v2040, %v2038
        %v2055 = vpack.c.b16 %v2041, %v2039
        %v2056 = vpack.c.b16 %v2044, %v2042
        %v2057 = vpack.c.b16 %v2045, %v2043
        %v2058 = vpack.c.b16 %v2048, %v2046
        %v2059 = vpack.c.b16 %v2049, %v2047
        %v2060 = vpack.c.b16 %v2052, %v2050
        %v2061 = vpack.c.b16 %v2053, %v2051
        %2070 = vmatpush.bf16.msra.mxu0 %v571
        %2071 = vmatpush.bf16.msra.mxu0 %v570
        %2072 = vmatpush.bf16.msra.mxu0 %v569
        %2073 = vmatpush.bf16.msra.mxu0 %v568
        %2074 = vmatpush.bf16.msra.mxu0 %v567
        %2075 = vmatpush.bf16.msra.mxu0 %v566
        %2076 = vmatpush.bf16.msra.mxu0 %v565
        %2077 = vmatpush.bf16.msra.mxu0 %v564
        %2078 = vmatmul.bf16.gmra.mxu0 %v2054
        %v2079 = vpop.f32.mrf.mxu0
        %v2080 = vadd.f32 0.0, %v2079
        %v2081 = vpop.f32.mrf.mxu0
        %v2082 = vadd.f32 0.0, %v2081
        %2083 = vmatmul.bf16.gmra.mxu0 %v2056
        %v2084 = vpop.f32.mrf.mxu0
        %v2085 = vadd.f32 0.0, %v2084
        %v2086 = vpop.f32.mrf.mxu0
        %v2087 = vadd.f32 0.0, %v2086
        %2088 = vmatmul.bf16.gmra.mxu0 %v2058
        %v2089 = vpop.f32.mrf.mxu0
        %v2090 = vadd.f32 0.0, %v2089
        %v2091 = vpop.f32.mrf.mxu0
        %v2092 = vadd.f32 0.0, %v2091
        %2093 = vmatmul.bf16.gmra.mxu0 %v2060
        %v2094 = vpop.f32.mrf.mxu0
        %v2095 = vadd.f32 0.0, %v2094
        %v2096 = vpop.f32.mrf.mxu0
        %v2097 = vadd.f32 0.0, %v2096
        %2098 = vdwg.mxu0
        %2099 = vmatpush.bf16.msra.mxu0 %v579
        %2100 = vmatpush.bf16.msra.mxu0 %v578
        %2101 = vmatpush.bf16.msra.mxu0 %v577
        %2102 = vmatpush.bf16.msra.mxu0 %v576
        %2103 = vmatpush.bf16.msra.mxu0 %v575
        %2104 = vmatpush.bf16.msra.mxu0 %v574
        %2105 = vmatpush.bf16.msra.mxu0 %v573
        %2106 = vmatpush.bf16.msra.mxu0 %v572
        %2107 = vmatmul.bf16.gmra.mxu0 %v2055
        %v2108 = vpop.f32.mrf.mxu0
        %v2109 = vadd.f32 %v2080, %v2108
        %v2110 = vpop.f32.mrf.mxu0
        %v2111 = vadd.f32 %v2082, %v2110
        %2112 = vmatmul.bf16.gmra.mxu0 %v2057
        %v2113 = vpop.f32.mrf.mxu0
        %v2114 = vadd.f32 %v2085, %v2113
        %v2115 = vpop.f32.mrf.mxu0
        %v2116 = vadd.f32 %v2087, %v2115
        %2117 = vmatmul.bf16.gmra.mxu0 %v2059
        %v2118 = vpop.f32.mrf.mxu0
        %v2119 = vadd.f32 %v2090, %v2118
        %v2120 = vpop.f32.mrf.mxu0
        %v2121 = vadd.f32 %v2092, %v2120
        %2122 = vmatmul.bf16.gmra.mxu0 %v2061
        %v2123 = vpop.f32.mrf.mxu0
        %v2124 = vadd.f32 %v2095, %v2123
        %v2125 = vpop.f32.mrf.mxu0
        %v2126 = vadd.f32 %v2097, %v2125
        %2127 = vdwg.mxu0
        %v2128 = vpack.c.bf16 %v2111, %v2109
        %v2129 = vpack.c.bf16 %v2116, %v2114
        %v2130 = vpack.c.bf16 %v2121, %v2119
        %v2131 = vpack.c.bf16 %v2126, %v2124
        %s2132 = scalar_lea.vmem [#allocation2], 448
        %v2133 = vld [vmem:[%s2132] sm:$0xf]
        %v2134 = vld [vmem:[%s2132 + $0x4] sm:$0xf]
        %v2135 = vld [vmem:[%s2132 + $0x8] sm:$0xf]
        %v2136 = vld [vmem:[%s2132 + $0xc] sm:$0xf]
        %v2137 = vld [vmem:[%s2132 + $0x10] sm:$0xf]
        %v2138 = vld [vmem:[%s2132 + $0x14] sm:$0xf]
        %v2139 = vld [vmem:[%s2132 + $0x18] sm:$0xf]
        %v2140 = vld [vmem:[%s2132 + $0x1c] sm:$0xf]
        %v2141 = vld [vmem:[%s2132 + $0x20] sm:$0xf]
        %v2142 = vld [vmem:[%s2132 + $0x24] sm:$0xf]
        %v2143 = vld [vmem:[%s2132 + $0x28] sm:$0xf]
        %v2144 = vld [vmem:[%s2132 + $0x2c] sm:$0xf]
        %v2145 = vld [vmem:[%s2132 + $0x30] sm:$0xf]
        %v2146 = vld [vmem:[%s2132 + $0x34] sm:$0xf]
        %v2147 = vld [vmem:[%s2132 + $0x38] sm:$0xf]
        %v2148 = vld [vmem:[%s2132 + $0x3c] sm:$0xf]
        %v2165 = vunpack.c.l.b16 %v2133
        %v2166 = vunpack.c.l.b16 %v2134
        %v2167 = vunpack.c.l.b16 %v2135
        %v2168 = vunpack.c.l.b16 %v2136
        %v2169 = vunpack.c.l.b16 %v2137
        %v2170 = vunpack.c.l.b16 %v2138
        %v2171 = vunpack.c.l.b16 %v2139
        %v2172 = vunpack.c.l.b16 %v2140
        %v2173 = vunpack.c.l.b16 %v2141
        %v2174 = vunpack.c.l.b16 %v2142
        %v2175 = vunpack.c.l.b16 %v2143
        %v2176 = vunpack.c.l.b16 %v2144
        %v2177 = vunpack.c.l.b16 %v2145
        %v2178 = vunpack.c.l.b16 %v2146
        %v2179 = vunpack.c.l.b16 %v2147
        %v2180 = vunpack.c.l.b16 %v2148
        %v2181 = vpack.c.b16 %v2166, %v2165
        %v2182 = vpack.c.b16 %v2168, %v2167
        %v2183 = vpack.c.b16 %v2170, %v2169
        %v2184 = vpack.c.b16 %v2172, %v2171
        %v2185 = vpack.c.b16 %v2174, %v2173
        %v2186 = vpack.c.b16 %v2176, %v2175
        %v2187 = vpack.c.b16 %v2178, %v2177
        %v2188 = vpack.c.b16 %v2180, %v2179
        %2197 = vmatpush.bf16.msra.mxu0 %v2188
        %2198 = vmatpush.bf16.msra.mxu0 %v2187
        %2199 = vmatpush.bf16.msra.mxu0 %v2186
        %2200 = vmatpush.bf16.msra.mxu0 %v2185
        %2201 = vmatpush.bf16.msra.mxu0 %v2184
        %2202 = vmatpush.bf16.msra.mxu0 %v2183
        %2203 = vmatpush.bf16.msra.mxu0 %v2182
        %2204 = vmatpush.bf16.msra.mxu0 %v2181
        %2205 = vmatmul.bf16.gmra.mxu0 %v2128
        %v2206 = vpop.f32.mrf.mxu0
        %v2207 = vadd.f32 0.0, %v2206
        %v2208 = vpop.f32.mrf.mxu0
        %v2209 = vadd.f32 0.0, %v2208
        %2210 = vmatmul.bf16.gmra.mxu0 %v2129
        %v2211 = vpop.f32.mrf.mxu0
        %v2212 = vadd.f32 0.0, %v2211
        %v2213 = vpop.f32.mrf.mxu0
        %v2214 = vadd.f32 0.0, %v2213
        %2215 = vmatmul.bf16.gmra.mxu0 %v2130
        %v2216 = vpop.f32.mrf.mxu0
        %v2217 = vadd.f32 0.0, %v2216
        %v2218 = vpop.f32.mrf.mxu0
        %v2219 = vadd.f32 0.0, %v2218
        %2220 = vmatmul.bf16.gmra.mxu0 %v2131
        %v2221 = vpop.f32.mrf.mxu0
        %v2222 = vadd.f32 0.0, %v2221
        %v2223 = vpop.f32.mrf.mxu0
        %v2224 = vadd.f32 0.0, %v2223
        %2225 = vdwg.mxu0
        %v2226 = vadd.f32 %v2013, %v2207
        %v2227 = vadd.f32 %v2014, %v2209
        %v2228 = vadd.f32 %v2015, %v2212
        %v2229 = vadd.f32 %v2016, %v2214
        %v2230 = vadd.f32 %v2017, %v2217
        %v2231 = vadd.f32 %v2018, %v2219
        %v2232 = vadd.f32 %v2019, %v2222
        %v2233 = vadd.f32 %v2020, %v2224
        %s2234 = scalar_lea.vmem %s1, 512
        %v2235 = vld [vmem:[%s2234] sm:$0xff]
        %v2236 = vld [vmem:[%s2234 + $0x8] sm:$0xff]
        %v2237 = vld [vmem:[%s2234 + $0x10] sm:$0xff]
        %v2238 = vld [vmem:[%s2234 + $0x18] sm:$0xff]
        %v2239 = vld [vmem:[%s2234 + $0x20] sm:$0xff]
        %v2240 = vld [vmem:[%s2234 + $0x28] sm:$0xff]
        %v2241 = vld [vmem:[%s2234 + $0x30] sm:$0xff]
        %v2242 = vld [vmem:[%s2234 + $0x38] sm:$0xff]
        %v2251 = vunpack.c.l.b16 %v2235
        %v2252 = vunpack.c.h.b16 %v2235
        %v2253 = vunpack.c.l.b16 %v2236
        %v2254 = vunpack.c.h.b16 %v2236
        %v2255 = vunpack.c.l.b16 %v2237
        %v2256 = vunpack.c.h.b16 %v2237
        %v2257 = vunpack.c.l.b16 %v2238
        %v2258 = vunpack.c.h.b16 %v2238
        %v2259 = vunpack.c.l.b16 %v2239
        %v2260 = vunpack.c.h.b16 %v2239
        %v2261 = vunpack.c.l.b16 %v2240
        %v2262 = vunpack.c.h.b16 %v2240
        %v2263 = vunpack.c.l.b16 %v2241
        %v2264 = vunpack.c.h.b16 %v2241
        %v2265 = vunpack.c.l.b16 %v2242
        %v2266 = vunpack.c.h.b16 %v2242
        %v2267 = vpack.c.b16 %v2253, %v2251
        %v2268 = vpack.c.b16 %v2254, %v2252
        %v2269 = vpack.c.b16 %v2257, %v2255
        %v2270 = vpack.c.b16 %v2258, %v2256
        %v2271 = vpack.c.b16 %v2261, %v2259
        %v2272 = vpack.c.b16 %v2262, %v2260
        %v2273 = vpack.c.b16 %v2265, %v2263
        %v2274 = vpack.c.b16 %v2266, %v2264
        %2283 = vmatpush.bf16.msra.mxu0 %v571
        %2284 = vmatpush.bf16.msra.mxu0 %v570
        %2285 = vmatpush.bf16.msra.mxu0 %v569
        %2286 = vmatpush.bf16.msra.mxu0 %v568
        %2287 = vmatpush.bf16.msra.mxu0 %v567
        %2288 = vmatpush.bf16.msra.mxu0 %v566
        %2289 = vmatpush.bf16.msra.mxu0 %v565
        %2290 = vmatpush.bf16.msra.mxu0 %v564
        %2291 = vmatmul.bf16.gmra.mxu0 %v2267
        %v2292 = vpop.f32.mrf.mxu0
        %v2293 = vadd.f32 0.0, %v2292
        %v2294 = vpop.f32.mrf.mxu0
        %v2295 = vadd.f32 0.0, %v2294
        %2296 = vmatmul.bf16.gmra.mxu0 %v2269
        %v2297 = vpop.f32.mrf.mxu0
        %v2298 = vadd.f32 0.0, %v2297
        %v2299 = vpop.f32.mrf.mxu0
        %v2300 = vadd.f32 0.0, %v2299
        %2301 = vmatmul.bf16.gmra.mxu0 %v2271
        %v2302 = vpop.f32.mrf.mxu0
        %v2303 = vadd.f32 0.0, %v2302
        %v2304 = vpop.f32.mrf.mxu0
        %v2305 = vadd.f32 0.0, %v2304
        %2306 = vmatmul.bf16.gmra.mxu0 %v2273
        %v2307 = vpop.f32.mrf.mxu0
        %v2308 = vadd.f32 0.0, %v2307
        %v2309 = vpop.f32.mrf.mxu0
        %v2310 = vadd.f32 0.0, %v2309
        %2311 = vdwg.mxu0
        %2312 = vmatpush.bf16.msra.mxu0 %v579
        %2313 = vmatpush.bf16.msra.mxu0 %v578
        %2314 = vmatpush.bf16.msra.mxu0 %v577
        %2315 = vmatpush.bf16.msra.mxu0 %v576
        %2316 = vmatpush.bf16.msra.mxu0 %v575
        %2317 = vmatpush.bf16.msra.mxu0 %v574
        %2318 = vmatpush.bf16.msra.mxu0 %v573
        %2319 = vmatpush.bf16.msra.mxu0 %v572
        %2320 = vmatmul.bf16.gmra.mxu0 %v2268
        %v2321 = vpop.f32.mrf.mxu0
        %v2322 = vadd.f32 %v2293, %v2321
        %v2323 = vpop.f32.mrf.mxu0
        %v2324 = vadd.f32 %v2295, %v2323
        %2325 = vmatmul.bf16.gmra.mxu0 %v2270
        %v2326 = vpop.f32.mrf.mxu0
        %v2327 = vadd.f32 %v2298, %v2326
        %v2328 = vpop.f32.mrf.mxu0
        %v2329 = vadd.f32 %v2300, %v2328
        %2330 = vmatmul.bf16.gmra.mxu0 %v2272
        %v2331 = vpop.f32.mrf.mxu0
        %v2332 = vadd.f32 %v2303, %v2331
        %v2333 = vpop.f32.mrf.mxu0
        %v2334 = vadd.f32 %v2305, %v2333
        %2335 = vmatmul.bf16.gmra.mxu0 %v2274
        %v2336 = vpop.f32.mrf.mxu0
        %v2337 = vadd.f32 %v2308, %v2336
        %v2338 = vpop.f32.mrf.mxu0
        %v2339 = vadd.f32 %v2310, %v2338
        %2340 = vdwg.mxu0
        %v2341 = vpack.c.bf16 %v2324, %v2322
        %v2342 = vpack.c.bf16 %v2329, %v2327
        %v2343 = vpack.c.bf16 %v2334, %v2332
        %v2344 = vpack.c.bf16 %v2339, %v2337
        %s2345 = scalar_lea.vmem [#allocation2], 512
        %v2346 = vld [vmem:[%s2345] sm:$0xf]
        %v2347 = vld [vmem:[%s2345 + $0x4] sm:$0xf]
        %v2348 = vld [vmem:[%s2345 + $0x8] sm:$0xf]
        %v2349 = vld [vmem:[%s2345 + $0xc] sm:$0xf]
        %v2350 = vld [vmem:[%s2345 + $0x10] sm:$0xf]
        %v2351 = vld [vmem:[%s2345 + $0x14] sm:$0xf]
        %v2352 = vld [vmem:[%s2345 + $0x18] sm:$0xf]
        %v2353 = vld [vmem:[%s2345 + $0x1c] sm:$0xf]
        %v2354 = vld [vmem:[%s2345 + $0x20] sm:$0xf]
        %v2355 = vld [vmem:[%s2345 + $0x24] sm:$0xf]
        %v2356 = vld [vmem:[%s2345 + $0x28] sm:$0xf]
        %v2357 = vld [vmem:[%s2345 + $0x2c] sm:$0xf]
        %v2358 = vld [vmem:[%s2345 + $0x30] sm:$0xf]
        %v2359 = vld [vmem:[%s2345 + $0x34] sm:$0xf]
        %v2360 = vld [vmem:[%s2345 + $0x38] sm:$0xf]
        %v2361 = vld [vmem:[%s2345 + $0x3c] sm:$0xf]
        %v2378 = vunpack.c.l.b16 %v2346
        %v2379 = vunpack.c.l.b16 %v2347
        %v2380 = vunpack.c.l.b16 %v2348
        %v2381 = vunpack.c.l.b16 %v2349
        %v2382 = vunpack.c.l.b16 %v2350
        %v2383 = vunpack.c.l.b16 %v2351
        %v2384 = vunpack.c.l.b16 %v2352
        %v2385 = vunpack.c.l.b16 %v2353
        %v2386 = vunpack.c.l.b16 %v2354
        %v2387 = vunpack.c.l.b16 %v2355
        %v2388 = vunpack.c.l.b16 %v2356
        %v2389 = vunpack.c.l.b16 %v2357
        %v2390 = vunpack.c.l.b16 %v2358
        %v2391 = vunpack.c.l.b16 %v2359
        %v2392 = vunpack.c.l.b16 %v2360
        %v2393 = vunpack.c.l.b16 %v2361
        %v2394 = vpack.c.b16 %v2379, %v2378
        %v2395 = vpack.c.b16 %v2381, %v2380
        %v2396 = vpack.c.b16 %v2383, %v2382
        %v2397 = vpack.c.b16 %v2385, %v2384
        %v2398 = vpack.c.b16 %v2387, %v2386
        %v2399 = vpack.c.b16 %v2389, %v2388
        %v2400 = vpack.c.b16 %v2391, %v2390
        %v2401 = vpack.c.b16 %v2393, %v2392
        %2410 = vmatpush.bf16.msra.mxu0 %v2401
        %2411 = vmatpush.bf16.msra.mxu0 %v2400
        %2412 = vmatpush.bf16.msra.mxu0 %v2399
        %2413 = vmatpush.bf16.msra.mxu0 %v2398
        %2414 = vmatpush.bf16.msra.mxu0 %v2397
        %2415 = vmatpush.bf16.msra.mxu0 %v2396
        %2416 = vmatpush.bf16.msra.mxu0 %v2395
        %2417 = vmatpush.bf16.msra.mxu0 %v2394
        %2418 = vmatmul.bf16.gmra.mxu0 %v2341
        %v2419 = vpop.f32.mrf.mxu0
        %v2420 = vadd.f32 0.0, %v2419
        %v2421 = vpop.f32.mrf.mxu0
        %v2422 = vadd.f32 0.0, %v2421
        %2423 = vmatmul.bf16.gmra.mxu0 %v2342
        %v2424 = vpop.f32.mrf.mxu0
        %v2425 = vadd.f32 0.0, %v2424
        %v2426 = vpop.f32.mrf.mxu0
        %v2427 = vadd.f32 0.0, %v2426
        %2428 = vmatmul.bf16.gmra.mxu0 %v2343
        %v2429 = vpop.f32.mrf.mxu0
        %v2430 = vadd.f32 0.0, %v2429
        %v2431 = vpop.f32.mrf.mxu0
        %v2432 = vadd.f32 0.0, %v2431
        %2433 = vmatmul.bf16.gmra.mxu0 %v2344
        %v2434 = vpop.f32.mrf.mxu0
        %v2435 = vadd.f32 0.0, %v2434
        %v2436 = vpop.f32.mrf.mxu0
        %v2437 = vadd.f32 0.0, %v2436
        %2438 = vdwg.mxu0
        %v2439 = vadd.f32 %v2226, %v2420
        %v2440 = vadd.f32 %v2227, %v2422
        %v2441 = vadd.f32 %v2228, %v2425
        %v2442 = vadd.f32 %v2229, %v2427
        %v2443 = vadd.f32 %v2230, %v2430
        %v2444 = vadd.f32 %v2231, %v2432
        %v2445 = vadd.f32 %v2232, %v2435
        %v2446 = vadd.f32 %v2233, %v2437
        %v2447 = vld [vmem:[%s3] sm:$0x1]
        %v2449 = vperm.slane %v2447, 0
        %v2451 = vadd.f32 %v2439, %v2449
        %v2452 = vadd.f32 %v2440, %v2449
        %v2453 = vadd.f32 %v2441, %v2449
        %v2454 = vadd.f32 %v2442, %v2449
        %v2455 = vadd.f32 %v2443, %v2449
        %v2456 = vadd.f32 %v2444, %v2449
        %v2457 = vadd.f32 %v2445, %v2449
        %v2458 = vadd.f32 %v2446, %v2449
        %v2459 = vmul.f32 %v2451, 0.5
        %v2460 = vmul.f32 %v2452, 0.5
        %v2461 = vmul.f32 %v2453, 0.5
        %v2462 = vmul.f32 %v2454, 0.5
        %v2463 = vmul.f32 %v2455, 0.5
        %v2464 = vmul.f32 %v2456, 0.5
        %v2465 = vmul.f32 %v2457, 0.5
        %v2466 = vmul.f32 %v2458, 0.5
        %v2467 = vtanh.pop %v2459
        %v2468 = vtanh.pop %v2460
        %v2469 = vtanh.pop %v2461
        %v2470 = vtanh.pop %v2462
        %v2471 = vtanh.pop %v2463
        %v2472 = vtanh.pop %v2464
        %v2473 = vtanh.pop %v2465
        %v2474 = vtanh.pop %v2466
        %v2475 = vadd.f32 %v2467, 1.0
        %v2476 = vadd.f32 %v2468, 1.0
        %v2477 = vadd.f32 %v2469, 1.0
        %v2478 = vadd.f32 %v2470, 1.0
        %v2479 = vadd.f32 %v2471, 1.0
        %v2480 = vadd.f32 %v2472, 1.0
        %v2481 = vadd.f32 %v2473, 1.0
        %v2482 = vadd.f32 %v2474, 1.0
        %v2483 = vmul.f32 %v2475, 0.5
        %v2484 = vmul.f32 %v2476, 0.5
        %v2485 = vmul.f32 %v2477, 0.5
        %v2486 = vmul.f32 %v2478, 0.5
        %v2487 = vmul.f32 %v2479, 0.5
        %v2488 = vmul.f32 %v2480, 0.5
        %v2489 = vmul.f32 %v2481, 0.5
        %v2490 = vmul.f32 %v2482, 0.5
        %v2491 = vmul.f32 %v2451, %v2483
        %v2492 = vmul.f32 %v2452, %v2484
        %v2493 = vmul.f32 %v2453, %v2485
        %v2494 = vmul.f32 %v2454, %v2486
        %v2495 = vmul.f32 %v2455, %v2487
        %v2496 = vmul.f32 %v2456, %v2488
        %v2497 = vmul.f32 %v2457, %v2489
        %v2498 = vmul.f32 %v2458, %v2490
        %v2499 = vpack.c.bf16 %v2492, %v2491
        %v2500 = vpack.c.bf16 %v2494, %v2493
        %v2501 = vpack.c.bf16 %v2496, %v2495
        %v2502 = vpack.c.bf16 %v2498, %v2497
        %v2503 = vld [vmem:[%s4] sm:$0xf]
        %v2504 = vld [vmem:[%s4 + $0x4] sm:$0xf]
        %v2507 = vunpack.c.l.b16 %v2503
        %v2508 = vunpack.c.l.b16 %v2504
        %v2509 = vpack.c.b16 %v2508, %v2507
        %vm2510 = vcmask 523264
        %v2512 = vsel %vm2510, %v2509, 0
        %2514 = vmatpush.bf16.msra.mxu0 0
        %2515 = vmatpush.bf16.msra.mxu0 0
        %2516 = vmatpush.bf16.msra.mxu0 0
        %2517 = vmatpush.bf16.msra.mxu0 0
        %2518 = vmatpush.bf16.msra.mxu0 %v2502
        %2519 = vmatpush.bf16.msra.mxu0 %v2501
        %2520 = vmatpush.bf16.msra.mxu0 %v2500
        %2521 = vmatpush.bf16.msra.mxu0 %v2499
        %2522 = vmatmul.bf16.gmra.mxu0 %v2512
        %v2523 = vpop.f32.mrf.mxu0
        %v2524 = vadd.f32 0.0, %v2523
        %v2525 = vpop.f32.mrf.mxu0
        %v2526 = vadd.f32 0.0, %v2525
        %2527 = vdwg.mxu0
        %v2528 = vpack.c.bf16 %v2526, %v2524
        %v2529 = vld [vmem:[#allocation5] sm:$0xf]
        %v2530 = vld [vmem:[#allocation5 + $0x4] sm:$0xf]
        %v2531 = vld [vmem:[#allocation5 + $0x8] sm:$0xf]
        %v2532 = vld [vmem:[#allocation5 + $0xc] sm:$0xf]
        %v2533 = vld [vmem:[#allocation5 + $0x10] sm:$0xf]
        %v2534 = vld [vmem:[#allocation5 + $0x14] sm:$0xf]
        %v2535 = vld [vmem:[#allocation5 + $0x18] sm:$0xf]
        %v2536 = vld [vmem:[#allocation5 + $0x1c] sm:$0xf]
        %v2537 = vld [vmem:[#allocation5 + $0x20] sm:$0xf]
        %v2538 = vld [vmem:[#allocation5 + $0x24] sm:$0xf]
        %v2539 = vld [vmem:[#allocation5 + $0x28] sm:$0xf]
        %v2540 = vld [vmem:[#allocation5 + $0x2c] sm:$0xf]
        %v2541 = vld [vmem:[#allocation5 + $0x30] sm:$0xf]
        %v2542 = vld [vmem:[#allocation5 + $0x34] sm:$0xf]
        %v2543 = vld [vmem:[#allocation5 + $0x38] sm:$0xf]
        %v2544 = vld [vmem:[#allocation5 + $0x3c] sm:$0xf]
        %s2545 = scalar_lea.vmem %s4, 8
        %v2546 = vld [vmem:[%s2545] sm:$0xf]
        %v2547 = vld [vmem:[%s2545 + $0x4] sm:$0xf]
        %v2550 = vunpack.c.l.b16 %v2546
        %v2551 = vunpack.c.l.b16 %v2547
        %v2552 = vpack.c.b16 %v2551, %v2550
        %v2554 = vsel %vm2510, %v2552, 0
        %2556 = vmatpush.bf16.msra.mxu0 0
        %2557 = vmatpush.bf16.msra.mxu0 0
        %2558 = vmatpush.bf16.msra.mxu0 0
        %2559 = vmatpush.bf16.msra.mxu0 0
        %2560 = vmatpush.bf16.msra.mxu0 %v2502
        %2561 = vmatpush.bf16.msra.mxu0 %v2501
        %2562 = vmatpush.bf16.msra.mxu0 %v2500
        %2563 = vmatpush.bf16.msra.mxu0 %v2499
        %2564 = vmatmul.bf16.gmra.mxu0 %v2554
        %v2565 = vpop.f32.mrf.mxu0
        %v2566 = vadd.f32 0.0, %v2565
        %v2567 = vpop.f32.mrf.mxu0
        %v2568 = vadd.f32 0.0, %v2567
        %2569 = vdwg.mxu0
        %v2570 = vpack.c.bf16 %v2568, %v2566
        %s2571 = scalar_lea.vmem [#allocation5], 64
        %v2572 = vld [vmem:[%s2571] sm:$0xf]
        %v2573 = vld [vmem:[%s2571 + $0x4] sm:$0xf]
        %v2574 = vld [vmem:[%s2571 + $0x8] sm:$0xf]
        %v2575 = vld [vmem:[%s2571 + $0xc] sm:$0xf]
        %v2576 = vld [vmem:[%s2571 + $0x10] sm:$0xf]
        %v2577 = vld [vmem:[%s2571 + $0x14] sm:$0xf]
        %v2578 = vld [vmem:[%s2571 + $0x18] sm:$0xf]
        %v2579 = vld [vmem:[%s2571 + $0x1c] sm:$0xf]
        %v2580 = vld [vmem:[%s2571 + $0x20] sm:$0xf]
        %v2581 = vld [vmem:[%s2571 + $0x24] sm:$0xf]
        %v2582 = vld [vmem:[%s2571 + $0x28] sm:$0xf]
        %v2583 = vld [vmem:[%s2571 + $0x2c] sm:$0xf]
        %v2584 = vld [vmem:[%s2571 + $0x30] sm:$0xf]
        %v2585 = vld [vmem:[%s2571 + $0x34] sm:$0xf]
        %v2586 = vld [vmem:[%s2571 + $0x38] sm:$0xf]
        %v2587 = vld [vmem:[%s2571 + $0x3c] sm:$0xf]
        %v2604 = vunpack.c.l.b16 %v2572
        %v2605 = vunpack.c.l.b16 %v2573
        %v2606 = vunpack.c.l.b16 %v2574
        %v2607 = vunpack.c.l.b16 %v2575
        %v2608 = vunpack.c.l.b16 %v2576
        %v2609 = vunpack.c.l.b16 %v2577
        %v2610 = vunpack.c.l.b16 %v2578
        %v2611 = vunpack.c.l.b16 %v2579
        %v2612 = vunpack.c.l.b16 %v2580
        %v2613 = vunpack.c.l.b16 %v2581
        %v2614 = vunpack.c.l.b16 %v2582
        %v2615 = vunpack.c.l.b16 %v2583
        %v2616 = vunpack.c.l.b16 %v2584
        %v2617 = vunpack.c.l.b16 %v2585
        %v2618 = vunpack.c.l.b16 %v2586
        %v2619 = vunpack.c.l.b16 %v2587
        %v2620 = vpack.c.b16 %v2605, %v2604
        %v2621 = vpack.c.b16 %v2607, %v2606
        %v2622 = vpack.c.b16 %v2609, %v2608
        %v2623 = vpack.c.b16 %v2611, %v2610
        %v2624 = vpack.c.b16 %v2613, %v2612
        %v2625 = vpack.c.b16 %v2615, %v2614
        %v2626 = vpack.c.b16 %v2617, %v2616
        %v2627 = vpack.c.b16 %v2619, %v2618
        %2636 = vmatpush.bf16.msra.mxu0 %v2627
        %2637 = vmatpush.bf16.msra.mxu0 %v2626
        %2638 = vmatpush.bf16.msra.mxu0 %v2625
        %2639 = vmatpush.bf16.msra.mxu0 %v2624
        %2640 = vmatpush.bf16.msra.mxu0 %v2623
        %2641 = vmatpush.bf16.msra.mxu0 %v2622
        %2642 = vmatpush.bf16.msra.mxu0 %v2621
        %2643 = vmatpush.bf16.msra.mxu0 %v2620
        %2644 = vmatmul.bf16.gmra.mxu0 %v2570
        %v2645 = vpop.f32.mrf.mxu0
        %v2646 = vadd.f32 0.0, %v2645
        %v2647 = vpop.f32.mrf.mxu0
        %v2648 = vadd.f32 0.0, %v2647
        %2649 = vdwg.mxu0
        %v2666 = vunpack.c.l.b16 %v2529
        %v2667 = vunpack.c.l.b16 %v2530
        %v2668 = vunpack.c.l.b16 %v2531
        %v2669 = vunpack.c.l.b16 %v2532
        %v2670 = vunpack.c.l.b16 %v2533
        %v2671 = vunpack.c.l.b16 %v2534
        %v2672 = vunpack.c.l.b16 %v2535
        %v2673 = vunpack.c.l.b16 %v2536
        %v2674 = vunpack.c.l.b16 %v2537
        %v2675 = vunpack.c.l.b16 %v2538
        %v2676 = vunpack.c.l.b16 %v2539
        %v2677 = vunpack.c.l.b16 %v2540
        %v2678 = vunpack.c.l.b16 %v2541
        %v2679 = vunpack.c.l.b16 %v2542
        %v2680 = vunpack.c.l.b16 %v2543
        %v2681 = vunpack.c.l.b16 %v2544
        %v2682 = vpack.c.b16 %v2667, %v2666
        %v2683 = vpack.c.b16 %v2669, %v2668
        %v2684 = vpack.c.b16 %v2671, %v2670
        %v2685 = vpack.c.b16 %v2673, %v2672
        %v2686 = vpack.c.b16 %v2675, %v2674
        %v2687 = vpack.c.b16 %v2677, %v2676
        %v2688 = vpack.c.b16 %v2679, %v2678
        %v2689 = vpack.c.b16 %v2681, %v2680
        %2698 = vmatpush.bf16.msra.mxu0 %v2689
        %2699 = vmatpush.bf16.msra.mxu0 %v2688
        %2700 = vmatpush.bf16.msra.mxu0 %v2687
        %2701 = vmatpush.bf16.msra.mxu0 %v2686
        %2702 = vmatpush.bf16.msra.mxu0 %v2685
        %2703 = vmatpush.bf16.msra.mxu0 %v2684
        %2704 = vmatpush.bf16.msra.mxu0 %v2683
        %2705 = vmatpush.bf16.msra.mxu0 %v2682
        %2706 = vmatmul.bf16.gmra.mxu0 %v2528
        %v2707 = vpop.f32.mrf.mxu0
        %v2708 = vadd.f32 %v2646, %v2707
        %v2709 = vpop.f32.mrf.mxu0
        %v2710 = vadd.f32 %v2648, %v2709
        %2711 = vdwg.mxu0
        %s2712 = scalar_lea.vmem %s4, 16
        %v2713 = vld [vmem:[%s2712] sm:$0xf]
        %v2714 = vld [vmem:[%s2712 + $0x4] sm:$0xf]
        %v2717 = vunpack.c.l.b16 %v2713
        %v2718 = vunpack.c.l.b16 %v2714
        %v2719 = vpack.c.b16 %v2718, %v2717
        %v2721 = vsel %vm2510, %v2719, 0
        %2723 = vmatpush.bf16.msra.mxu0 0
        %2724 = vmatpush.bf16.msra.mxu0 0
        %2725 = vmatpush.bf16.msra.mxu0 0
        %2726 = vmatpush.bf16.msra.mxu0 0
        %2727 = vmatpush.bf16.msra.mxu0 %v2502
        %2728 = vmatpush.bf16.msra.mxu0 %v2501
        %2729 = vmatpush.bf16.msra.mxu0 %v2500
        %2730 = vmatpush.bf16.msra.mxu0 %v2499
        %2731 = vmatmul.bf16.gmra.mxu0 %v2721
        %v2732 = vpop.f32.mrf.mxu0
        %v2733 = vadd.f32 0.0, %v2732
        %v2734 = vpop.f32.mrf.mxu0
        %v2735 = vadd.f32 0.0, %v2734
        %2736 = vdwg.mxu0
        %v2737 = vpack.c.bf16 %v2735, %v2733
        %s2738 = scalar_lea.vmem [#allocation5], 128
        %v2739 = vld [vmem:[%s2738] sm:$0xf]
        %v2740 = vld [vmem:[%s2738 + $0x4] sm:$0xf]
        %v2741 = vld [vmem:[%s2738 + $0x8] sm:$0xf]
        %v2742 = vld [vmem:[%s2738 + $0xc] sm:$0xf]
        %v2743 = vld [vmem:[%s2738 + $0x10] sm:$0xf]
        %v2744 = vld [vmem:[%s2738 + $0x14] sm:$0xf]
        %v2745 = vld [vmem:[%s2738 + $0x18] sm:$0xf]
        %v2746 = vld [vmem:[%s2738 + $0x1c] sm:$0xf]
        %v2747 = vld [vmem:[%s2738 + $0x20] sm:$0xf]
        %v2748 = vld [vmem:[%s2738 + $0x24] sm:$0xf]
        %v2749 = vld [vmem:[%s2738 + $0x28] sm:$0xf]
        %v2750 = vld [vmem:[%s2738 + $0x2c] sm:$0xf]
        %v2751 = vld [vmem:[%s2738 + $0x30] sm:$0xf]
        %v2752 = vld [vmem:[%s2738 + $0x34] sm:$0xf]
        %v2753 = vld [vmem:[%s2738 + $0x38] sm:$0xf]
        %v2754 = vld [vmem:[%s2738 + $0x3c] sm:$0xf]
        %v2771 = vunpack.c.l.b16 %v2739
        %v2772 = vunpack.c.l.b16 %v2740
        %v2773 = vunpack.c.l.b16 %v2741
        %v2774 = vunpack.c.l.b16 %v2742
        %v2775 = vunpack.c.l.b16 %v2743
        %v2776 = vunpack.c.l.b16 %v2744
        %v2777 = vunpack.c.l.b16 %v2745
        %v2778 = vunpack.c.l.b16 %v2746
        %v2779 = vunpack.c.l.b16 %v2747
        %v2780 = vunpack.c.l.b16 %v2748
        %v2781 = vunpack.c.l.b16 %v2749
        %v2782 = vunpack.c.l.b16 %v2750
        %v2783 = vunpack.c.l.b16 %v2751
        %v2784 = vunpack.c.l.b16 %v2752
        %v2785 = vunpack.c.l.b16 %v2753
        %v2786 = vunpack.c.l.b16 %v2754
        %v2787 = vpack.c.b16 %v2772, %v2771
        %v2788 = vpack.c.b16 %v2774, %v2773
        %v2789 = vpack.c.b16 %v2776, %v2775
        %v2790 = vpack.c.b16 %v2778, %v2777
        %v2791 = vpack.c.b16 %v2780, %v2779
        %v2792 = vpack.c.b16 %v2782, %v2781
        %v2793 = vpack.c.b16 %v2784, %v2783
        %v2794 = vpack.c.b16 %v2786, %v2785
        %2803 = vmatpush.bf16.msra.mxu0 %v2794
        %2804 = vmatpush.bf16.msra.mxu0 %v2793
        %2805 = vmatpush.bf16.msra.mxu0 %v2792
        %2806 = vmatpush.bf16.msra.mxu0 %v2791
        %2807 = vmatpush.bf16.msra.mxu0 %v2790
        %2808 = vmatpush.bf16.msra.mxu0 %v2789
        %2809 = vmatpush.bf16.msra.mxu0 %v2788
        %2810 = vmatpush.bf16.msra.mxu0 %v2787
        %2811 = vmatmul.bf16.gmra.mxu0 %v2737
        %v2812 = vpop.f32.mrf.mxu0
        %v2813 = vadd.f32 0.0, %v2812
        %v2814 = vpop.f32.mrf.mxu0
        %v2815 = vadd.f32 0.0, %v2814
        %2816 = vdwg.mxu0
        %v2817 = vadd.f32 %v2708, %v2813
        %v2818 = vadd.f32 %v2710, %v2815
        %s2819 = scalar_lea.vmem %s4, 24
        %v2820 = vld [vmem:[%s2819] sm:$0xf]
        %v2821 = vld [vmem:[%s2819 + $0x4] sm:$0xf]
        %v2824 = vunpack.c.l.b16 %v2820
        %v2825 = vunpack.c.l.b16 %v2821
        %v2826 = vpack.c.b16 %v2825, %v2824
        %v2828 = vsel %vm2510, %v2826, 0
        %2830 = vmatpush.bf16.msra.mxu0 0
        %2831 = vmatpush.bf16.msra.mxu0 0
        %2832 = vmatpush.bf16.msra.mxu0 0
        %2833 = vmatpush.bf16.msra.mxu0 0
        %2834 = vmatpush.bf16.msra.mxu0 %v2502
        %2835 = vmatpush.bf16.msra.mxu0 %v2501
        %2836 = vmatpush.bf16.msra.mxu0 %v2500
        %2837 = vmatpush.bf16.msra.mxu0 %v2499
        %2838 = vmatmul.bf16.gmra.mxu0 %v2828
        %v2839 = vpop.f32.mrf.mxu0
        %v2840 = vadd.f32 0.0, %v2839
        %v2841 = vpop.f32.mrf.mxu0
        %v2842 = vadd.f32 0.0, %v2841
        %2843 = vdwg.mxu0
        %v2844 = vpack.c.bf16 %v2842, %v2840
        %s2845 = scalar_lea.vmem [#allocation5], 192
        %v2846 = vld [vmem:[%s2845] sm:$0xf]
        %v2847 = vld [vmem:[%s2845 + $0x4] sm:$0xf]
        %v2848 = vld [vmem:[%s2845 + $0x8] sm:$0xf]
        %v2849 = vld [vmem:[%s2845 + $0xc] sm:$0xf]
        %v2850 = vld [vmem:[%s2845 + $0x10] sm:$0xf]
        %v2851 = vld [vmem:[%s2845 + $0x14] sm:$0xf]
        %v2852 = vld [vmem:[%s2845 + $0x18] sm:$0xf]
        %v2853 = vld [vmem:[%s2845 + $0x1c] sm:$0xf]
        %v2854 = vld [vmem:[%s2845 + $0x20] sm:$0xf]
        %v2855 = vld [vmem:[%s2845 + $0x24] sm:$0xf]
        %v2856 = vld [vmem:[%s2845 + $0x28] sm:$0xf]
        %v2857 = vld [vmem:[%s2845 + $0x2c] sm:$0xf]
        %v2858 = vld [vmem:[%s2845 + $0x30] sm:$0xf]
        %v2859 = vld [vmem:[%s2845 + $0x34] sm:$0xf]
        %v2860 = vld [vmem:[%s2845 + $0x38] sm:$0xf]
        %v2861 = vld [vmem:[%s2845 + $0x3c] sm:$0xf]
        %v2878 = vunpack.c.l.b16 %v2846
        %v2879 = vunpack.c.l.b16 %v2847
        %v2880 = vunpack.c.l.b16 %v2848
        %v2881 = vunpack.c.l.b16 %v2849
        %v2882 = vunpack.c.l.b16 %v2850
        %v2883 = vunpack.c.l.b16 %v2851
        %v2884 = vunpack.c.l.b16 %v2852
        %v2885 = vunpack.c.l.b16 %v2853
        %v2886 = vunpack.c.l.b16 %v2854
        %v2887 = vunpack.c.l.b16 %v2855
        %v2888 = vunpack.c.l.b16 %v2856
        %v2889 = vunpack.c.l.b16 %v2857
        %v2890 = vunpack.c.l.b16 %v2858
        %v2891 = vunpack.c.l.b16 %v2859
        %v2892 = vunpack.c.l.b16 %v2860
        %v2893 = vunpack.c.l.b16 %v2861
        %v2894 = vpack.c.b16 %v2879, %v2878
        %v2895 = vpack.c.b16 %v2881, %v2880
        %v2896 = vpack.c.b16 %v2883, %v2882
        %v2897 = vpack.c.b16 %v2885, %v2884
        %v2898 = vpack.c.b16 %v2887, %v2886
        %v2899 = vpack.c.b16 %v2889, %v2888
        %v2900 = vpack.c.b16 %v2891, %v2890
        %v2901 = vpack.c.b16 %v2893, %v2892
        %2910 = vmatpush.bf16.msra.mxu0 %v2901
        %2911 = vmatpush.bf16.msra.mxu0 %v2900
        %2912 = vmatpush.bf16.msra.mxu0 %v2899
        %2913 = vmatpush.bf16.msra.mxu0 %v2898
        %2914 = vmatpush.bf16.msra.mxu0 %v2897
        %2915 = vmatpush.bf16.msra.mxu0 %v2896
        %2916 = vmatpush.bf16.msra.mxu0 %v2895
        %2917 = vmatpush.bf16.msra.mxu0 %v2894
        %2918 = vmatmul.bf16.gmra.mxu0 %v2844
        %v2919 = vpop.f32.mrf.mxu0
        %v2920 = vadd.f32 0.0, %v2919
        %v2921 = vpop.f32.mrf.mxu0
        %v2922 = vadd.f32 0.0, %v2921
        %2923 = vdwg.mxu0
        %v2924 = vadd.f32 %v2817, %v2920
        %v2925 = vadd.f32 %v2818, %v2922
        %s2926 = scalar_lea.vmem %s4, 32
        %v2927 = vld [vmem:[%s2926] sm:$0xf]
        %v2928 = vld [vmem:[%s2926 + $0x4] sm:$0xf]
        %v2931 = vunpack.c.l.b16 %v2927
        %v2932 = vunpack.c.l.b16 %v2928
        %v2933 = vpack.c.b16 %v2932, %v2931
        %v2935 = vsel %vm2510, %v2933, 0
        %2937 = vmatpush.bf16.msra.mxu0 0
        %2938 = vmatpush.bf16.msra.mxu0 0
        %2939 = vmatpush.bf16.msra.mxu0 0
        %2940 = vmatpush.bf16.msra.mxu0 0
        %2941 = vmatpush.bf16.msra.mxu0 %v2502
        %2942 = vmatpush.bf16.msra.mxu0 %v2501
        %2943 = vmatpush.bf16.msra.mxu0 %v2500
        %2944 = vmatpush.bf16.msra.mxu0 %v2499
        %2945 = vmatmul.bf16.gmra.mxu0 %v2935
        %v2946 = vpop.f32.mrf.mxu0
        %v2947 = vadd.f32 0.0, %v2946
        %v2948 = vpop.f32.mrf.mxu0
        %v2949 = vadd.f32 0.0, %v2948
        %2950 = vdwg.mxu0
        %v2951 = vpack.c.bf16 %v2949, %v2947
        %s2952 = scalar_lea.vmem [#allocation5], 256
        %v2953 = vld [vmem:[%s2952] sm:$0xf]
        %v2954 = vld [vmem:[%s2952 + $0x4] sm:$0xf]
        %v2955 = vld [vmem:[%s2952 + $0x8] sm:$0xf]
        %v2956 = vld [vmem:[%s2952 + $0xc] sm:$0xf]
        %v2957 = vld [vmem:[%s2952 + $0x10] sm:$0xf]
        %v2958 = vld [vmem:[%s2952 + $0x14] sm:$0xf]
        %v2959 = vld [vmem:[%s2952 + $0x18] sm:$0xf]
        %v2960 = vld [vmem:[%s2952 + $0x1c] sm:$0xf]
        %v2961 = vld [vmem:[%s2952 + $0x20] sm:$0xf]
        %v2962 = vld [vmem:[%s2952 + $0x24] sm:$0xf]
        %v2963 = vld [vmem:[%s2952 + $0x28] sm:$0xf]
        %v2964 = vld [vmem:[%s2952 + $0x2c] sm:$0xf]
        %v2965 = vld [vmem:[%s2952 + $0x30] sm:$0xf]
        %v2966 = vld [vmem:[%s2952 + $0x34] sm:$0xf]
        %v2967 = vld [vmem:[%s2952 + $0x38] sm:$0xf]
        %v2968 = vld [vmem:[%s2952 + $0x3c] sm:$0xf]
        %v2985 = vunpack.c.l.b16 %v2953
        %v2986 = vunpack.c.l.b16 %v2954
        %v2987 = vunpack.c.l.b16 %v2955
        %v2988 = vunpack.c.l.b16 %v2956
        %v2989 = vunpack.c.l.b16 %v2957
        %v2990 = vunpack.c.l.b16 %v2958
        %v2991 = vunpack.c.l.b16 %v2959
        %v2992 = vunpack.c.l.b16 %v2960
        %v2993 = vunpack.c.l.b16 %v2961
        %v2994 = vunpack.c.l.b16 %v2962
        %v2995 = vunpack.c.l.b16 %v2963
        %v2996 = vunpack.c.l.b16 %v2964
        %v2997 = vunpack.c.l.b16 %v2965
        %v2998 = vunpack.c.l.b16 %v2966
        %v2999 = vunpack.c.l.b16 %v2967
        %v3000 = vunpack.c.l.b16 %v2968
        %v3001 = vpack.c.b16 %v2986, %v2985
        %v3002 = vpack.c.b16 %v2988, %v2987
        %v3003 = vpack.c.b16 %v2990, %v2989
        %v3004 = vpack.c.b16 %v2992, %v2991
        %v3005 = vpack.c.b16 %v2994, %v2993
        %v3006 = vpack.c.b16 %v2996, %v2995
        %v3007 = vpack.c.b16 %v2998, %v2997
        %v3008 = vpack.c.b16 %v3000, %v2999
        %3017 = vmatpush.bf16.msra.mxu0 %v3008
        %3018 = vmatpush.bf16.msra.mxu0 %v3007
        %3019 = vmatpush.bf16.msra.mxu0 %v3006
        %3020 = vmatpush.bf16.msra.mxu0 %v3005
        %3021 = vmatpush.bf16.msra.mxu0 %v3004
        %3022 = vmatpush.bf16.msra.mxu0 %v3003
        %3023 = vmatpush.bf16.msra.mxu0 %v3002
        %3024 = vmatpush.bf16.msra.mxu0 %v3001
        %3025 = vmatmul.bf16.gmra.mxu0 %v2951
        %v3026 = vpop.f32.mrf.mxu0
        %v3027 = vadd.f32 0.0, %v3026
        %v3028 = vpop.f32.mrf.mxu0
        %v3029 = vadd.f32 0.0, %v3028
        %3030 = vdwg.mxu0
        %v3031 = vadd.f32 %v2924, %v3027
        %v3032 = vadd.f32 %v2925, %v3029
        %s3033 = scalar_lea.vmem %s4, 40
        %v3034 = vld [vmem:[%s3033] sm:$0xf]
        %v3035 = vld [vmem:[%s3033 + $0x4] sm:$0xf]
        %v3038 = vunpack.c.l.b16 %v3034
        %v3039 = vunpack.c.l.b16 %v3035
        %v3040 = vpack.c.b16 %v3039, %v3038
        %v3042 = vsel %vm2510, %v3040, 0
        %3044 = vmatpush.bf16.msra.mxu0 0
        %3045 = vmatpush.bf16.msra.mxu0 0
        %3046 = vmatpush.bf16.msra.mxu0 0
        %3047 = vmatpush.bf16.msra.mxu0 0
        %3048 = vmatpush.bf16.msra.mxu0 %v2502
        %3049 = vmatpush.bf16.msra.mxu0 %v2501
        %3050 = vmatpush.bf16.msra.mxu0 %v2500
        %3051 = vmatpush.bf16.msra.mxu0 %v2499
        %3052 = vmatmul.bf16.gmra.mxu0 %v3042
        %v3053 = vpop.f32.mrf.mxu0
        %v3054 = vadd.f32 0.0, %v3053
        %v3055 = vpop.f32.mrf.mxu0
        %v3056 = vadd.f32 0.0, %v3055
        %3057 = vdwg.mxu0
        %v3058 = vpack.c.bf16 %v3056, %v3054
        %s3059 = scalar_lea.vmem [#allocation5], 320
        %v3060 = vld [vmem:[%s3059] sm:$0xf]
        %v3061 = vld [vmem:[%s3059 + $0x4] sm:$0xf]
        %v3062 = vld [vmem:[%s3059 + $0x8] sm:$0xf]
        %v3063 = vld [vmem:[%s3059 + $0xc] sm:$0xf]
        %v3064 = vld [vmem:[%s3059 + $0x10] sm:$0xf]
        %v3065 = vld [vmem:[%s3059 + $0x14] sm:$0xf]
        %v3066 = vld [vmem:[%s3059 + $0x18] sm:$0xf]
        %v3067 = vld [vmem:[%s3059 + $0x1c] sm:$0xf]
        %v3068 = vld [vmem:[%s3059 + $0x20] sm:$0xf]
        %v3069 = vld [vmem:[%s3059 + $0x24] sm:$0xf]
        %v3070 = vld [vmem:[%s3059 + $0x28] sm:$0xf]
        %v3071 = vld [vmem:[%s3059 + $0x2c] sm:$0xf]
        %v3072 = vld [vmem:[%s3059 + $0x30] sm:$0xf]
        %v3073 = vld [vmem:[%s3059 + $0x34] sm:$0xf]
        %v3074 = vld [vmem:[%s3059 + $0x38] sm:$0xf]
        %v3075 = vld [vmem:[%s3059 + $0x3c] sm:$0xf]
        %v3092 = vunpack.c.l.b16 %v3060
        %v3093 = vunpack.c.l.b16 %v3061
        %v3094 = vunpack.c.l.b16 %v3062
        %v3095 = vunpack.c.l.b16 %v3063
        %v3096 = vunpack.c.l.b16 %v3064
        %v3097 = vunpack.c.l.b16 %v3065
        %v3098 = vunpack.c.l.b16 %v3066
        %v3099 = vunpack.c.l.b16 %v3067
        %v3100 = vunpack.c.l.b16 %v3068
        %v3101 = vunpack.c.l.b16 %v3069
        %v3102 = vunpack.c.l.b16 %v3070
        %v3103 = vunpack.c.l.b16 %v3071
        %v3104 = vunpack.c.l.b16 %v3072
        %v3105 = vunpack.c.l.b16 %v3073
        %v3106 = vunpack.c.l.b16 %v3074
        %v3107 = vunpack.c.l.b16 %v3075
        %v3108 = vpack.c.b16 %v3093, %v3092
        %v3109 = vpack.c.b16 %v3095, %v3094
        %v3110 = vpack.c.b16 %v3097, %v3096
        %v3111 = vpack.c.b16 %v3099, %v3098
        %v3112 = vpack.c.b16 %v3101, %v3100
        %v3113 = vpack.c.b16 %v3103, %v3102
        %v3114 = vpack.c.b16 %v3105, %v3104
        %v3115 = vpack.c.b16 %v3107, %v3106
        %3124 = vmatpush.bf16.msra.mxu0 %v3115
        %3125 = vmatpush.bf16.msra.mxu0 %v3114
        %3126 = vmatpush.bf16.msra.mxu0 %v3113
        %3127 = vmatpush.bf16.msra.mxu0 %v3112
        %3128 = vmatpush.bf16.msra.mxu0 %v3111
        %3129 = vmatpush.bf16.msra.mxu0 %v3110
        %3130 = vmatpush.bf16.msra.mxu0 %v3109
        %3131 = vmatpush.bf16.msra.mxu0 %v3108
        %3132 = vmatmul.bf16.gmra.mxu0 %v3058
        %v3133 = vpop.f32.mrf.mxu0
        %v3134 = vadd.f32 0.0, %v3133
        %v3135 = vpop.f32.mrf.mxu0
        %v3136 = vadd.f32 0.0, %v3135
        %3137 = vdwg.mxu0
        %v3138 = vadd.f32 %v3031, %v3134
        %v3139 = vadd.f32 %v3032, %v3136
        %s3140 = scalar_lea.vmem %s4, 48
        %v3141 = vld [vmem:[%s3140] sm:$0xf]
        %v3142 = vld [vmem:[%s3140 + $0x4] sm:$0xf]
        %v3145 = vunpack.c.l.b16 %v3141
        %v3146 = vunpack.c.l.b16 %v3142
        %v3147 = vpack.c.b16 %v3146, %v3145
        %v3149 = vsel %vm2510, %v3147, 0
        %3151 = vmatpush.bf16.msra.mxu0 0
        %3152 = vmatpush.bf16.msra.mxu0 0
        %3153 = vmatpush.bf16.msra.mxu0 0
        %3154 = vmatpush.bf16.msra.mxu0 0
        %3155 = vmatpush.bf16.msra.mxu0 %v2502
        %3156 = vmatpush.bf16.msra.mxu0 %v2501
        %3157 = vmatpush.bf16.msra.mxu0 %v2500
        %3158 = vmatpush.bf16.msra.mxu0 %v2499
        %3159 = vmatmul.bf16.gmra.mxu0 %v3149
        %v3160 = vpop.f32.mrf.mxu0
        %v3161 = vadd.f32 0.0, %v3160
        %v3162 = vpop.f32.mrf.mxu0
        %v3163 = vadd.f32 0.0, %v3162
        %3164 = vdwg.mxu0
        %v3165 = vpack.c.bf16 %v3163, %v3161
        %s3166 = scalar_lea.vmem [#allocation5], 384
        %v3167 = vld [vmem:[%s3166] sm:$0xf]
        %v3168 = vld [vmem:[%s3166 + $0x4] sm:$0xf]
        %v3169 = vld [vmem:[%s3166 + $0x8] sm:$0xf]
        %v3170 = vld [vmem:[%s3166 + $0xc] sm:$0xf]
        %v3171 = vld [vmem:[%s3166 + $0x10] sm:$0xf]
        %v3172 = vld [vmem:[%s3166 + $0x14] sm:$0xf]
        %v3173 = vld [vmem:[%s3166 + $0x18] sm:$0xf]
        %v3174 = vld [vmem:[%s3166 + $0x1c] sm:$0xf]
        %v3175 = vld [vmem:[%s3166 + $0x20] sm:$0xf]
        %v3176 = vld [vmem:[%s3166 + $0x24] sm:$0xf]
        %v3177 = vld [vmem:[%s3166 + $0x28] sm:$0xf]
        %v3178 = vld [vmem:[%s3166 + $0x2c] sm:$0xf]
        %v3179 = vld [vmem:[%s3166 + $0x30] sm:$0xf]
        %v3180 = vld [vmem:[%s3166 + $0x34] sm:$0xf]
        %v3181 = vld [vmem:[%s3166 + $0x38] sm:$0xf]
        %v3182 = vld [vmem:[%s3166 + $0x3c] sm:$0xf]
        %v3199 = vunpack.c.l.b16 %v3167
        %v3200 = vunpack.c.l.b16 %v3168
        %v3201 = vunpack.c.l.b16 %v3169
        %v3202 = vunpack.c.l.b16 %v3170
        %v3203 = vunpack.c.l.b16 %v3171
        %v3204 = vunpack.c.l.b16 %v3172
        %v3205 = vunpack.c.l.b16 %v3173
        %v3206 = vunpack.c.l.b16 %v3174
        %v3207 = vunpack.c.l.b16 %v3175
        %v3208 = vunpack.c.l.b16 %v3176
        %v3209 = vunpack.c.l.b16 %v3177
        %v3210 = vunpack.c.l.b16 %v3178
        %v3211 = vunpack.c.l.b16 %v3179
        %v3212 = vunpack.c.l.b16 %v3180
        %v3213 = vunpack.c.l.b16 %v3181
        %v3214 = vunpack.c.l.b16 %v3182
        %v3215 = vpack.c.b16 %v3200, %v3199
        %v3216 = vpack.c.b16 %v3202, %v3201
        %v3217 = vpack.c.b16 %v3204, %v3203
        %v3218 = vpack.c.b16 %v3206, %v3205
        %v3219 = vpack.c.b16 %v3208, %v3207
        %v3220 = vpack.c.b16 %v3210, %v3209
        %v3221 = vpack.c.b16 %v3212, %v3211
        %v3222 = vpack.c.b16 %v3214, %v3213
        %3231 = vmatpush.bf16.msra.mxu0 %v3222
        %3232 = vmatpush.bf16.msra.mxu0 %v3221
        %3233 = vmatpush.bf16.msra.mxu0 %v3220
        %3234 = vmatpush.bf16.msra.mxu0 %v3219
        %3235 = vmatpush.bf16.msra.mxu0 %v3218
        %3236 = vmatpush.bf16.msra.mxu0 %v3217
        %3237 = vmatpush.bf16.msra.mxu0 %v3216
        %3238 = vmatpush.bf16.msra.mxu0 %v3215
        %3239 = vmatmul.bf16.gmra.mxu0 %v3165
        %v3240 = vpop.f32.mrf.mxu0
        %v3241 = vadd.f32 0.0, %v3240
        %v3242 = vpop.f32.mrf.mxu0
        %v3243 = vadd.f32 0.0, %v3242
        %3244 = vdwg.mxu0
        %v3245 = vadd.f32 %v3138, %v3241
        %v3246 = vadd.f32 %v3139, %v3243
        %s3247 = scalar_lea.vmem %s4, 56
        %v3248 = vld [vmem:[%s3247] sm:$0xf]
        %v3249 = vld [vmem:[%s3247 + $0x4] sm:$0xf]
        %v3252 = vunpack.c.l.b16 %v3248
        %v3253 = vunpack.c.l.b16 %v3249
        %v3254 = vpack.c.b16 %v3253, %v3252
        %v3256 = vsel %vm2510, %v3254, 0
        %3258 = vmatpush.bf16.msra.mxu0 0
        %3259 = vmatpush.bf16.msra.mxu0 0
        %3260 = vmatpush.bf16.msra.mxu0 0
        %3261 = vmatpush.bf16.msra.mxu0 0
        %3262 = vmatpush.bf16.msra.mxu0 %v2502
        %3263 = vmatpush.bf16.msra.mxu0 %v2501
        %3264 = vmatpush.bf16.msra.mxu0 %v2500
        %3265 = vmatpush.bf16.msra.mxu0 %v2499
        %3266 = vmatmul.bf16.gmra.mxu0 %v3256
        %v3267 = vpop.f32.mrf.mxu0
        %v3268 = vadd.f32 0.0, %v3267
        %v3269 = vpop.f32.mrf.mxu0
        %v3270 = vadd.f32 0.0, %v3269
        %3271 = vdwg.mxu0
        %v3272 = vpack.c.bf16 %v3270, %v3268
        %s3273 = scalar_lea.vmem [#allocation5], 448
        %v3274 = vld [vmem:[%s3273] sm:$0xf]
        %v3275 = vld [vmem:[%s3273 + $0x4] sm:$0xf]
        %v3276 = vld [vmem:[%s3273 + $0x8] sm:$0xf]
        %v3277 = vld [vmem:[%s3273 + $0xc] sm:$0xf]
        %v3278 = vld [vmem:[%s3273 + $0x10] sm:$0xf]
        %v3279 = vld [vmem:[%s3273 + $0x14] sm:$0xf]
        %v3280 = vld [vmem:[%s3273 + $0x18] sm:$0xf]
        %v3281 = vld [vmem:[%s3273 + $0x1c] sm:$0xf]
        %v3282 = vld [vmem:[%s3273 + $0x20] sm:$0xf]
        %v3283 = vld [vmem:[%s3273 + $0x24] sm:$0xf]
        %v3284 = vld [vmem:[%s3273 + $0x28] sm:$0xf]
        %v3285 = vld [vmem:[%s3273 + $0x2c] sm:$0xf]
        %v3286 = vld [vmem:[%s3273 + $0x30] sm:$0xf]
        %v3287 = vld [vmem:[%s3273 + $0x34] sm:$0xf]
        %v3288 = vld [vmem:[%s3273 + $0x38] sm:$0xf]
        %v3289 = vld [vmem:[%s3273 + $0x3c] sm:$0xf]
        %v3306 = vunpack.c.l.b16 %v3274
        %v3307 = vunpack.c.l.b16 %v3275
        %v3308 = vunpack.c.l.b16 %v3276
        %v3309 = vunpack.c.l.b16 %v3277
        %v3310 = vunpack.c.l.b16 %v3278
        %v3311 = vunpack.c.l.b16 %v3279
        %v3312 = vunpack.c.l.b16 %v3280
        %v3313 = vunpack.c.l.b16 %v3281
        %v3314 = vunpack.c.l.b16 %v3282
        %v3315 = vunpack.c.l.b16 %v3283
        %v3316 = vunpack.c.l.b16 %v3284
        %v3317 = vunpack.c.l.b16 %v3285
        %v3318 = vunpack.c.l.b16 %v3286
        %v3319 = vunpack.c.l.b16 %v3287
        %v3320 = vunpack.c.l.b16 %v3288
        %v3321 = vunpack.c.l.b16 %v3289
        %v3322 = vpack.c.b16 %v3307, %v3306
        %v3323 = vpack.c.b16 %v3309, %v3308
        %v3324 = vpack.c.b16 %v3311, %v3310
        %v3325 = vpack.c.b16 %v3313, %v3312
        %v3326 = vpack.c.b16 %v3315, %v3314
        %v3327 = vpack.c.b16 %v3317, %v3316
        %v3328 = vpack.c.b16 %v3319, %v3318
        %v3329 = vpack.c.b16 %v3321, %v3320
        %3338 = vmatpush.bf16.msra.mxu0 %v3329
        %3339 = vmatpush.bf16.msra.mxu0 %v3328
        %3340 = vmatpush.bf16.msra.mxu0 %v3327
        %3341 = vmatpush.bf16.msra.mxu0 %v3326
        %3342 = vmatpush.bf16.msra.mxu0 %v3325
        %3343 = vmatpush.bf16.msra.mxu0 %v3324
        %3344 = vmatpush.bf16.msra.mxu0 %v3323
        %3345 = vmatpush.bf16.msra.mxu0 %v3322
        %3346 = vmatmul.bf16.gmra.mxu0 %v3272
        %v3347 = vpop.f32.mrf.mxu0
        %v3348 = vadd.f32 0.0, %v3347
        %v3349 = vpop.f32.mrf.mxu0
        %v3350 = vadd.f32 0.0, %v3349
        %3351 = vdwg.mxu0
        %v3352 = vadd.f32 %v3245, %v3348
        %v3353 = vadd.f32 %v3246, %v3350
        %s3354 = scalar_lea.vmem %s4, 64
        %v3355 = vld [vmem:[%s3354] sm:$0xf]
        %v3356 = vld [vmem:[%s3354 + $0x4] sm:$0xf]
        %v3359 = vunpack.c.l.b16 %v3355
        %v3360 = vunpack.c.l.b16 %v3356
        %v3361 = vpack.c.b16 %v3360, %v3359
        %v3363 = vsel %vm2510, %v3361, 0
        %3365 = vmatpush.bf16.msra.mxu0 0
        %3366 = vmatpush.bf16.msra.mxu0 0
        %3367 = vmatpush.bf16.msra.mxu0 0
        %3368 = vmatpush.bf16.msra.mxu0 0
        %3369 = vmatpush.bf16.msra.mxu0 %v2502
        %3370 = vmatpush.bf16.msra.mxu0 %v2501
        %3371 = vmatpush.bf16.msra.mxu0 %v2500
        %3372 = vmatpush.bf16.msra.mxu0 %v2499
        %3373 = vmatmul.bf16.gmra.mxu0 %v3363
        %v3374 = vpop.f32.mrf.mxu0
        %v3375 = vadd.f32 0.0, %v3374
        %v3376 = vpop.f32.mrf.mxu0
        %v3377 = vadd.f32 0.0, %v3376
        %3378 = vdwg.mxu0
        %v3379 = vpack.c.bf16 %v3377, %v3375
        %s3380 = scalar_lea.vmem [#allocation5], 512
        %v3381 = vld [vmem:[%s3380] sm:$0xf]
        %v3382 = vld [vmem:[%s3380 + $0x4] sm:$0xf]
        %v3383 = vld [vmem:[%s3380 + $0x8] sm:$0xf]
        %v3384 = vld [vmem:[%s3380 + $0xc] sm:$0xf]
        %v3385 = vld [vmem:[%s3380 + $0x10] sm:$0xf]
        %v3386 = vld [vmem:[%s3380 + $0x14] sm:$0xf]
        %v3387 = vld [vmem:[%s3380 + $0x18] sm:$0xf]
        %v3388 = vld [vmem:[%s3380 + $0x1c] sm:$0xf]
        %v3389 = vld [vmem:[%s3380 + $0x20] sm:$0xf]
        %v3390 = vld [vmem:[%s3380 + $0x24] sm:$0xf]
        %v3391 = vld [vmem:[%s3380 + $0x28] sm:$0xf]
        %v3392 = vld [vmem:[%s3380 + $0x2c] sm:$0xf]
        %v3393 = vld [vmem:[%s3380 + $0x30] sm:$0xf]
        %v3394 = vld [vmem:[%s3380 + $0x34] sm:$0xf]
        %v3395 = vld [vmem:[%s3380 + $0x38] sm:$0xf]
        %v3396 = vld [vmem:[%s3380 + $0x3c] sm:$0xf]
        %v3413 = vunpack.c.l.b16 %v3381
        %v3414 = vunpack.c.l.b16 %v3382
        %v3415 = vunpack.c.l.b16 %v3383
        %v3416 = vunpack.c.l.b16 %v3384
        %v3417 = vunpack.c.l.b16 %v3385
        %v3418 = vunpack.c.l.b16 %v3386
        %v3419 = vunpack.c.l.b16 %v3387
        %v3420 = vunpack.c.l.b16 %v3388
        %v3421 = vunpack.c.l.b16 %v3389
        %v3422 = vunpack.c.l.b16 %v3390
        %v3423 = vunpack.c.l.b16 %v3391
        %v3424 = vunpack.c.l.b16 %v3392
        %v3425 = vunpack.c.l.b16 %v3393
        %v3426 = vunpack.c.l.b16 %v3394
        %v3427 = vunpack.c.l.b16 %v3395
        %v3428 = vunpack.c.l.b16 %v3396
        %v3429 = vpack.c.b16 %v3414, %v3413
        %v3430 = vpack.c.b16 %v3416, %v3415
        %v3431 = vpack.c.b16 %v3418, %v3417
        %v3432 = vpack.c.b16 %v3420, %v3419
        %v3433 = vpack.c.b16 %v3422, %v3421
        %v3434 = vpack.c.b16 %v3424, %v3423
        %v3435 = vpack.c.b16 %v3426, %v3425
        %v3436 = vpack.c.b16 %v3428, %v3427
        %3445 = vmatpush.bf16.msra.mxu0 %v3436
        %3446 = vmatpush.bf16.msra.mxu0 %v3435
        %3447 = vmatpush.bf16.msra.mxu0 %v3434
        %3448 = vmatpush.bf16.msra.mxu0 %v3433
        %3449 = vmatpush.bf16.msra.mxu0 %v3432
        %3450 = vmatpush.bf16.msra.mxu0 %v3431
        %3451 = vmatpush.bf16.msra.mxu0 %v3430
        %3452 = vmatpush.bf16.msra.mxu0 %v3429
        %3453 = vmatmul.bf16.gmra.mxu0 %v3379
        %v3454 = vpop.f32.mrf.mxu0
        %v3455 = vadd.f32 0.0, %v3454
        %v3456 = vpop.f32.mrf.mxu0
        %v3457 = vadd.f32 0.0, %v3456
        %3458 = vdwg.mxu0
        %v3459 = vadd.f32 %v3352, %v3455
        %v3460 = vadd.f32 %v3353, %v3457
        %v3461 = vld [vmem:[%s6] sm:$0x1]
        %v3463 = vperm.slane %v3461, 0
        %v3465 = vadd.f32 %v3459, %v3463
        %v3466 = vadd.f32 %v3460, %v3463
        %v3467 = vmul.f32 %v3465, 0.5
        %v3468 = vmul.f32 %v3466, 0.5
        %v3469 = vtanh.pop %v3467
        %v3470 = vtanh.pop %v3468
        %v3471 = vadd.f32 %v3469, 1.0
        %v3472 = vadd.f32 %v3470, 1.0
        %v3473 = vmul.f32 %v3471, 0.5
        %v3474 = vmul.f32 %v3472, 0.5
        %v3475 = vmul.f32 %v3465, %v3473
        %v3476 = vmul.f32 %v3466, %v3474
        %v3477 = vpack.c.bf16 %v3476, %v3475
        %v3478 = vld [vmem:[%s7] sm:$0xf]
        %v3479 = vld [vmem:[%s7 + $0x4] sm:$0xf]
        %v3480 = vld [vmem:[%s7 + $0x8] sm:$0xf]
        %v3481 = vld [vmem:[%s7 + $0xc] sm:$0xf]
        %v3482 = vld [vmem:[%s7 + $0x10] sm:$0xf]
        %v3483 = vld [vmem:[%s7 + $0x14] sm:$0xf]
        %v3484 = vld [vmem:[%s7 + $0x18] sm:$0xf]
        %v3485 = vld [vmem:[%s7 + $0x1c] sm:$0xf]
        %v3486 = vld [vmem:[%s7 + $0x20] sm:$0xf]
        %v3487 = vld [vmem:[%s7 + $0x24] sm:$0xf]
        %v3488 = vld [vmem:[%s7 + $0x28] sm:$0xf]
        %v3489 = vld [vmem:[%s7 + $0x2c] sm:$0xf]
        %v3490 = vld [vmem:[%s7 + $0x30] sm:$0xf]
        %v3491 = vld [vmem:[%s7 + $0x34] sm:$0xf]
        %v3492 = vld [vmem:[%s7 + $0x38] sm:$0xf]
        %v3493 = vld [vmem:[%s7 + $0x3c] sm:$0xf]
        %v3494 = vld [vmem:[%s8] sm:$0x1]
        %v3496 = vperm.slane %v3494, 0
        %v3514 = vunpack.c.l.b16 %v3478
        %v3515 = vunpack.c.l.b16 %v3479
        %v3516 = vunpack.c.l.b16 %v3480
        %v3517 = vunpack.c.l.b16 %v3481
        %v3518 = vunpack.c.l.b16 %v3482
        %v3519 = vunpack.c.l.b16 %v3483
        %v3520 = vunpack.c.l.b16 %v3484
        %v3521 = vunpack.c.l.b16 %v3485
        %v3522 = vunpack.c.l.b16 %v3486
        %v3523 = vunpack.c.l.b16 %v3487
        %v3524 = vunpack.c.l.b16 %v3488
        %v3525 = vunpack.c.l.b16 %v3489
        %v3526 = vunpack.c.l.b16 %v3490
        %v3527 = vunpack.c.l.b16 %v3491
        %v3528 = vunpack.c.l.b16 %v3492
        %v3529 = vunpack.c.l.b16 %v3493
        %v3530 = vpack.c.b16 %v3515, %v3514
        %v3531 = vpack.c.b16 %v3517, %v3516
        %v3532 = vpack.c.b16 %v3519, %v3518
        %v3533 = vpack.c.b16 %v3521, %v3520
        %v3534 = vpack.c.b16 %v3523, %v3522
        %v3535 = vpack.c.b16 %v3525, %v3524
        %v3536 = vpack.c.b16 %v3527, %v3526
        %v3537 = vpack.c.b16 %v3529, %v3528
        %3546 = vmatpush.bf16.msra.mxu0 %v3537
        %3547 = vmatpush.bf16.msra.mxu0 %v3536
        %3548 = vmatpush.bf16.msra.mxu0 %v3535
        %3549 = vmatpush.bf16.msra.mxu0 %v3534
        %3550 = vmatpush.bf16.msra.mxu0 %v3533
        %3551 = vmatpush.bf16.msra.mxu0 %v3532
        %3552 = vmatpush.bf16.msra.mxu0 %v3531
        %3553 = vmatpush.bf16.msra.mxu0 %v3530
        %3554 = vmatmul.bf16.gmra.mxu0 %v3477
        %v3555 = vpop.f32.mrf.mxu0
        %v3556 = vadd.f32 %v3496, %v3555
        %v3557 = vpop.f32.mrf.mxu0
        %v3558 = vadd.f32 %v3496, %v3557
        %3559 = vdwg.mxu0
        %v3560 = vmul.f32 %v3556, 0.5
        %v3561 = vmul.f32 %v3558, 0.5
        %v3562 = vtanh.pop %v3560
        %v3563 = vtanh.pop %v3561
        %v3564 = vadd.f32 %v3562, 1.0
        %v3565 = vadd.f32 %v3563, 1.0
        %v3566 = vmul.f32 %v3564, 0.5
        %v3567 = vmul.f32 %v3565, 0.5
        %v3568 = vmul.f32 %v3556, %v3566
        %v3569 = vmul.f32 %v3558, %v3567
        %v3570 = vpack.c.bf16 %v3569, %v3568
        %v3571 = vld [vmem:[%s9] sm:$0xf]
        %v3572 = vld [vmem:[%s9 + $0x4] sm:$0xf]
        %v3573 = vld [vmem:[%s9 + $0x8] sm:$0xf]
        %v3574 = vld [vmem:[%s9 + $0xc] sm:$0xf]
        %v3575 = vld [vmem:[%s9 + $0x10] sm:$0xf]
        %v3576 = vld [vmem:[%s9 + $0x14] sm:$0xf]
        %v3577 = vld [vmem:[%s9 + $0x18] sm:$0xf]
        %v3578 = vld [vmem:[%s9 + $0x1c] sm:$0xf]
        %v3579 = vld [vmem:[%s9 + $0x20] sm:$0xf]
        %v3580 = vld [vmem:[%s9 + $0x24] sm:$0xf]
        %v3581 = vld [vmem:[%s9 + $0x28] sm:$0xf]
        %v3582 = vld [vmem:[%s9 + $0x2c] sm:$0xf]
        %v3583 = vld [vmem:[%s9 + $0x30] sm:$0xf]
        %v3584 = vld [vmem:[%s9 + $0x34] sm:$0xf]
        %v3585 = vld [vmem:[%s9 + $0x38] sm:$0xf]
        %v3586 = vld [vmem:[%s9 + $0x3c] sm:$0xf]
        %v3587 = vld [vmem:[%s10] sm:$0x1]
        %v3589 = vperm.slane %v3587, 0
        %v3607 = vunpack.c.l.b16 %v3571
        %v3608 = vunpack.c.l.b16 %v3572
        %v3609 = vunpack.c.l.b16 %v3573
        %v3610 = vunpack.c.l.b16 %v3574
        %v3611 = vunpack.c.l.b16 %v3575
        %v3612 = vunpack.c.l.b16 %v3576
        %v3613 = vunpack.c.l.b16 %v3577
        %v3614 = vunpack.c.l.b16 %v3578
        %v3615 = vunpack.c.l.b16 %v3579
        %v3616 = vunpack.c.l.b16 %v3580
        %v3617 = vunpack.c.l.b16 %v3581
        %v3618 = vunpack.c.l.b16 %v3582
        %v3619 = vunpack.c.l.b16 %v3583
        %v3620 = vunpack.c.l.b16 %v3584
        %v3621 = vunpack.c.l.b16 %v3585
        %v3622 = vunpack.c.l.b16 %v3586
        %v3623 = vpack.c.b16 %v3608, %v3607
        %v3624 = vpack.c.b16 %v3610, %v3609
        %v3625 = vpack.c.b16 %v3612, %v3611
        %v3626 = vpack.c.b16 %v3614, %v3613
        %v3627 = vpack.c.b16 %v3616, %v3615
        %v3628 = vpack.c.b16 %v3618, %v3617
        %v3629 = vpack.c.b16 %v3620, %v3619
        %v3630 = vpack.c.b16 %v3622, %v3621
        %3639 = vmatpush.bf16.msra.mxu0 %v3630
        %3640 = vmatpush.bf16.msra.mxu0 %v3629
        %3641 = vmatpush.bf16.msra.mxu0 %v3628
        %3642 = vmatpush.bf16.msra.mxu0 %v3627
        %3643 = vmatpush.bf16.msra.mxu0 %v3626
        %3644 = vmatpush.bf16.msra.mxu0 %v3625
        %3645 = vmatpush.bf16.msra.mxu0 %v3624
        %3646 = vmatpush.bf16.msra.mxu0 %v3623
        %3647 = vmatmul.bf16.gmra.mxu0 %v3570
        %v3648 = vpop.f32.mrf.mxu0
        %v3649 = vadd.f32 %v3589, %v3648
        %v3650 = vpop.f32.mrf.mxu0
        %v3651 = vadd.f32 %v3589, %v3650
        %3652 = vdwg.mxu0
        %3653 = vst [vmem:[%s413] sm:$0xff] %v3649
        %3654 = vst [vmem:[%s413 + $0x8] sm:$0xff] %v3651
        %s3655 = sand.u32 %s271, 1
        %s3656 = scalar_lea.sflag [#allocation4], %s3655
        %s3657 = sand.u32 %s271, 1
        %s3658 = smul.addr %s3657, 16
        %s3659 = scalar_lea.vmem [#allocation7], %s3658
        // Predicated region
        $region73: #{yolo_forward.1} parent=63 // pred_check
          %p3660 = pneg %p281
        $region74: #{yolo_forward.1} parent=63 // pred_check_branch
          %3662 = sbr.rel (%p3660) target = $region76
        $region75: #{yolo_forward.1} parent=63 // pred_region
          %3664 = vsyncadd %s3656, 0
          %s3665 = smul.addr %s27, 2
          %s3666 = smul.addr %s3665, 8
          %s3667 = scalar_lea.hbm %s11, %s3666
          %s3668 = sshll.u32 %s3659, 4
          %s3669 = int_to_ptr.vmem [resolvable:$true] %s3668
          %s3670 = sshll.u32 %s3667, 4
          %s3671 = int_to_ptr.hbm [resolvable:$true] %s3670
          %3676 = dma.vmem_to_hbm [thread:$0]  %s3669, 256, %s3671, %s3656, 128, 128, 8
        $region76: #{yolo_forward.1} parent=63 // pred_fallthru
          _
      $region64: #{yolo_forward.1} parent=5 // pred_fallthru
        _
      %p3677 = scmp.le.s32.totalorder 2, %s22
      // Predicated region
      $region77: #{yolo_forward.1} parent=5 // pred_check
        %p3678 = pneg %p3677
      $region78: #{yolo_forward.1} parent=5 // pred_check_branch
        %3680 = sbr.rel (%p3678) target = $region80
      $region79: #{yolo_forward.1} parent=5 // pred_region
        %s3681 = ssub.s32 %s22, 2
        // Predicated region
        $region81: #{yolo_forward.1} parent=79 // pred_check
          %p3682 = pneg %p287
        $region82: #{yolo_forward.1} parent=79 // pred_check_branch
          %3684 = sbr.rel (%p3682) target = $region84
        $region83: #{yolo_forward.1} parent=79 // pred_region
          %s3685 = sand.u32 %s272, 1
          %s3686 = scalar_lea.sflag [#allocation4], %s3685
          %s3687 = sand.u32 %s272, 1
          %s3688 = smul.addr %s3687, 16
          %s3689 = scalar_lea.vmem [#allocation7], %s3688
          %3691 = dma.done %s3686, 256
        $region84: #{yolo_forward.1} parent=79 // pred_fallthru
          _
      $region80: #{yolo_forward.1} parent=5 // pred_fallthru
        _
    $region6: #{yolo_forward.1} parent=1 // loop_footer
      %s26 = sadd.s32 1, %s22
    $region7: #{yolo_forward.1} parent=1 // loop_footer_branch
      %21 = sbr.rel target = $region3
    $region8: #{yolo_forward.1} parent=1 // loop_exit
      _
    %3692 = vsyncpa [#allocation3], 1
    %s3693 = scalar_lea.sflag [#allocation3], 1
    %3694 = vsyncpa %s3693, 1
    %3695 = vsyncpa [#allocation6], 1
    %3696 = vsyncpa [#allocation4], 1
    %s3697 = scalar_lea.sflag [#allocation4], 1
    %3698 = vsyncpa %s3697, 1

</llo_original>
